<compile_context>
chip_gen: v7x
topology: tpu7x:2x2x1
jax: 0.10.0
libtpu: 0.0.40
codegen_flags: <defaults>
</compile_context>

<pallas_src>
import jax
import jax.numpy as jnp
from jax.experimental import pallas as pl
from jax.experimental.pallas import tpu as pltpu

EPS = 1e-5
LANE = 128
_VMEM_LIMIT = 32 * 1024 * 1024   # well under v7x's 64 MiB physical VMEM (double-buffer headroom)


def _cparams():
    return pltpu.CompilerParams(dimension_semantics=("parallel",),
                                vmem_limit_bytes=_VMEM_LIMIT)


# --------------------------------------------------------------------------------------
# Pallas kernels
# --------------------------------------------------------------------------------------
def _matmul_stats_kernel(a_ref, w_ref, out_ref, stats_ref):
    # a: (TM, K) bf16, w: (K, C) bf16 -> raw conv output tile (f32) + per-tile BN partials.
    u = jnp.dot(a_ref[...], w_ref[...], preferred_element_type=jnp.float32)
    out_ref[...] = u
    s1 = jnp.sum(u, axis=0, keepdims=True)        # (1, C) per-channel sum
    s2 = jnp.sum(u * u, axis=0, keepdims=True)    # (1, C) per-channel sum of squares
    stats_ref[...] = jnp.concatenate([s1, s2], axis=0).reshape(1, 2, -1)


def _bn_act_kernel(u_ref, scale_ref, shift_ref, o_ref):
    # y = relu(u * scale + shift)   (folded train-mode BatchNorm + ReLU)
    o_ref[...] = jnp.maximum(
        u_ref[...] * scale_ref[...] + shift_ref[...], 0.0).astype(o_ref.dtype)


def _bn_act_dual_kernel(u_ref, scale_ref, shift_ref, nxt_ref, y_ref, s_ref):
    # y = relu(bn(u));   s = y + next_branch    (fused: branch output + next-stage input)
    y = jnp.maximum(u_ref[...] * scale_ref[...] + shift_ref[...], 0.0)
    y_ref[...] = y.astype(y_ref.dtype)
    s_ref[...] = (y + nxt_ref[...]).astype(s_ref.dtype)


def _bn_act_res_kernel(u_ref, scale_ref, shift_ref, res_ref, o_ref):
    # y = relu(bn(u) + residual)    (final bn3 + identity add + ReLU)
    o_ref[...] = jnp.maximum(
        u_ref[...] * scale_ref[...] + shift_ref[...] + res_ref[...], 0.0).astype(o_ref.dtype)


# --------------------------------------------------------------------------------------
# Pallas-call wrappers
# --------------------------------------------------------------------------------------
def _round_up(x, m):
    return ((x + m - 1) // m) * m


def _pad2d(x, rows, cols):
    return jnp.pad(x, ((0, rows - x.shape[0]), (0, cols - x.shape[1])))


def _pad1d(x, n):
    return jnp.pad(x, (0, n - x.shape[0]))


def _matmul_bn_stats(a_bf16, w_bf16, tm):
    mp, kp = a_bf16.shape
    _, cp = w_bf16.shape
    nt = mp // tm
    return pl.pallas_call(
        _matmul_stats_kernel,
        out_shape=(jax.ShapeDtypeStruct((mp, cp), jnp.float32),
                   jax.ShapeDtypeStruct((nt, 2, cp), jnp.float32)),
        grid=(nt,),
        in_specs=[pl.BlockSpec((tm, kp), lambda i: (i, 0)),
                  pl.BlockSpec((kp, cp), lambda i: (0, 0))],
        out_specs=(pl.BlockSpec((tm, cp), lambda i: (i, 0)),
                   pl.BlockSpec((1, 2, cp), lambda i: (i, 0, 0))),
        compiler_params=_cparams(),
    )(a_bf16, w_bf16)


def _bn_act(u, scale, shift, *, tm, out_dtype):
    mp, cp = u.shape
    nt = mp // tm
    row = pl.BlockSpec((tm, cp), lambda i: (i, 0))
    vec = pl.BlockSpec((1, cp), lambda i: (0, 0))
    return pl.pallas_call(
        _bn_act_kernel,
        out_shape=jax.ShapeDtypeStruct((mp, cp), out_dtype),
        grid=(nt,),
        in_specs=[row, vec, vec],
        out_specs=row,
        compiler_params=_cparams(),
    )(u, scale, shift)


def _bn_act_dual(u, scale, shift, nxt, *, tm):
    mp, cp = u.shape
    nt = mp // tm
    row = pl.BlockSpec((tm, cp), lambda i: (i, 0))
    vec = pl.BlockSpec((1, cp), lambda i: (0, 0))
    return pl.pallas_call(
        _bn_act_dual_kernel,
        out_shape=(jax.ShapeDtypeStruct((mp, cp), jnp.bfloat16),
                   jax.ShapeDtypeStruct((mp, cp), jnp.bfloat16)),
        grid=(nt,),
        in_specs=[row, vec, vec, row],
        out_specs=(row, row),
        compiler_params=_cparams(),
    )(u, scale, shift, nxt)


def _bn_act_res(u, scale, shift, res, *, tm):
    mp, cp = u.shape
    nt = mp // tm
    row = pl.BlockSpec((tm, cp), lambda i: (i, 0))
    vec = pl.BlockSpec((1, cp), lambda i: (0, 0))
    return pl.pallas_call(
        _bn_act_res_kernel,
        out_shape=jax.ShapeDtypeStruct((mp, cp), jnp.float32),
        grid=(nt,),
        in_specs=[row, vec, vec, row],
        out_specs=row,
        compiler_params=_cparams(),
    )(u, scale, shift, res)


def _finalize_bn(stats, m_true, gamma, beta, cp):
    # Combine per-tile partials into the global training-mode BN affine (one pass, folded).
    tot = jnp.sum(stats, axis=0)                                  # (2, Cp)
    mean = tot[0] / m_true
    var = jnp.maximum(tot[1] / m_true - mean * mean, 0.0)         # biased variance
    scale = _pad1d(gamma, cp) * jax.lax.rsqrt(var + EPS)
    shift = _pad1d(beta, cp) - mean * scale
    return scale.reshape(1, cp), shift.reshape(1, cp)


def _im2col_3x3(act_bhwc):
    # Wrapper-side spatial zero padding + 9-tap gather -> (M, 9C) slab (no in-kernel masks).
    b, h, w, c = act_bhwc.shape
    p = jnp.pad(act_bhwc, ((0, 0), (1, 1), (1, 1), (0, 0)))
    taps = [p[:, dy:dy + h, dx:dx + w, :] for dy in range(3) for dx in range(3)]
    return jnp.concatenate(taps, axis=-1).reshape(b * h * w, 9 * c)


# --------------------------------------------------------------------------------------
# Bottleneck forward
# --------------------------------------------------------------------------------------
def bottleneck_forward(x_nchw, params, *, row_tile=256):
    """Forward of Bottleneck (stride=1, downsample=None, training-mode BatchNorm)."""
    b, cin, h, w = x_nchw.shape
    n = params["wA"].shape[-1]            # width // 4
    width = 4 * n
    cout = params["w3"].shape[-1]
    assert cin == cout, "identity residual requires inplanes == planes * expansion"

    m = b * h * w
    tm = min(row_tile, _round_up(m, 16))
    mp = _round_up(m, tm)                 # padded rows are zero in A -> contribute 0 to BN stats

    cin_p = _round_up(cin, LANE)
    wid_p = _round_up(width, LANE)
    col_p = _round_up(9 * n, LANE)
    n_p = _round_up(n, LANE)
    cout_p = _round_up(cout, LANE)

    x2d = jnp.transpose(x_nchw, (0, 2, 3, 1)).astype(jnp.float32).reshape(m, cin)

    # ---- conv1 (1x1, single full-width MXU dot) + bn1 + relu ---------------------------
    a1 = _pad2d(x2d, mp, cin_p).astype(jnp.bfloat16)
    w1 = _pad2d(params["w1"], cin_p, wid_p).astype(jnp.bfloat16)
    u1, st1 = _matmul_bn_stats(a1, w1, tm)
    s1, t1 = _finalize_bn(st1, m, params["g1"], params["b1"], wid_p)
    t_all = _bn_act(u1, s1, t1, tm=tm, out_dtype=jnp.float32)     # (Mp, Wp) f32

    y1 = t_all[:m, 0 * n:1 * n].astype(jnp.bfloat16)              # goes straight to concat
    x2_bf = t_all[:m, 1 * n:2 * n].astype(jnp.bfloat16)           # first 3x3 input
    x3_f = _pad2d(t_all[:, 2 * n:3 * n], mp, n_p)                 # f32, added to y2 in-kernel
    x4_f = _pad2d(t_all[:, 3 * n:4 * n], mp, n_p)                 # f32, added to y3 in-kernel

    wA = _pad2d(params["wA"].reshape(9 * n, n), col_p, n_p).astype(jnp.bfloat16)
    wB = _pad2d(params["wB"].reshape(9 * n, n), col_p, n_p).astype(jnp.bfloat16)
    wC = _pad2d(params["wC"].reshape(9 * n, n), col_p, n_p).astype(jnp.bfloat16)

    def conv3x3(in_bf_2d, wq, gamma, beta):
        # in_bf_2d: (M, N) bf16 -> bf16 im2col slab -> one matmul + BN stats.
        col = _im2col_3x3(in_bf_2d.reshape(b, h, w, n))           # (M, 9N) bf16
        a = _pad2d(col, mp, col_p)
        u, st = _matmul_bn_stats(a, wq, tm)
        s, t = _finalize_bn(st, m, gamma, beta, n_p)
        return u, s, t

    # ---- three (3x3 conv + bn + relu) stages -------------------------------------------
    uA, sA, tA = conv3x3(x2_bf, wA, params["gA"], params["bA"])
    y2_bf, in3_bf = _bn_act_dual(uA, sA, tA, x3_f, tm=tm)         # y2 and (x3 + y2), bf16

    uB, sB, tB = conv3x3(in3_bf[:m, :n], wB, params["gB"], params["bB"])
    y3_bf, in4_bf = _bn_act_dual(uB, sB, tB, x4_f, tm=tm)         # y3 and (x4 + y3), bf16

    uC, sC, tC = conv3x3(in4_bf[:m, :n], wC, params["gC"], params["bC"])
    y4_bf = _bn_act(uC, sC, tC, tm=tm, out_dtype=jnp.bfloat16)    # y4, bf16

    # ---- conv3 (1x1 over concat, single dot) + bn3 + identity + relu -------------------
    ycat = jnp.concatenate(
        [y1, y2_bf[:m, :n], y3_bf[:m, :n], y4_bf[:m, :n]], axis=-1)   # (M, W) bf16
    a3 = _pad2d(ycat, mp, wid_p)
    w3 = _pad2d(params["w3"], wid_p, cout_p).astype(jnp.bfloat16)
    u3, st3 = _matmul_bn_stats(a3, w3, tm)
    s3, t3 = _finalize_bn(st3, m, params["g3"], params["b3"], cout_p)
    identity = _pad2d(x2d, mp, cout_p)                            # residual kept in f32
    out = _bn_act_res(u3, s3, t3, identity, tm=tm)
    out2d = out[:m, :cout]
    return jnp.transpose(out2d.reshape(b, h, w, cout), (0, 3, 1, 2))


# --------------------------------------------------------------------------------------
# Parameters and pure-JAX reference
# --------------------------------------------------------------------------------------
def make_params(key, inplanes, planes, base_width=64):
    width = int(planes * (base_width / 64.0))
    n = width // 4
    cout = planes * 4
    ks = jax.random.split(key, 15)
    nrm = lambda k, shape, s: (s * jax.random.normal(k, shape)).astype(jnp.float32)
    return {
        "w1": nrm(ks[0], (inplanes, width), 0.1),     # conv1 1x1: (cin, cout), no bias
        "g1": 1.0 + nrm(ks[1], (width,), 0.1),
        "b1": nrm(ks[2], (width,), 0.1),
        "wA": nrm(ks[3], (3, 3, n, n), 0.2),          # 3x3 convs: HWIO
        "gA": 1.0 + nrm(ks[4], (n,), 0.1),
        "bA": nrm(ks[5], (n,), 0.1),
        "wB": nrm(ks[6], (3, 3, n, n), 0.2),
        "gB": 1.0 + nrm(ks[7], (n,), 0.1),
        "bB": nrm(ks[8], (n,), 0.1),
        "wC": nrm(ks[9], (3, 3, n, n), 0.2),
        "gC": 1.0 + nrm(ks[10], (n,), 0.1),
        "bC": nrm(ks[11], (n,), 0.1),
        "w3": nrm(ks[12], (width, cout), 0.1),        # conv3 1x1: (width, cout), no bias
        "g3": 1.0 + nrm(ks[13], (cout,), 0.1),
        "b3": nrm(ks[14], (cout,), 0.1),
    }


def reference_forward(x_nchw, p):
    """Pure-JAX reference with the same bf16-matmul / f32-statistics contract."""
    x = jnp.transpose(x_nchw, (0, 2, 3, 1)).astype(jnp.float32)   # NHWC

    def bn_relu(u, gamma, beta):
        mean = jnp.mean(u, axis=(0, 1, 2))
        var = jnp.maximum(jnp.mean(u * u, axis=(0, 1, 2)) - mean * mean, 0.0)
        scale = gamma * jax.lax.rsqrt(var + EPS)
        shift = beta - mean * scale
        return jnp.maximum(u * scale + shift, 0.0)

    def conv1x1(a, wmat):
        return jnp.einsum("bhwc,cd->bhwd", a.astype(jnp.bfloat16),
                          wmat.astype(jnp.bfloat16),
                          preferred_element_type=jnp.float32)

    def conv3x3(a, wk):
        return jax.lax.conv_general_dilated(
            a.astype(jnp.bfloat16), wk.astype(jnp.bfloat16), (1, 1), "SAME",
            dimension_numbers=("NHWC", "HWIO", "NHWC"),
            preferred_element_type=jnp.float32)

    n = p["wA"].shape[-1]
    t = bn_relu(conv1x1(x, p["w1"]), p["g1"], p["b1"])
    y1, x2, x3, x4 = (t[..., :n], t[..., n:2 * n], t[..., 2 * n:3 * n], t[..., 3 * n:4 * n])
    y2 = bn_relu(conv3x3(x2, p["wA"]), p["gA"], p["bA"])
    y3 = bn_relu(conv3x3(x3 + y2, p["wB"]), p["gB"], p["bB"])
    y4 = bn_relu(conv3x3(x4 + y3, p["wC"]), p["gC"], p["bC"])
    y = jnp.concatenate([y1, y2, y3, y4], axis=-1)
    u3 = conv1x1(y, p["w3"])
    mean = jnp.mean(u3, axis=(0, 1, 2))
    var = jnp.maximum(jnp.mean(u3 * u3, axis=(0, 1, 2)) - mean * mean, 0.0)
    scale = p["g3"] * jax.lax.rsqrt(var + EPS)
    shift = p["b3"] - mean * scale
    out = jnp.maximum((u3 * scale + shift) + x, 0.0)
    return jnp.transpose(out, (0, 3, 1, 2))


# --------------------------------------------------------------------------------------
if __name__ == "__main__":
    key = jax.random.PRNGKey(0)
    kx, kparam = jax.random.split(key)

    # Bottleneck(inplanes=32, planes=8): width=8, per-group N=2, out channels=32,
    # stride=1, downsample=None -> identity residual valid (inplanes == planes*4).
    inplanes, planes = 32, 8
    B, H, W = 2, 16, 16                  # M = 512 -> 2 row tiles of 256 (multi-tile BN stats)
    x = jax.random.normal(kx, (B, inplanes, H, W), jnp.float32)
    params = make_params(kparam, inplanes, planes)

    fwd = jax.jit(bottleneck_forward)
    out = jax.block_until_ready(fwd(x, params))
    ref = jax.block_until_ready(reference_forward(x, params))

    assert out.shape == (B, planes * 4, H, W)
    max_err = float(jnp.max(jnp.abs(out - ref)))
    assert jnp.allclose(out, ref, atol=3e-3, rtol=3e-3), max_err

    print("KERNEL_OK")
</pallas_src>

<mosaic_0001>
module attributes {stable_mosaic.version = 11 : i64} {
  func.func @_matmul_stats_kernel(%arg0: i32, %arg1: memref<256x128xbf16, #tpu.memory_space<vmem>>, %arg2: memref<128x128xbf16, #tpu.memory_space<vmem>>, %arg3: memref<256x128xf32, #tpu.memory_space<vmem>>, %arg4: memref<1x2x128xf32, #tpu.memory_space<vmem>>) attributes {dimension_semantics = [#tpu.dimension_semantics<parallel>], iteration_bounds = array<i64: 2>, scalar_prefetch = 0 : i64, scratch_operands = 0 : i64, tpu.core_type = #tpu.core_type<tc>, window_params = [{transform_indices = @transform_0, window_bounds = array<i64: 256, 128>}, {pipeline_mode = #tpu.pipeline_mode<synchronous>, transform_indices = @transform_1, window_bounds = array<i64: 128, 128>}, {transform_indices = @transform_2, window_bounds = array<i64: 256, 128>}, {transform_indices = @transform_3, window_bounds = array<i64: 1, 2, 128>}]} {
    %c0 = arith.constant 0 : index
    %c0_0 = arith.constant 0 : index
    %0 = vector.load %arg1[%c0, %c0_0] : memref<256x128xbf16, #tpu.memory_space<vmem>>, vector<256x128xbf16>
    %c0_1 = arith.constant 0 : index
    %c0_2 = arith.constant 0 : index
    %1 = vector.load %arg2[%c0_1, %c0_2] : memref<128x128xbf16, #tpu.memory_space<vmem>>, vector<128x128xbf16>
    %cst = arith.constant dense<0.000000e+00> : vector<256x128xf32>
    %2 = tpu.matmul %0, %1, %cst {dimension_numbers = #tpu.dot_dimension_numbers<[1], [0], [0], [1], [0, 0, 1, 1], [], []>} : vector<256x128xbf16>, vector<128x128xbf16>, vector<256x128xf32> -> vector<256x128xf32>
    %c0_3 = arith.constant 0 : index
    %c0_4 = arith.constant 0 : index
    %3 = vector.load %arg3[%c0_3, %c0_4] : memref<256x128xf32, #tpu.memory_space<vmem>>, vector<256x128xf32>
    tpu.vector_store %arg3[%c0_3, %c0_4], %2 {strides = array<i32>} : memref<256x128xf32, #tpu.memory_space<vmem>>, vector<256x128xf32>,
    %cst_5 = arith.constant dense<0.000000e+00> : vector<128xf32>
    %4 = vector.multi_reduction <add>, %2, %cst_5 [0] : vector<256x128xf32> to vector<128xf32>
    %5 = vector.shape_cast %4 : vector<128xf32> to vector<1x128xf32>
    %6 = arith.mulf %2, %2 : vector<256x128xf32>
    %cst_6 = arith.constant dense<0.000000e+00> : vector<128xf32>
    %7 = vector.multi_reduction <add>, %6, %cst_6 [0] : vector<256x128xf32> to vector<128xf32>
    %8 = vector.shape_cast %7 : vector<128xf32> to vector<1x128xf32>
    %9 = tpu.concatenate %5, %8 in 0 : vector<1x128xf32>, vector<1x128xf32> -> vector<2x128xf32>
    %10 = vector.shape_cast %9 : vector<2x128xf32> to vector<1x2x128xf32>
    %c0_7 = arith.constant 0 : index
    %c0_8 = arith.constant 0 : index
    %c0_9 = arith.constant 0 : index
    %11 = vector.load %arg4[%c0_7, %c0_8, %c0_9] : memref<1x2x128xf32, #tpu.memory_space<vmem>>, vector<1x2x128xf32>
    tpu.vector_store %arg4[%c0_7, %c0_8, %c0_9], %10 {strides = array<i32>} : memref<1x2x128xf32, #tpu.memory_space<vmem>>, vector<1x2x128xf32>,
    return
  }
  func.func @transform_0(%arg0: i32) -> (i32, i32) {
    %c0_i32 = arith.constant 0 : i32
    %c0_i32_0 = arith.constant 0 : i32
    return %arg0, %c0_i32 : i32, i32
  }
  func.func @transform_1(%arg0: i32) -> (i32, i32) {
    %c0_i32 = arith.constant 0 : i32
    %c0_i32_0 = arith.constant 0 : i32
    %c0_i32_1 = arith.constant 0 : i32
    return %c0_i32, %c0_i32_0 : i32, i32
  }
  func.func @transform_2(%arg0: i32) -> (i32, i32) {
    %c0_i32 = arith.constant 0 : i32
    %c0_i32_0 = arith.constant 0 : i32
    return %arg0, %c0_i32 : i32, i32
  }
  func.func @transform_3(%arg0: i32) -> (i32, i32, i32) {
    %c0_i32 = arith.constant 0 : i32
    %c0_i32_0 = arith.constant 0 : i32
    %c0_i32_1 = arith.constant 0 : i32
    return %arg0, %c0_i32, %c0_i32_0 : i32, i32, i32
  }
}

module attributes {stable_mosaic.version = 11 : i64} {
  func.func @_bn_act_kernel(%arg0: i32, %arg1: memref<256x128xf32, #tpu.memory_space<vmem>>, %arg2: memref<1x128xf32, #tpu.memory_space<vmem>>, %arg3: memref<1x128xf32, #tpu.memory_space<vmem>>, %arg4: memref<256x128xf32, #tpu.memory_space<vmem>>) attributes {dimension_semantics = [#tpu.dimension_semantics<parallel>], iteration_bounds = array<i64: 2>, scalar_prefetch = 0 : i64, scratch_operands = 0 : i64, tpu.core_type = #tpu.core_type<tc>, window_params = [{transform_indices = @transform_0, window_bounds = array<i64: 256, 128>}, {pipeline_mode = #tpu.pipeline_mode<synchronous>, transform_indices = @transform_1, window_bounds = array<i64: 1, 128>}, {pipeline_mode = #tpu.pipeline_mode<synchronous>, transform_indices = @transform_2, window_bounds = array<i64: 1, 128>}, {transform_indices = @transform_3, window_bounds = array<i64: 256, 128>}]} {
    %c0 = arith.constant 0 : index
    %c0_0 = arith.constant 0 : index
    %0 = vector.load %arg1[%c0, %c0_0] : memref<256x128xf32, #tpu.memory_space<vmem>>, vector<256x128xf32>
    %c0_1 = arith.constant 0 : index
    %c0_2 = arith.constant 0 : index
    %1 = vector.load %arg2[%c0_1, %c0_2] : memref<1x128xf32, #tpu.memory_space<vmem>>, vector<1x128xf32>
    %2 = vector.broadcast %1 : vector<1x128xf32> to vector<256x128xf32>
    %3 = arith.mulf %0, %2 : vector<256x128xf32>
    %c0_3 = arith.constant 0 : index
    %c0_4 = arith.constant 0 : index
    %4 = vector.load %arg3[%c0_3, %c0_4] : memref<1x128xf32, #tpu.memory_space<vmem>>, vector<1x128xf32>
    %5 = vector.broadcast %4 : vector<1x128xf32> to vector<256x128xf32>
    %6 = arith.addf %3, %5 : vector<256x128xf32>
    %cst = arith.constant 0.000000e+00 : f32
    %7 = vector.broadcast %cst : f32 to vector<256x128xf32>
    %8 = arith.maximumf %6, %7 : vector<256x128xf32>
    %c0_5 = arith.constant 0 : index
    %c0_6 = arith.constant 0 : index
    %9 = vector.load %arg4[%c0_5, %c0_6] : memref<256x128xf32, #tpu.memory_space<vmem>>, vector<256x128xf32>
    tpu.vector_store %arg4[%c0_5, %c0_6], %8 {strides = array<i32>} : memref<256x128xf32, #tpu.memory_space<vmem>>, vector<256x128xf32>,
    return
  }
  func.func @transform_0(%arg0: i32) -> (i32, i32) {
    %c0_i32 = arith.constant 0 : i32
    %c0_i32_0 = arith.constant 0 : i32
    return %arg0, %c0_i32 : i32, i32
  }
  func.func @transform_1(%arg0: i32) -> (i32, i32) {
    %c0_i32 = arith.constant 0 : i32
    %c0_i32_0 = arith.constant 0 : i32
    %c0_i32_1 = arith.constant 0 : i32
    return %c0_i32, %c0_i32_0 : i32, i32
  }
  func.func @transform_2(%arg0: i32) -> (i32, i32) {
    %c0_i32 = arith.constant 0 : i32
    %c0_i32_0 = arith.constant 0 : i32
    %c0_i32_1 = arith.constant 0 : i32
    return %c0_i32, %c0_i32_0 : i32, i32
  }
  func.func @transform_3(%arg0: i32) -> (i32, i32) {
    %c0_i32 = arith.constant 0 : i32
    %c0_i32_0 = arith.constant 0 : i32
    return %arg0, %c0_i32 : i32, i32
  }
}

module attributes {stable_mosaic.version = 11 : i64} {
  func.func @_bn_act_dual_kernel(%arg0: i32, %arg1: memref<256x128xf32, #tpu.memory_space<vmem>>, %arg2: memref<1x128xf32, #tpu.memory_space<vmem>>, %arg3: memref<1x128xf32, #tpu.memory_space<vmem>>, %arg4: memref<256x128xf32, #tpu.memory_space<vmem>>, %arg5: memref<256x128xbf16, #tpu.memory_space<vmem>>, %arg6: memref<256x128xbf16, #tpu.memory_space<vmem>>) attributes {dimension_semantics = [#tpu.dimension_semantics<parallel>], iteration_bounds = array<i64: 2>, scalar_prefetch = 0 : i64, scratch_operands = 0 : i64, tpu.core_type = #tpu.core_type<tc>, window_params = [{transform_indices = @transform_0, window_bounds = array<i64: 256, 128>}, {pipeline_mode = #tpu.pipeline_mode<synchronous>, transform_indices = @transform_1, window_bounds = array<i64: 1, 128>}, {pipeline_mode = #tpu.pipeline_mode<synchronous>, transform_indices = @transform_2, window_bounds = array<i64: 1, 128>}, {transform_indices = @transform_3, window_bounds = array<i64: 256, 128>}, {transform_indices = @transform_4, window_bounds = array<i64: 256, 128>}, {transform_indices = @transform_5, window_bounds = array<i64: 256, 128>}]} {
    %c0 = arith.constant 0 : index
    %c0_0 = arith.constant 0 : index
    %0 = vector.load %arg1[%c0, %c0_0] : memref<256x128xf32, #tpu.memory_space<vmem>>, vector<256x128xf32>
    %c0_1 = arith.constant 0 : index
    %c0_2 = arith.constant 0 : index
    %1 = vector.load %arg2[%c0_1, %c0_2] : memref<1x128xf32, #tpu.memory_space<vmem>>, vector<1x128xf32>
    %2 = vector.broadcast %1 : vector<1x128xf32> to vector<256x128xf32>
    %3 = arith.mulf %0, %2 : vector<256x128xf32>
    %c0_3 = arith.constant 0 : index
    %c0_4 = arith.constant 0 : index
    %4 = vector.load %arg3[%c0_3, %c0_4] : memref<1x128xf32, #tpu.memory_space<vmem>>, vector<1x128xf32>
    %5 = vector.broadcast %4 : vector<1x128xf32> to vector<256x128xf32>
    %6 = arith.addf %3, %5 : vector<256x128xf32>
    %cst = arith.constant 0.000000e+00 : f32
    %7 = vector.broadcast %cst : f32 to vector<256x128xf32>
    %8 = arith.maximumf %6, %7 : vector<256x128xf32>
    %9 = arith.truncf %8 : vector<256x128xf32> to vector<256x128xbf16>
    %c0_5 = arith.constant 0 : index
    %c0_6 = arith.constant 0 : index
    %10 = vector.load %arg5[%c0_5, %c0_6] : memref<256x128xbf16, #tpu.memory_space<vmem>>, vector<256x128xbf16>
    tpu.vector_store %arg5[%c0_5, %c0_6], %9 {strides = array<i32>} : memref<256x128xbf16, #tpu.memory_space<vmem>>, vector<256x128xbf16>,
    %c0_7 = arith.constant 0 : index
    %c0_8 = arith.constant 0 : index
    %11 = vector.load %arg4[%c0_7, %c0_8] : memref<256x128xf32, #tpu.memory_space<vmem>>, vector<256x128xf32>
    %12 = arith.addf %8, %11 : vector<256x128xf32>
    %13 = arith.truncf %12 : vector<256x128xf32> to vector<256x128xbf16>
    %c0_9 = arith.constant 0 : index
    %c0_10 = arith.constant 0 : index
    %14 = vector.load %arg6[%c0_9, %c0_10] : memref<256x128xbf16, #tpu.memory_space<vmem>>, vector<256x128xbf16>
    tpu.vector_store %arg6[%c0_9, %c0_10], %13 {strides = array<i32>} : memref<256x128xbf16, #tpu.memory_space<vmem>>, vector<256x128xbf16>,
    return
  }
  func.func @transform_0(%arg0: i32) -> (i32, i32) {
    %c0_i32 = arith.constant 0 : i32
    %c0_i32_0 = arith.constant 0 : i32
    return %arg0, %c0_i32 : i32, i32
  }
  func.func @transform_1(%arg0: i32) -> (i32, i32) {
    %c0_i32 = arith.constant 0 : i32
    %c0_i32_0 = arith.constant 0 : i32
    %c0_i32_1 = arith.constant 0 : i32
    return %c0_i32, %c0_i32_0 : i32, i32
  }
  func.func @transform_2(%arg0: i32) -> (i32, i32) {
    %c0_i32 = arith.constant 0 : i32
    %c0_i32_0 = arith.constant 0 : i32
    %c0_i32_1 = arith.constant 0 : i32
    return %c0_i32, %c0_i32_0 : i32, i32
  }
  func.func @transform_3(%arg0: i32) -> (i32, i32) {
    %c0_i32 = arith.constant 0 : i32
    %c0_i32_0 = arith.constant 0 : i32
    return %arg0, %c0_i32 : i32, i32
  }
  func.func @transform_4(%arg0: i32) -> (i32, i32) {
    %c0_i32 = arith.constant 0 : i32
    %c0_i32_0 = arith.constant 0 : i32
    return %arg0, %c0_i32 : i32, i32
  }
  func.func @transform_5(%arg0: i32) -> (i32, i32) {
    %c0_i32 = arith.constant 0 : i32
    %c0_i32_0 = arith.constant 0 : i32
    return %arg0, %c0_i32 : i32, i32
  }
}

module attributes {stable_mosaic.version = 11 : i64} {
  func.func @_bn_act_kernel(%arg0: i32, %arg1: memref<256x128xf32, #tpu.memory_space<vmem>>, %arg2: memref<1x128xf32, #tpu.memory_space<vmem>>, %arg3: memref<1x128xf32, #tpu.memory_space<vmem>>, %arg4: memref<256x128xbf16, #tpu.memory_space<vmem>>) attributes {dimension_semantics = [#tpu.dimension_semantics<parallel>], iteration_bounds = array<i64: 2>, scalar_prefetch = 0 : i64, scratch_operands = 0 : i64, tpu.core_type = #tpu.core_type<tc>, window_params = [{transform_indices = @transform_0, window_bounds = array<i64: 256, 128>}, {pipeline_mode = #tpu.pipeline_mode<synchronous>, transform_indices = @transform_1, window_bounds = array<i64: 1, 128>}, {pipeline_mode = #tpu.pipeline_mode<synchronous>, transform_indices = @transform_2, window_bounds = array<i64: 1, 128>}, {transform_indices = @transform_3, window_bounds = array<i64: 256, 128>}]} {
    %c0 = arith.constant 0 : index
    %c0_0 = arith.constant 0 : index
    %0 = vector.load %arg1[%c0, %c0_0] : memref<256x128xf32, #tpu.memory_space<vmem>>, vector<256x128xf32>
    %c0_1 = arith.constant 0 : index
    %c0_2 = arith.constant 0 : index
    %1 = vector.load %arg2[%c0_1, %c0_2] : memref<1x128xf32, #tpu.memory_space<vmem>>, vector<1x128xf32>
    %2 = vector.broadcast %1 : vector<1x128xf32> to vector<256x128xf32>
    %3 = arith.mulf %0, %2 : vector<256x128xf32>
    %c0_3 = arith.constant 0 : index
    %c0_4 = arith.constant 0 : index
    %4 = vector.load %arg3[%c0_3, %c0_4] : memref<1x128xf32, #tpu.memory_space<vmem>>, vector<1x128xf32>
    %5 = vector.broadcast %4 : vector<1x128xf32> to vector<256x128xf32>
    %6 = arith.addf %3, %5 : vector<256x128xf32>
    %cst = arith.constant 0.000000e+00 : f32
    %7 = vector.broadcast %cst : f32 to vector<256x128xf32>
    %8 = arith.maximumf %6, %7 : vector<256x128xf32>
    %9 = arith.truncf %8 : vector<256x128xf32> to vector<256x128xbf16>
    %c0_5 = arith.constant 0 : index
    %c0_6 = arith.constant 0 : index
    %10 = vector.load %arg4[%c0_5, %c0_6] : memref<256x128xbf16, #tpu.memory_space<vmem>>, vector<256x128xbf16>
    tpu.vector_store %arg4[%c0_5, %c0_6], %9 {strides = array<i32>} : memref<256x128xbf16, #tpu.memory_space<vmem>>, vector<256x128xbf16>,
    return
  }
  func.func @transform_0(%arg0: i32) -> (i32, i32) {
    %c0_i32 = arith.constant 0 : i32
    %c0_i32_0 = arith.constant 0 : i32
    return %arg0, %c0_i32 : i32, i32
  }
  func.func @transform_1(%arg0: i32) -> (i32, i32) {
    %c0_i32 = arith.constant 0 : i32
    %c0_i32_0 = arith.constant 0 : i32
    %c0_i32_1 = arith.constant 0 : i32
    return %c0_i32, %c0_i32_0 : i32, i32
  }
  func.func @transform_2(%arg0: i32) -> (i32, i32) {
    %c0_i32 = arith.constant 0 : i32
    %c0_i32_0 = arith.constant 0 : i32
    %c0_i32_1 = arith.constant 0 : i32
    return %c0_i32, %c0_i32_0 : i32, i32
  }
  func.func @transform_3(%arg0: i32) -> (i32, i32) {
    %c0_i32 = arith.constant 0 : i32
    %c0_i32_0 = arith.constant 0 : i32
    return %arg0, %c0_i32 : i32, i32
  }
}

module attributes {stable_mosaic.version = 11 : i64} {
  func.func @_bn_act_res_kernel(%arg0: i32, %arg1: memref<256x128xf32, #tpu.memory_space<vmem>>, %arg2: memref<1x128xf32, #tpu.memory_space<vmem>>, %arg3: memref<1x128xf32, #tpu.memory_space<vmem>>, %arg4: memref<256x128xf32, #tpu.memory_space<vmem>>, %arg5: memref<256x128xf32, #tpu.memory_space<vmem>>) attributes {dimension_semantics = [#tpu.dimension_semantics<parallel>], iteration_bounds = array<i64: 2>, scalar_prefetch = 0 : i64, scratch_operands = 0 : i64, tpu.core_type = #tpu.core_type<tc>, window_params = [{transform_indices = @transform_0, window_bounds = array<i64: 256, 128>}, {pipeline_mode = #tpu.pipeline_mode<synchronous>, transform_indices = @transform_1, window_bounds = array<i64: 1, 128>}, {pipeline_mode = #tpu.pipeline_mode<synchronous>, transform_indices = @transform_2, window_bounds = array<i64: 1, 128>}, {transform_indices = @transform_3, window_bounds = array<i64: 256, 128>}, {transform_indices = @transform_4, window_bounds = array<i64: 256, 128>}]} {
    %c0 = arith.constant 0 : index
    %c0_0 = arith.constant 0 : index
    %0 = vector.load %arg1[%c0, %c0_0] : memref<256x128xf32, #tpu.memory_space<vmem>>, vector<256x128xf32>
    %c0_1 = arith.constant 0 : index
    %c0_2 = arith.constant 0 : index
    %1 = vector.load %arg2[%c0_1, %c0_2] : memref<1x128xf32, #tpu.memory_space<vmem>>, vector<1x128xf32>
    %2 = vector.broadcast %1 : vector<1x128xf32> to vector<256x128xf32>
    %3 = arith.mulf %0, %2 : vector<256x128xf32>
    %c0_3 = arith.constant 0 : index
    %c0_4 = arith.constant 0 : index
    %4 = vector.load %arg3[%c0_3, %c0_4] : memref<1x128xf32, #tpu.memory_space<vmem>>, vector<1x128xf32>
    %5 = vector.broadcast %4 : vector<1x128xf32> to vector<256x128xf32>
    %6 = arith.addf %3, %5 : vector<256x128xf32>
    %c0_5 = arith.constant 0 : index
    %c0_6 = arith.constant 0 : index
    %7 = vector.load %arg4[%c0_5, %c0_6] : memref<256x128xf32, #tpu.memory_space<vmem>>, vector<256x128xf32>
    %8 = arith.addf %6, %7 : vector<256x128xf32>
    %cst = arith.constant 0.000000e+00 : f32
    %9 = vector.broadcast %cst : f32 to vector<256x128xf32>
    %10 = arith.maximumf %8, %9 : vector<256x128xf32>
    %c0_7 = arith.constant 0 : index
    %c0_8 = arith.constant 0 : index
    %11 = vector.load %arg5[%c0_7, %c0_8] : memref<256x128xf32, #tpu.memory_space<vmem>>, vector<256x128xf32>
    tpu.vector_store %arg5[%c0_7, %c0_8], %10 {strides = array<i32>} : memref<256x128xf32, #tpu.memory_space<vmem>>, vector<256x128xf32>,
    return
  }
  func.func @transform_0(%arg0: i32) -> (i32, i32) {
    %c0_i32 = arith.constant 0 : i32
    %c0_i32_0 = arith.constant 0 : i32
    return %arg0, %c0_i32 : i32, i32
  }
  func.func @transform_1(%arg0: i32) -> (i32, i32) {
    %c0_i32 = arith.constant 0 : i32
    %c0_i32_0 = arith.constant 0 : i32
    %c0_i32_1 = arith.constant 0 : i32
    return %c0_i32, %c0_i32_0 : i32, i32
  }
  func.func @transform_2(%arg0: i32) -> (i32, i32) {
    %c0_i32 = arith.constant 0 : i32
    %c0_i32_0 = arith.constant 0 : i32
    %c0_i32_1 = arith.constant 0 : i32
    return %c0_i32, %c0_i32_0 : i32, i32
  }
  func.func @transform_3(%arg0: i32) -> (i32, i32) {
    %c0_i32 = arith.constant 0 : i32
    %c0_i32_0 = arith.constant 0 : i32
    return %arg0, %c0_i32 : i32, i32
  }
  func.func @transform_4(%arg0: i32) -> (i32, i32) {
    %c0_i32 = arith.constant 0 : i32
    %c0_i32_0 = arith.constant 0 : i32
    return %arg0, %c0_i32 : i32, i32
  }
}

</mosaic_0001>

<llo_original>
// kernel: bottleneck_forward.11
$region0: #{bottleneck_forward.11}
  #allocation0 [shape = 'u32[]', space=smem, size = 0x4, offset = 0x4, fixed_abs, tag = 'smem constant byte address 0x4 - core index']
  #allocation1 [shape = 'u32[144,128]{1,0:T(1,128)}', space=vmem, size = 0x12000, scoped, tag = 'internal scratch']
  %s0 = inlined_call_operand.vmem [shape: f32[512,128], index: 0, kind: input, shape index: {}]
  %s1 = inlined_call_operand.vmem [shape: f32[1,128], index: 1, kind: input, shape index: {}]
  %s2 = inlined_call_operand.vmem [shape: f32[1,128], index: 2, kind: input, shape index: {}]
  %s3 = inlined_call_operand.vmem [shape: f32[512,128], index: 3, kind: output, shape index: {}]
  %s4 = sld [smem:[#allocation0]]
  $region45: #{bottleneck_forward.11} parent=0
    _
  %s6 = ssub.s32 1, %s4
  %s7 = scalar_select 0, %s6, %s4
  loop: start=0, step=1, limit=4
  $region2: #{bottleneck_forward.11} parent=0 // loop_pre_header
    _
  $region3: #{bottleneck_forward.11} parent=0 // loop_header
    %s9 = sphi 0, %s13
    %p10 = scmp.ge.s32.totalorder %s9, 4
    %s19 = sphi 0, %s21
    %s22 = sphi 0, %s19
    %s23 = sphi 0, %s22
    %s39 = sphi 0, %s23
    %s43 = sphi 0, %s43
    %s45 = sphi 0, %s43
    %s46 = sphi 0, %s45
    %s60 = sphi 0, %s46
    %s64 = sphi 0, %s64
    %s66 = sphi 0, %s64
    %s67 = sphi 0, %s66
    %s81 = sphi 0, %s67
    %s87 = sphi 0, %s89
    %s90 = sphi 0, %s87
    %s91 = sphi 0, %s90
    %s107 = sphi 0, %s91
  $region4: #{bottleneck_forward.11} parent=0 // loop_header_branch
    %12 = sbr.rel (%p10) target = $region8
  $region5: #{bottleneck_forward.11} parent=0 // loop_body
    %s14 = ssub.s32 %s9, 1
    %s15 = ssub.s32 %s9, 2
    %s16 = sadd.s32 %s9, 1
    %s17 = ssub.s32 %s9, %s16
    %p18 = scmp.eq.s32.totalorder %s17, 0
    %s20 = sadd.s32 %s19, 1
    %s21 = scalar_select %p18, %s19, %s20
    %p24 = pneg %p18
    %p25 = scmp.eq.s32.totalorder %s9, 1
    %p26 = por %p24, %p25
    %p27 = scmp.ne.s32.totalorder %s19, %s22
    %p28 = scmp.eq.s32.totalorder %s9, 0
    %p29 = por %p27, %p28
    %p30 = scmp.ne.s32.totalorder %s19, %s22
    %p31 = scmp.eq.s32.totalorder %s14, 1
    %p32 = por %p30, %p31
    %p33 = scmp.ne.s32.totalorder %s22, %s23
    %p34 = scmp.eq.s32.totalorder %s14, 0
    %p35 = por %p33, %p34
    %p36 = scmp.ne.s32.totalorder %s22, %s23
    %p37 = scmp.eq.s32.totalorder %s15, 1
    %p38 = por %p36, %p37
    %p40 = scmp.ne.s32.totalorder %s23, %s39
    %p41 = scmp.eq.s32.totalorder %s15, 0
    %p42 = por %p40, %p41
    %s44 = sadd.s32 %s43, 1
    %p47 = scmp.eq.s32.totalorder %s9, 1
    %p48 = scmp.ne.s32.totalorder %s43, %s45
    %p49 = scmp.eq.s32.totalorder %s9, 0
    %p50 = por %p48, %p49
    %p51 = scmp.ne.s32.totalorder %s43, %s45
    %p52 = scmp.eq.s32.totalorder %s14, 1
    %p53 = por %p51, %p52
    %p54 = scmp.ne.s32.totalorder %s45, %s46
    %p55 = scmp.eq.s32.totalorder %s14, 0
    %p56 = por %p54, %p55
    %p57 = scmp.ne.s32.totalorder %s45, %s46
    %p58 = scmp.eq.s32.totalorder %s15, 1
    %p59 = por %p57, %p58
    %p61 = scmp.ne.s32.totalorder %s46, %s60
    %p62 = scmp.eq.s32.totalorder %s15, 0
    %p63 = por %p61, %p62
    %s65 = sadd.s32 %s64, 1
    %p68 = scmp.eq.s32.totalorder %s9, 1
    %p69 = scmp.ne.s32.totalorder %s64, %s66
    %p70 = scmp.eq.s32.totalorder %s9, 0
    %p71 = por %p69, %p70
    %p72 = scmp.ne.s32.totalorder %s64, %s66
    %p73 = scmp.eq.s32.totalorder %s14, 1
    %p74 = por %p72, %p73
    %p75 = scmp.ne.s32.totalorder %s66, %s67
    %p76 = scmp.eq.s32.totalorder %s14, 0
    %p77 = por %p75, %p76
    %p78 = scmp.ne.s32.totalorder %s66, %s67
    %p79 = scmp.eq.s32.totalorder %s15, 1
    %p80 = por %p78, %p79
    %p82 = scmp.ne.s32.totalorder %s67, %s81
    %p83 = scmp.eq.s32.totalorder %s15, 0
    %p84 = por %p82, %p83
    %s85 = ssub.s32 %s9, %s16
    %p86 = scmp.eq.s32.totalorder %s85, 0
    %s88 = sadd.s32 %s87, 1
    %s89 = scalar_select %p86, %s87, %s88
    %p92 = pneg %p86
    %p93 = scmp.eq.s32.totalorder %s9, 1
    %p94 = por %p92, %p93
    %p95 = scmp.ne.s32.totalorder %s87, %s90
    %p96 = scmp.eq.s32.totalorder %s9, 0
    %p97 = por %p95, %p96
    %p98 = scmp.ne.s32.totalorder %s87, %s90
    %p99 = scmp.eq.s32.totalorder %s14, 1
    %p100 = por %p98, %p99
    %p101 = scmp.ne.s32.totalorder %s90, %s91
    %p102 = scmp.eq.s32.totalorder %s14, 0
    %p103 = por %p101, %p102
    %p104 = scmp.ne.s32.totalorder %s90, %s91
    %p105 = scmp.eq.s32.totalorder %s15, 1
    %p106 = por %p104, %p105
    %p108 = scmp.ne.s32.totalorder %s91, %s107
    %p109 = scmp.eq.s32.totalorder %s15, 0
    %p110 = por %p108, %p109
    %p111 = scmp.le.s32.totalorder 1, %s9
    %p112 = scmp.lt.s32.totalorder %s9, 3
    %p113 = pnand %p111, %p112
    %p114 = pneg %p113
    // Predicated region
    $region9: #{bottleneck_forward.11} parent=5 // pred_check
      _
    $region10: #{bottleneck_forward.11} parent=5 // pred_check_branch
      %116 = sbr.rel (%p113) target = $region12
    $region11: #{bottleneck_forward.11} parent=5 // pred_region
      %s117 = ssub.s32 %s9, 1
      // Predicated region
      $region13: #{bottleneck_forward.11} parent=11 // pred_check
        %p118 = pneg %p56
      $region14: #{bottleneck_forward.11} parent=11 // pred_check_branch
        %120 = sbr.rel (%p118) target = $region16
      $region15: #{bottleneck_forward.11} parent=11 // pred_region
        _
      $region16: #{bottleneck_forward.11} parent=11 // pred_fallthru
        _
      // Predicated region
      $region17: #{bottleneck_forward.11} parent=11 // pred_check
        %p121 = pneg %p77
      $region18: #{bottleneck_forward.11} parent=11 // pred_check_branch
        %123 = sbr.rel (%p121) target = $region20
      $region19: #{bottleneck_forward.11} parent=11 // pred_region
        _
      $region20: #{bottleneck_forward.11} parent=11 // pred_fallthru
        _
    $region12: #{bottleneck_forward.11} parent=5 // pred_fallthru
      _
    %p124 = scmp.lt.s32.totalorder %s9, 2
    // Predicated region
    $region21: #{bottleneck_forward.11} parent=5 // pred_check
      %p125 = pneg %p124
    $region22: #{bottleneck_forward.11} parent=5 // pred_check_branch
      %127 = sbr.rel (%p125) target = $region24
    $region23: #{bottleneck_forward.11} parent=5 // pred_region
      // Predicated region
      $region25: #{bottleneck_forward.11} parent=23 // pred_check
        %p128 = pneg %p29
      $region26: #{bottleneck_forward.11} parent=23 // pred_check_branch
        %130 = sbr.rel (%p128) target = $region28
      $region27: #{bottleneck_forward.11} parent=23 // pred_region
        %s131 = smul.u32 32, %s9
        %p132 = scmp.lt.s32.totalorder %s131, 63
        %s133 = scalar_select %p132, %s131, 63
        %s134 = smul.addr %s133, 8
        %s135 = scalar_lea.vmem %s0, %s134
        %s136 = smul.u32 32, %s9
      $region28: #{bottleneck_forward.11} parent=23 // pred_fallthru
        _
    $region24: #{bottleneck_forward.11} parent=5 // pred_fallthru
      _
    %p137 = scmp.le.s32.totalorder 1, %s9
    %p138 = scmp.lt.s32.totalorder %s9, 3
    %p139 = pnand %p137, %p138
    %p140 = pneg %p139
    // Predicated region
    $region29: #{bottleneck_forward.11} parent=5 // pred_check
      _
    $region30: #{bottleneck_forward.11} parent=5 // pred_check_branch
      %142 = sbr.rel (%p139) target = $region32
    $region31: #{bottleneck_forward.11} parent=5 // pred_region
      %s143 = ssub.s32 %s9, 1
      %s144 = smul.u32 32, %s14
      %p145 = scmp.lt.s32.totalorder %s144, 63
      %s146 = scalar_select %p145, %s144, 63
      %s147 = smul.addr %s146, 8
      %s148 = scalar_lea.vmem %s0, %s147
      %p149 = pneg %p35
      %p150 = pneg %p32
      %p151 = pneg %p56
      %p152 = pneg %p53
      %p153 = pneg %p77
      %p154 = pneg %p74
      %p155 = pneg %p103
      %p156 = pneg %p100
      %s157 = smul.u32 32, %s14
      %p158 = scmp.lt.s32.totalorder %s157, 63
      %s159 = scalar_select %p158, %s157, 63
      %s160 = smul.addr %s159, 8
      %s161 = scalar_lea.vmem %s3, %s160
      %s162 = smul.u32 32, %s14
      %p163 = scmp.lt.s32.totalorder %s162, 63
      %s164 = scalar_select %p163, %s162, 63
      %s165 = smul.addr %s164, 8
      %s166 = scalar_lea.vmem %s0, %s165
      %s167 = smul.u32 32, %s14
      %s168 = smul.u32 32, %s14
      %p169 = scmp.lt.s32.totalorder %s168, 63
      %s170 = scalar_select %p169, %s168, 63
      %s171 = smul.addr %s170, 8
      %s172 = scalar_lea.vmem %s3, %s171
      %s173 = smul.u32 32, %s14
      %v174 = vld [vmem:[%s166] sm:$0xff]
      %v175 = vld [vmem:[%s166 + $0x8] sm:$0xff]
      %v176 = vld [vmem:[%s166 + $0x10] sm:$0xff]
      %v177 = vld [vmem:[%s166 + $0x18] sm:$0xff]
      %v178 = vld [vmem:[%s166 + $0x20] sm:$0xff]
      %v179 = vld [vmem:[%s166 + $0x28] sm:$0xff]
      %v180 = vld [vmem:[%s166 + $0x30] sm:$0xff]
      %v181 = vld [vmem:[%s166 + $0x38] sm:$0xff]
      %v182 = vld [vmem:[%s166 + $0x40] sm:$0xff]
      %v183 = vld [vmem:[%s166 + $0x48] sm:$0xff]
      %v184 = vld [vmem:[%s166 + $0x50] sm:$0xff]
      %v185 = vld [vmem:[%s166 + $0x58] sm:$0xff]
      %v186 = vld [vmem:[%s166 + $0x60] sm:$0xff]
      %v187 = vld [vmem:[%s166 + $0x68] sm:$0xff]
      %v188 = vld [vmem:[%s166 + $0x70] sm:$0xff]
      %v189 = vld [vmem:[%s166 + $0x78] sm:$0xff]
      %v190 = vld [vmem:[%s166 + $0x80] sm:$0xff]
      %v191 = vld [vmem:[%s166 + $0x88] sm:$0xff]
      %v192 = vld [vmem:[%s166 + $0x90] sm:$0xff]
      %v193 = vld [vmem:[%s166 + $0x98] sm:$0xff]
      %v194 = vld [vmem:[%s166 + $0xa0] sm:$0xff]
      %v195 = vld [vmem:[%s166 + $0xa8] sm:$0xff]
      %v196 = vld [vmem:[%s166 + $0xb0] sm:$0xff]
      %v197 = vld [vmem:[%s166 + $0xb8] sm:$0xff]
      %v198 = vld [vmem:[%s166 + $0xc0] sm:$0xff]
      %v199 = vld [vmem:[%s166 + $0xc8] sm:$0xff]
      %v200 = vld [vmem:[%s166 + $0xd0] sm:$0xff]
      %v201 = vld [vmem:[%s166 + $0xd8] sm:$0xff]
      %v202 = vld [vmem:[%s166 + $0xe0] sm:$0xff]
      %v203 = vld [vmem:[%s166 + $0xe8] sm:$0xff]
      %v204 = vld [vmem:[%s166 + $0xf0] sm:$0xff]
      %v205 = vld [vmem:[%s166 + $0xf8] sm:$0xff]
      %v206 = vld [vmem:[%s1] sm:$0x1]
      %v208 = vlaneseq
      %v209 = vshrl.u32 %v208, 7
      %v210 = vsub.s32 0, %v209
      %v211 = vrot.slane %v206, %v210
      %v213 = vmul.f32 %v174, %v211
      %v214 = vmul.f32 %v175, %v211
      %v215 = vmul.f32 %v176, %v211
      %v216 = vmul.f32 %v177, %v211
      %v217 = vmul.f32 %v178, %v211
      %v218 = vmul.f32 %v179, %v211
      %v219 = vmul.f32 %v180, %v211
      %v220 = vmul.f32 %v181, %v211
      %v221 = vmul.f32 %v182, %v211
      %v222 = vmul.f32 %v183, %v211
      %v223 = vmul.f32 %v184, %v211
      %v224 = vmul.f32 %v185, %v211
      %v225 = vmul.f32 %v186, %v211
      %v226 = vmul.f32 %v187, %v211
      %v227 = vmul.f32 %v188, %v211
      %v228 = vmul.f32 %v189, %v211
      %v229 = vmul.f32 %v190, %v211
      %v230 = vmul.f32 %v191, %v211
      %v231 = vmul.f32 %v192, %v211
      %v232 = vmul.f32 %v193, %v211
      %v233 = vmul.f32 %v194, %v211
      %v234 = vmul.f32 %v195, %v211
      %v235 = vmul.f32 %v196, %v211
      %v236 = vmul.f32 %v197, %v211
      %v237 = vmul.f32 %v198, %v211
      %v238 = vmul.f32 %v199, %v211
      %v239 = vmul.f32 %v200, %v211
      %v240 = vmul.f32 %v201, %v211
      %v241 = vmul.f32 %v202, %v211
      %v242 = vmul.f32 %v203, %v211
      %v243 = vmul.f32 %v204, %v211
      %v244 = vmul.f32 %v205, %v211
      %v245 = vld [vmem:[%s2] sm:$0x1]
      %v247 = vlaneseq
      %v248 = vshrl.u32 %v247, 7
      %v249 = vsub.s32 0, %v248
      %v250 = vrot.slane %v245, %v249
      %v252 = vadd.f32 %v213, %v250
      %v253 = vadd.f32 %v214, %v250
      %v254 = vadd.f32 %v215, %v250
      %v255 = vadd.f32 %v216, %v250
      %v256 = vadd.f32 %v217, %v250
      %v257 = vadd.f32 %v218, %v250
      %v258 = vadd.f32 %v219, %v250
      %v259 = vadd.f32 %v220, %v250
      %v260 = vadd.f32 %v221, %v250
      %v261 = vadd.f32 %v222, %v250
      %v262 = vadd.f32 %v223, %v250
      %v263 = vadd.f32 %v224, %v250
      %v264 = vadd.f32 %v225, %v250
      %v265 = vadd.f32 %v226, %v250
      %v266 = vadd.f32 %v227, %v250
      %v267 = vadd.f32 %v228, %v250
      %v268 = vadd.f32 %v229, %v250
      %v269 = vadd.f32 %v230, %v250
      %v270 = vadd.f32 %v231, %v250
      %v271 = vadd.f32 %v232, %v250
      %v272 = vadd.f32 %v233, %v250
      %v273 = vadd.f32 %v234, %v250
      %v274 = vadd.f32 %v235, %v250
      %v275 = vadd.f32 %v236, %v250
      %v276 = vadd.f32 %v237, %v250
      %v277 = vadd.f32 %v238, %v250
      %v278 = vadd.f32 %v239, %v250
      %v279 = vadd.f32 %v240, %v250
      %v280 = vadd.f32 %v241, %v250
      %v281 = vadd.f32 %v242, %v250
      %v282 = vadd.f32 %v243, %v250
      %v283 = vadd.f32 %v244, %v250
      %v284 = vmax.f32 %v252, 0.0
      %v285 = vmax.f32 %v253, 0.0
      %v286 = vmax.f32 %v254, 0.0
      %v287 = vmax.f32 %v255, 0.0
      %v288 = vmax.f32 %v256, 0.0
      %v289 = vmax.f32 %v257, 0.0
      %v290 = vmax.f32 %v258, 0.0
      %v291 = vmax.f32 %v259, 0.0
      %v292 = vmax.f32 %v260, 0.0
      %v293 = vmax.f32 %v261, 0.0
      %v294 = vmax.f32 %v262, 0.0
      %v295 = vmax.f32 %v263, 0.0
      %v296 = vmax.f32 %v264, 0.0
      %v297 = vmax.f32 %v265, 0.0
      %v298 = vmax.f32 %v266, 0.0
      %v299 = vmax.f32 %v267, 0.0
      %v300 = vmax.f32 %v268, 0.0
      %v301 = vmax.f32 %v269, 0.0
      %v302 = vmax.f32 %v270, 0.0
      %v303 = vmax.f32 %v271, 0.0
      %v304 = vmax.f32 %v272, 0.0
      %v305 = vmax.f32 %v273, 0.0
      %v306 = vmax.f32 %v274, 0.0
      %v307 = vmax.f32 %v275, 0.0
      %v308 = vmax.f32 %v276, 0.0
      %v309 = vmax.f32 %v277, 0.0
      %v310 = vmax.f32 %v278, 0.0
      %v311 = vmax.f32 %v279, 0.0
      %v312 = vmax.f32 %v280, 0.0
      %v313 = vmax.f32 %v281, 0.0
      %v314 = vmax.f32 %v282, 0.0
      %v315 = vmax.f32 %v283, 0.0
      %316 = vst [vmem:[%s172] sm:$0xff] %v284
      %317 = vst [vmem:[%s172 + $0x8] sm:$0xff] %v285
      %318 = vst [vmem:[%s172 + $0x10] sm:$0xff] %v286
      %319 = vst [vmem:[%s172 + $0x18] sm:$0xff] %v287
      %320 = vst [vmem:[%s172 + $0x20] sm:$0xff] %v288
      %321 = vst [vmem:[%s172 + $0x28] sm:$0xff] %v289
      %322 = vst [vmem:[%s172 + $0x30] sm:$0xff] %v290
      %323 = vst [vmem:[%s172 + $0x38] sm:$0xff] %v291
      %324 = vst [vmem:[%s172 + $0x40] sm:$0xff] %v292
      %325 = vst [vmem:[%s172 + $0x48] sm:$0xff] %v293
      %326 = vst [vmem:[%s172 + $0x50] sm:$0xff] %v294
      %327 = vst [vmem:[%s172 + $0x58] sm:$0xff] %v295
      %328 = vst [vmem:[%s172 + $0x60] sm:$0xff] %v296
      %329 = vst [vmem:[%s172 + $0x68] sm:$0xff] %v297
      %330 = vst [vmem:[%s172 + $0x70] sm:$0xff] %v298
      %331 = vst [vmem:[%s172 + $0x78] sm:$0xff] %v299
      %332 = vst [vmem:[%s172 + $0x80] sm:$0xff] %v300
      %333 = vst [vmem:[%s172 + $0x88] sm:$0xff] %v301
      %334 = vst [vmem:[%s172 + $0x90] sm:$0xff] %v302
      %335 = vst [vmem:[%s172 + $0x98] sm:$0xff] %v303
      %336 = vst [vmem:[%s172 + $0xa0] sm:$0xff] %v304
      %337 = vst [vmem:[%s172 + $0xa8] sm:$0xff] %v305
      %338 = vst [vmem:[%s172 + $0xb0] sm:$0xff] %v306
      %339 = vst [vmem:[%s172 + $0xb8] sm:$0xff] %v307
      %340 = vst [vmem:[%s172 + $0xc0] sm:$0xff] %v308
      %341 = vst [vmem:[%s172 + $0xc8] sm:$0xff] %v309
      %342 = vst [vmem:[%s172 + $0xd0] sm:$0xff] %v310
      %343 = vst [vmem:[%s172 + $0xd8] sm:$0xff] %v311
      %344 = vst [vmem:[%s172 + $0xe0] sm:$0xff] %v312
      %345 = vst [vmem:[%s172 + $0xe8] sm:$0xff] %v313
      %346 = vst [vmem:[%s172 + $0xf0] sm:$0xff] %v314
      %347 = vst [vmem:[%s172 + $0xf8] sm:$0xff] %v315
      %s348 = smul.u32 32, %s14
      %p349 = scmp.lt.s32.totalorder %s348, 63
      %s350 = scalar_select %p349, %s348, 63
      %s351 = smul.addr %s350, 8
      %s352 = scalar_lea.vmem %s3, %s351
      // Predicated region
      $region33: #{bottleneck_forward.11} parent=31 // pred_check
        %p353 = pneg %p100
      $region34: #{bottleneck_forward.11} parent=31 // pred_check_branch
        %355 = sbr.rel (%p353) target = $region36
      $region35: #{bottleneck_forward.11} parent=31 // pred_region
        %s356 = smul.u32 32, %s14
      $region36: #{bottleneck_forward.11} parent=31 // pred_fallthru
        _
    $region32: #{bottleneck_forward.11} parent=5 // pred_fallthru
      _
    %p357 = scmp.le.s32.totalorder 2, %s9
    // Predicated region
    $region37: #{bottleneck_forward.11} parent=5 // pred_check
      %p358 = pneg %p357
    $region38: #{bottleneck_forward.11} parent=5 // pred_check_branch
      %360 = sbr.rel (%p358) target = $region40
    $region39: #{bottleneck_forward.11} parent=5 // pred_region
      %s361 = ssub.s32 %s9, 2
      // Predicated region
      $region41: #{bottleneck_forward.11} parent=39 // pred_check
        %p362 = pneg %p106
      $region42: #{bottleneck_forward.11} parent=39 // pred_check_branch
        %364 = sbr.rel (%p362) target = $region44
      $region43: #{bottleneck_forward.11} parent=39 // pred_region
        %s365 = smul.u32 32, %s15
        %p366 = scmp.lt.s32.totalorder %s365, 63
        %s367 = scalar_select %p366, %s365, 63
        %s368 = smul.addr %s367, 8
        %s369 = scalar_lea.vmem %s3, %s368
      $region44: #{bottleneck_forward.11} parent=39 // pred_fallthru
        _
    $region40: #{bottleneck_forward.11} parent=5 // pred_fallthru
      _
  $region6: #{bottleneck_forward.11} parent=0 // loop_footer
    %s13 = sadd.s32 1, %s9
  $region7: #{bottleneck_forward.11} parent=0 // loop_footer_branch
    %8 = sbr.rel target = $region3
  $region8: #{bottleneck_forward.11} parent=0 // loop_exit
    _

// kernel: bottleneck_forward.10
$region0: #{bottleneck_forward.10}
  #allocation0 [shape = 'u32[]', space=smem, size = 0x4, offset = 0x4, fixed_abs, tag = 'smem constant byte address 0x4 - core index']
  #allocation1 [shape = 'u32[144,128]{1,0:T(1,128)}', space=vmem, size = 0x12000, scoped, tag = 'internal scratch']
  %s0 = inlined_call_operand.vmem [shape: bf16[512,128], index: 0, kind: input, shape index: {}]
  %s1 = inlined_call_operand.vmem [shape: bf16[128,128], index: 1, kind: input, shape index: {}]
  %s2 = inlined_call_operand.vmem [shape: f32[512,128], index: 2, kind: output, shape index: {0}]
  %s3 = inlined_call_operand.vmem [shape: f32[2,2,128], index: 3, kind: output, shape index: {1}]
  %4 = xla_tuple %s2, %s3
  %s5 = sld [smem:[#allocation0]]
  $region49: #{bottleneck_forward.10} parent=0
    _
  %s7 = ssub.s32 1, %s5
  %s8 = scalar_select 0, %s7, %s5
  loop: start=0, step=1, limit=4
  $region2: #{bottleneck_forward.10} parent=0 // loop_pre_header
    _
  $region3: #{bottleneck_forward.10} parent=0 // loop_header
    %s10 = sphi 0, %s14
    %p11 = scmp.ge.s32.totalorder %s10, 4
    %s20 = sphi 0, %s22
    %s23 = sphi 0, %s20
    %s24 = sphi 0, %s23
    %s40 = sphi 0, %s24
    %s44 = sphi 0, %s44
    %s46 = sphi 0, %s44
    %s47 = sphi 0, %s46
    %s61 = sphi 0, %s47
    %s67 = sphi 0, %s69
    %s70 = sphi 0, %s67
    %s71 = sphi 0, %s70
    %s87 = sphi 0, %s71
    %s93 = sphi 0, %s95
    %s96 = sphi 0, %s93
    %s97 = sphi 0, %s96
    %s113 = sphi 0, %s97
  $region4: #{bottleneck_forward.10} parent=0 // loop_header_branch
    %13 = sbr.rel (%p11) target = $region8
  $region5: #{bottleneck_forward.10} parent=0 // loop_body
    %s15 = ssub.s32 %s10, 1
    %s16 = ssub.s32 %s10, 2
    %s17 = sadd.s32 %s10, 1
    %s18 = ssub.s32 %s10, %s17
    %p19 = scmp.eq.s32.totalorder %s18, 0
    %s21 = sadd.s32 %s20, 1
    %s22 = scalar_select %p19, %s20, %s21
    %p25 = pneg %p19
    %p26 = scmp.eq.s32.totalorder %s10, 1
    %p27 = por %p25, %p26
    %p28 = scmp.ne.s32.totalorder %s20, %s23
    %p29 = scmp.eq.s32.totalorder %s10, 0
    %p30 = por %p28, %p29
    %p31 = scmp.ne.s32.totalorder %s20, %s23
    %p32 = scmp.eq.s32.totalorder %s15, 1
    %p33 = por %p31, %p32
    %p34 = scmp.ne.s32.totalorder %s23, %s24
    %p35 = scmp.eq.s32.totalorder %s15, 0
    %p36 = por %p34, %p35
    %p37 = scmp.ne.s32.totalorder %s23, %s24
    %p38 = scmp.eq.s32.totalorder %s16, 1
    %p39 = por %p37, %p38
    %p41 = scmp.ne.s32.totalorder %s24, %s40
    %p42 = scmp.eq.s32.totalorder %s16, 0
    %p43 = por %p41, %p42
    %s45 = sadd.s32 %s44, 1
    %p48 = scmp.eq.s32.totalorder %s10, 1
    %p49 = scmp.ne.s32.totalorder %s44, %s46
    %p50 = scmp.eq.s32.totalorder %s10, 0
    %p51 = por %p49, %p50
    %p52 = scmp.ne.s32.totalorder %s44, %s46
    %p53 = scmp.eq.s32.totalorder %s15, 1
    %p54 = por %p52, %p53
    %p55 = scmp.ne.s32.totalorder %s46, %s47
    %p56 = scmp.eq.s32.totalorder %s15, 0
    %p57 = por %p55, %p56
    %p58 = scmp.ne.s32.totalorder %s46, %s47
    %p59 = scmp.eq.s32.totalorder %s16, 1
    %p60 = por %p58, %p59
    %p62 = scmp.ne.s32.totalorder %s47, %s61
    %p63 = scmp.eq.s32.totalorder %s16, 0
    %p64 = por %p62, %p63
    %s65 = ssub.s32 %s10, %s17
    %p66 = scmp.eq.s32.totalorder %s65, 0
    %s68 = sadd.s32 %s67, 1
    %s69 = scalar_select %p66, %s67, %s68
    %p72 = pneg %p66
    %p73 = scmp.eq.s32.totalorder %s10, 1
    %p74 = por %p72, %p73
    %p75 = scmp.ne.s32.totalorder %s67, %s70
    %p76 = scmp.eq.s32.totalorder %s10, 0
    %p77 = por %p75, %p76
    %p78 = scmp.ne.s32.totalorder %s67, %s70
    %p79 = scmp.eq.s32.totalorder %s15, 1
    %p80 = por %p78, %p79
    %p81 = scmp.ne.s32.totalorder %s70, %s71
    %p82 = scmp.eq.s32.totalorder %s15, 0
    %p83 = por %p81, %p82
    %p84 = scmp.ne.s32.totalorder %s70, %s71
    %p85 = scmp.eq.s32.totalorder %s16, 1
    %p86 = por %p84, %p85
    %p88 = scmp.ne.s32.totalorder %s71, %s87
    %p89 = scmp.eq.s32.totalorder %s16, 0
    %p90 = por %p88, %p89
    %s91 = ssub.s32 %s10, %s17
    %p92 = scmp.eq.s32.totalorder %s91, 0
    %s94 = sadd.s32 %s93, 1
    %s95 = scalar_select %p92, %s93, %s94
    %p98 = pneg %p92
    %p99 = scmp.eq.s32.totalorder %s10, 1
    %p100 = por %p98, %p99
    %p101 = scmp.ne.s32.totalorder %s93, %s96
    %p102 = scmp.eq.s32.totalorder %s10, 0
    %p103 = por %p101, %p102
    %p104 = scmp.ne.s32.totalorder %s93, %s96
    %p105 = scmp.eq.s32.totalorder %s15, 1
    %p106 = por %p104, %p105
    %p107 = scmp.ne.s32.totalorder %s96, %s97
    %p108 = scmp.eq.s32.totalorder %s15, 0
    %p109 = por %p107, %p108
    %p110 = scmp.ne.s32.totalorder %s96, %s97
    %p111 = scmp.eq.s32.totalorder %s16, 1
    %p112 = por %p110, %p111
    %p114 = scmp.ne.s32.totalorder %s97, %s113
    %p115 = scmp.eq.s32.totalorder %s16, 0
    %p116 = por %p114, %p115
    %p117 = scmp.le.s32.totalorder 1, %s10
    %p118 = scmp.lt.s32.totalorder %s10, 3
    %p119 = pnand %p117, %p118
    %p120 = pneg %p119
    // Predicated region
    $region9: #{bottleneck_forward.10} parent=5 // pred_check
      _
    $region10: #{bottleneck_forward.10} parent=5 // pred_check_branch
      %122 = sbr.rel (%p119) target = $region12
    $region11: #{bottleneck_forward.10} parent=5 // pred_region
      %s123 = ssub.s32 %s10, 1
      // Predicated region
      $region13: #{bottleneck_forward.10} parent=11 // pred_check
        %p124 = pneg %p57
      $region14: #{bottleneck_forward.10} parent=11 // pred_check_branch
        %126 = sbr.rel (%p124) target = $region16
      $region15: #{bottleneck_forward.10} parent=11 // pred_region
        _
      $region16: #{bottleneck_forward.10} parent=11 // pred_fallthru
        _
    $region12: #{bottleneck_forward.10} parent=5 // pred_fallthru
      _
    %p127 = scmp.lt.s32.totalorder %s10, 2
    // Predicated region
    $region17: #{bottleneck_forward.10} parent=5 // pred_check
      %p128 = pneg %p127
    $region18: #{bottleneck_forward.10} parent=5 // pred_check_branch
      %130 = sbr.rel (%p128) target = $region20
    $region19: #{bottleneck_forward.10} parent=5 // pred_region
      // Predicated region
      $region21: #{bottleneck_forward.10} parent=19 // pred_check
        %p131 = pneg %p30
      $region22: #{bottleneck_forward.10} parent=19 // pred_check_branch
        %133 = sbr.rel (%p131) target = $region24
      $region23: #{bottleneck_forward.10} parent=19 // pred_region
        %s134 = smul.u32 32, %s10
        %p135 = scmp.lt.s32.totalorder %s134, 63
        %s136 = scalar_select %p135, %s134, 63
        %s137 = smul.addr %s136, 4
        %s138 = scalar_lea.vmem %s0, %s137
        %s139 = smul.u32 32, %s10
      $region24: #{bottleneck_forward.10} parent=19 // pred_fallthru
        _
    $region20: #{bottleneck_forward.10} parent=5 // pred_fallthru
      _
    %p140 = scmp.le.s32.totalorder 1, %s10
    %p141 = scmp.lt.s32.totalorder %s10, 3
    %p142 = pnand %p140, %p141
    %p143 = pneg %p142
    // Predicated region
    $region25: #{bottleneck_forward.10} parent=5 // pred_check
      _
    $region26: #{bottleneck_forward.10} parent=5 // pred_check_branch
      %145 = sbr.rel (%p142) target = $region28
    $region27: #{bottleneck_forward.10} parent=5 // pred_region
      %s146 = ssub.s32 %s10, 1
      %s147 = smul.u32 32, %s15
      %p148 = scmp.lt.s32.totalorder %s147, 63
      %s149 = scalar_select %p148, %s147, 63
      %s150 = smul.addr %s149, 4
      %s151 = scalar_lea.vmem %s0, %s150
      %p152 = pneg %p36
      %p153 = pneg %p33
      %p154 = pneg %p57
      %p155 = pneg %p54
      %p156 = pneg %p83
      %p157 = pneg %p80
      %s158 = smul.u32 32, %s15
      %p159 = scmp.lt.s32.totalorder %s158, 63
      %s160 = scalar_select %p159, %s158, 63
      %s161 = smul.addr %s160, 8
      %s162 = scalar_lea.vmem %s2, %s161
      %p163 = pneg %p109
      %p164 = pneg %p106
      %p165 = scmp.lt.s32.totalorder %s15, 1
      %s166 = scalar_select %p165, %s15, 1
      %s167 = smul.addr %s166, 2
      %s168 = scalar_lea.vmem %s3, %s167
      %s169 = smul.u32 32, %s15
      %p170 = scmp.lt.s32.totalorder %s169, 63
      %s171 = scalar_select %p170, %s169, 63
      %s172 = smul.addr %s171, 4
      %s173 = scalar_lea.vmem %s0, %s172
      %s174 = smul.u32 32, %s15
      %s175 = smul.u32 32, %s15
      %p176 = scmp.lt.s32.totalorder %s175, 63
      %s177 = scalar_select %p176, %s175, 63
      %s178 = smul.addr %s177, 8
      %s179 = scalar_lea.vmem %s2, %s178
      %s180 = smul.u32 32, %s15
      %p181 = scmp.lt.s32.totalorder %s15, 1
      %s182 = scalar_select %p181, %s15, 1
      %s183 = smul.addr %s182, 2
      %s184 = scalar_lea.vmem %s3, %s183
      %v186 = vld [vmem:[%s173] sm:$0xf]
      %v187 = vld [vmem:[%s173 + $0x4] sm:$0xf]
      %v188 = vld [vmem:[%s173 + $0x8] sm:$0xf]
      %v189 = vld [vmem:[%s173 + $0xc] sm:$0xf]
      %v190 = vld [vmem:[%s173 + $0x10] sm:$0xf]
      %v191 = vld [vmem:[%s173 + $0x14] sm:$0xf]
      %v192 = vld [vmem:[%s173 + $0x18] sm:$0xf]
      %v193 = vld [vmem:[%s173 + $0x1c] sm:$0xf]
      %v194 = vld [vmem:[%s173 + $0x20] sm:$0xf]
      %v195 = vld [vmem:[%s173 + $0x24] sm:$0xf]
      %v196 = vld [vmem:[%s173 + $0x28] sm:$0xf]
      %v197 = vld [vmem:[%s173 + $0x2c] sm:$0xf]
      %v198 = vld [vmem:[%s173 + $0x30] sm:$0xf]
      %v199 = vld [vmem:[%s173 + $0x34] sm:$0xf]
      %v200 = vld [vmem:[%s173 + $0x38] sm:$0xf]
      %v201 = vld [vmem:[%s173 + $0x3c] sm:$0xf]
      %v202 = vld [vmem:[%s173 + $0x40] sm:$0xf]
      %v203 = vld [vmem:[%s173 + $0x44] sm:$0xf]
      %v204 = vld [vmem:[%s173 + $0x48] sm:$0xf]
      %v205 = vld [vmem:[%s173 + $0x4c] sm:$0xf]
      %v206 = vld [vmem:[%s173 + $0x50] sm:$0xf]
      %v207 = vld [vmem:[%s173 + $0x54] sm:$0xf]
      %v208 = vld [vmem:[%s173 + $0x58] sm:$0xf]
      %v209 = vld [vmem:[%s173 + $0x5c] sm:$0xf]
      %v210 = vld [vmem:[%s173 + $0x60] sm:$0xf]
      %v211 = vld [vmem:[%s173 + $0x64] sm:$0xf]
      %v212 = vld [vmem:[%s173 + $0x68] sm:$0xf]
      %v213 = vld [vmem:[%s173 + $0x6c] sm:$0xf]
      %v214 = vld [vmem:[%s173 + $0x70] sm:$0xf]
      %v215 = vld [vmem:[%s173 + $0x74] sm:$0xf]
      %v216 = vld [vmem:[%s173 + $0x78] sm:$0xf]
      %v217 = vld [vmem:[%s173 + $0x7c] sm:$0xf]
      %v218 = vld [vmem:[%s1] sm:$0xf]
      %v219 = vld [vmem:[%s1 + $0x4] sm:$0xf]
      %v220 = vld [vmem:[%s1 + $0x8] sm:$0xf]
      %v221 = vld [vmem:[%s1 + $0xc] sm:$0xf]
      %v222 = vld [vmem:[%s1 + $0x10] sm:$0xf]
      %v223 = vld [vmem:[%s1 + $0x14] sm:$0xf]
      %v224 = vld [vmem:[%s1 + $0x18] sm:$0xf]
      %v225 = vld [vmem:[%s1 + $0x1c] sm:$0xf]
      %v226 = vld [vmem:[%s1 + $0x20] sm:$0xf]
      %v227 = vld [vmem:[%s1 + $0x24] sm:$0xf]
      %v228 = vld [vmem:[%s1 + $0x28] sm:$0xf]
      %v229 = vld [vmem:[%s1 + $0x2c] sm:$0xf]
      %v230 = vld [vmem:[%s1 + $0x30] sm:$0xf]
      %v231 = vld [vmem:[%s1 + $0x34] sm:$0xf]
      %v232 = vld [vmem:[%s1 + $0x38] sm:$0xf]
      %v233 = vld [vmem:[%s1 + $0x3c] sm:$0xf]
      %v266 = vunpack.c.l.b16 %v186
      %v267 = vunpack.c.l.b16 %v187
      %v268 = vunpack.c.l.b16 %v188
      %v269 = vunpack.c.l.b16 %v189
      %v270 = vunpack.c.l.b16 %v190
      %v271 = vunpack.c.l.b16 %v191
      %v272 = vunpack.c.l.b16 %v192
      %v273 = vunpack.c.l.b16 %v193
      %v274 = vunpack.c.l.b16 %v194
      %v275 = vunpack.c.l.b16 %v195
      %v276 = vunpack.c.l.b16 %v196
      %v277 = vunpack.c.l.b16 %v197
      %v278 = vunpack.c.l.b16 %v198
      %v279 = vunpack.c.l.b16 %v199
      %v280 = vunpack.c.l.b16 %v200
      %v281 = vunpack.c.l.b16 %v201
      %v282 = vunpack.c.l.b16 %v202
      %v283 = vunpack.c.l.b16 %v203
      %v284 = vunpack.c.l.b16 %v204
      %v285 = vunpack.c.l.b16 %v205
      %v286 = vunpack.c.l.b16 %v206
      %v287 = vunpack.c.l.b16 %v207
      %v288 = vunpack.c.l.b16 %v208
      %v289 = vunpack.c.l.b16 %v209
      %v290 = vunpack.c.l.b16 %v210
      %v291 = vunpack.c.l.b16 %v211
      %v292 = vunpack.c.l.b16 %v212
      %v293 = vunpack.c.l.b16 %v213
      %v294 = vunpack.c.l.b16 %v214
      %v295 = vunpack.c.l.b16 %v215
      %v296 = vunpack.c.l.b16 %v216
      %v297 = vunpack.c.l.b16 %v217
      %v298 = vpack.c.b16 %v267, %v266
      %v299 = vpack.c.b16 %v269, %v268
      %v300 = vpack.c.b16 %v271, %v270
      %v301 = vpack.c.b16 %v273, %v272
      %v302 = vpack.c.b16 %v275, %v274
      %v303 = vpack.c.b16 %v277, %v276
      %v304 = vpack.c.b16 %v279, %v278
      %v305 = vpack.c.b16 %v281, %v280
      %v306 = vpack.c.b16 %v283, %v282
      %v307 = vpack.c.b16 %v285, %v284
      %v308 = vpack.c.b16 %v287, %v286
      %v309 = vpack.c.b16 %v289, %v288
      %v310 = vpack.c.b16 %v291, %v290
      %v311 = vpack.c.b16 %v293, %v292
      %v312 = vpack.c.b16 %v295, %v294
      %v313 = vpack.c.b16 %v297, %v296
      %v346 = vunpack.c.l.b16 %v218
      %v347 = vunpack.c.l.b16 %v219
      %v348 = vunpack.c.l.b16 %v220
      %v349 = vunpack.c.l.b16 %v221
      %v350 = vunpack.c.l.b16 %v222
      %v351 = vunpack.c.l.b16 %v223
      %v352 = vunpack.c.l.b16 %v224
      %v353 = vunpack.c.l.b16 %v225
      %v354 = vunpack.c.l.b16 %v226
      %v355 = vunpack.c.l.b16 %v227
      %v356 = vunpack.c.l.b16 %v228
      %v357 = vunpack.c.l.b16 %v229
      %v358 = vunpack.c.l.b16 %v230
      %v359 = vunpack.c.l.b16 %v231
      %v360 = vunpack.c.l.b16 %v232
      %v361 = vunpack.c.l.b16 %v233
      %v362 = vpack.c.b16 %v347, %v346
      %v363 = vpack.c.b16 %v349, %v348
      %v364 = vpack.c.b16 %v351, %v350
      %v365 = vpack.c.b16 %v353, %v352
      %v366 = vpack.c.b16 %v355, %v354
      %v367 = vpack.c.b16 %v357, %v356
      %v368 = vpack.c.b16 %v359, %v358
      %v369 = vpack.c.b16 %v361, %v360
      %378 = vmatprep.subr.bf16.mxu0 0
      %379 = vmatpush1.bf16.msra.mxu0 %v362
      %380 = vmatprep.subr.bf16.mxu0 0
      %381 = vmatpush1.bf16.msra.mxu0 %v363
      %382 = vmatprep.subr.bf16.mxu0 0
      %383 = vmatpush1.bf16.msra.mxu0 %v364
      %384 = vmatprep.subr.bf16.mxu0 0
      %385 = vmatpush1.bf16.msra.mxu0 %v365
      %386 = vmatprep.subr.bf16.mxu0 0
      %387 = vmatpush1.bf16.msra.mxu0 %v366
      %388 = vmatprep.subr.bf16.mxu0 0
      %389 = vmatpush1.bf16.msra.mxu0 %v367
      %390 = vmatprep.subr.bf16.mxu0 0
      %391 = vmatpush1.bf16.msra.mxu0 %v368
      %392 = vmatprep.subr.bf16.mxu0 0
      %393 = vmatpush1.bf16.msra.mxu0 %v369
      %394 = vmatprep.subr.bf16.mxu0 0
      %395 = vmatpush1.bf16.msra.mxu0 0
      %396 = vmatprep.subr.bf16.mxu0 0
      %397 = vmatpush1.bf16.msra.mxu0 0
      %398 = vmatprep.subr.bf16.mxu0 0
      %399 = vmatpush1.bf16.msra.mxu0 0
      %400 = vmatprep.subr.bf16.mxu0 0
      %401 = vmatpush1.bf16.msra.mxu0 0
      %402 = vmatprep.subr.bf16.mxu0 0
      %403 = vmatpush1.bf16.msra.mxu0 0
      %404 = vmatprep.subr.bf16.mxu0 0
      %405 = vmatpush1.bf16.msra.mxu0 0
      %406 = vmatprep.subr.bf16.mxu0 0
      %407 = vmatpush1.bf16.msra.mxu0 0
      %408 = vmatprep.subr.bf16.mxu0 0
      %409 = vmatpush1.bf16.msra.mxu0 0
      %410 = vmatprep.mubr.bf16.mxu0 0
      %411 = vmatmul.mubr.bf16.gmra.mrb[0].mxu0 %v298
      %v412 = vpop.f32.mrb[0].mxu0
      %v413 = vadd.f32 0.0, %v412
      %v414 = vpop.f32.mrb[0].mxu0
      %v415 = vpop.f32.mrb[0].mxu0
      %v416 = vadd.f32 0.0, %v415
      %v417 = vpop.f32.mrb[0].mxu0
      %418 = vmatprep.mubr.bf16.mxu0 0
      %419 = vmatmul.mubr.bf16.gmra.mrb[0].mxu0 %v299
      %v420 = vpop.f32.mrb[0].mxu0
      %v421 = vadd.f32 0.0, %v420
      %v422 = vpop.f32.mrb[0].mxu0
      %v423 = vpop.f32.mrb[0].mxu0
      %v424 = vadd.f32 0.0, %v423
      %v425 = vpop.f32.mrb[0].mxu0
      %426 = vmatprep.mubr.bf16.mxu0 0
      %427 = vmatmul.mubr.bf16.gmra.mrb[0].mxu0 %v300
      %v428 = vpop.f32.mrb[0].mxu0
      %v429 = vadd.f32 0.0, %v428
      %v430 = vpop.f32.mrb[0].mxu0
      %v431 = vpop.f32.mrb[0].mxu0
      %v432 = vadd.f32 0.0, %v431
      %v433 = vpop.f32.mrb[0].mxu0
      %434 = vmatprep.mubr.bf16.mxu0 0
      %435 = vmatmul.mubr.bf16.gmra.mrb[0].mxu0 %v301
      %v436 = vpop.f32.mrb[0].mxu0
      %v437 = vadd.f32 0.0, %v436
      %v438 = vpop.f32.mrb[0].mxu0
      %v439 = vpop.f32.mrb[0].mxu0
      %v440 = vadd.f32 0.0, %v439
      %v441 = vpop.f32.mrb[0].mxu0
      %442 = vmatprep.mubr.bf16.mxu0 0
      %443 = vmatmul.mubr.bf16.gmra.mrb[0].mxu0 %v302
      %v444 = vpop.f32.mrb[0].mxu0
      %v445 = vadd.f32 0.0, %v444
      %v446 = vpop.f32.mrb[0].mxu0
      %v447 = vpop.f32.mrb[0].mxu0
      %v448 = vadd.f32 0.0, %v447
      %v449 = vpop.f32.mrb[0].mxu0
      %450 = vmatprep.mubr.bf16.mxu0 0
      %451 = vmatmul.mubr.bf16.gmra.mrb[0].mxu0 %v303
      %v452 = vpop.f32.mrb[0].mxu0
      %v453 = vadd.f32 0.0, %v452
      %v454 = vpop.f32.mrb[0].mxu0
      %v455 = vpop.f32.mrb[0].mxu0
      %v456 = vadd.f32 0.0, %v455
      %v457 = vpop.f32.mrb[0].mxu0
      %458 = vmatprep.mubr.bf16.mxu0 0
      %459 = vmatmul.mubr.bf16.gmra.mrb[0].mxu0 %v304
      %v460 = vpop.f32.mrb[0].mxu0
      %v461 = vadd.f32 0.0, %v460
      %v462 = vpop.f32.mrb[0].mxu0
      %v463 = vpop.f32.mrb[0].mxu0
      %v464 = vadd.f32 0.0, %v463
      %v465 = vpop.f32.mrb[0].mxu0
      %466 = vmatprep.mubr.bf16.mxu0 0
      %467 = vmatmul.mubr.bf16.gmra.mrb[0].mxu0 %v305
      %v468 = vpop.f32.mrb[0].mxu0
      %v469 = vadd.f32 0.0, %v468
      %v470 = vpop.f32.mrb[0].mxu0
      %v471 = vpop.f32.mrb[0].mxu0
      %v472 = vadd.f32 0.0, %v471
      %v473 = vpop.f32.mrb[0].mxu0
      %474 = vmatprep.mubr.bf16.mxu0 0
      %475 = vmatmul.mubr.bf16.gmra.mrb[0].mxu0 %v306
      %v476 = vpop.f32.mrb[0].mxu0
      %v477 = vadd.f32 0.0, %v476
      %v478 = vpop.f32.mrb[0].mxu0
      %v479 = vpop.f32.mrb[0].mxu0
      %v480 = vadd.f32 0.0, %v479
      %v481 = vpop.f32.mrb[0].mxu0
      %482 = vmatprep.mubr.bf16.mxu0 0
      %483 = vmatmul.mubr.bf16.gmra.mrb[0].mxu0 %v307
      %v484 = vpop.f32.mrb[0].mxu0
      %v485 = vadd.f32 0.0, %v484
      %v486 = vpop.f32.mrb[0].mxu0
      %v487 = vpop.f32.mrb[0].mxu0
      %v488 = vadd.f32 0.0, %v487
      %v489 = vpop.f32.mrb[0].mxu0
      %490 = vmatprep.mubr.bf16.mxu0 0
      %491 = vmatmul.mubr.bf16.gmra.mrb[0].mxu0 %v308
      %v492 = vpop.f32.mrb[0].mxu0
      %v493 = vadd.f32 0.0, %v492
      %v494 = vpop.f32.mrb[0].mxu0
      %v495 = vpop.f32.mrb[0].mxu0
      %v496 = vadd.f32 0.0, %v495
      %v497 = vpop.f32.mrb[0].mxu0
      %498 = vmatprep.mubr.bf16.mxu0 0
      %499 = vmatmul.mubr.bf16.gmra.mrb[0].mxu0 %v309
      %v500 = vpop.f32.mrb[0].mxu0
      %v501 = vadd.f32 0.0, %v500
      %v502 = vpop.f32.mrb[0].mxu0
      %v503 = vpop.f32.mrb[0].mxu0
      %v504 = vadd.f32 0.0, %v503
      %v505 = vpop.f32.mrb[0].mxu0
      %506 = vmatprep.mubr.bf16.mxu0 0
      %507 = vmatmul.mubr.bf16.gmra.mrb[0].mxu0 %v310
      %v508 = vpop.f32.mrb[0].mxu0
      %v509 = vadd.f32 0.0, %v508
      %v510 = vpop.f32.mrb[0].mxu0
      %v511 = vpop.f32.mrb[0].mxu0
      %v512 = vadd.f32 0.0, %v511
      %v513 = vpop.f32.mrb[0].mxu0
      %514 = vmatprep.mubr.bf16.mxu0 0
      %515 = vmatmul.mubr.bf16.gmra.mrb[0].mxu0 %v311
      %v516 = vpop.f32.mrb[0].mxu0
      %v517 = vadd.f32 0.0, %v516
      %v518 = vpop.f32.mrb[0].mxu0
      %v519 = vpop.f32.mrb[0].mxu0
      %v520 = vadd.f32 0.0, %v519
      %v521 = vpop.f32.mrb[0].mxu0
      %522 = vmatprep.mubr.bf16.mxu0 0
      %523 = vmatmul.mubr.bf16.gmra.mrb[0].mxu0 %v312
      %v524 = vpop.f32.mrb[0].mxu0
      %v525 = vadd.f32 0.0, %v524
      %v526 = vpop.f32.mrb[0].mxu0
      %v527 = vpop.f32.mrb[0].mxu0
      %v528 = vadd.f32 0.0, %v527
      %v529 = vpop.f32.mrb[0].mxu0
      %530 = vmatprep.mubr.bf16.mxu0 0
      %531 = vmatmul.mubr.bf16.gmra.mrb[0].mxu0 %v313
      %v532 = vpop.f32.mrb[0].mxu0
      %v533 = vadd.f32 0.0, %v532
      %v534 = vpop.f32.mrb[0].mxu0
      %v535 = vpop.f32.mrb[0].mxu0
      %v536 = vadd.f32 0.0, %v535
      %v537 = vpop.f32.mrb[0].mxu0
      %538 = vdwg.mxu0
      %539 = vst [vmem:[%s179] sm:$0xff] %v413
      %540 = vst [vmem:[%s179 + $0x8] sm:$0xff] %v416
      %541 = vst [vmem:[%s179 + $0x10] sm:$0xff] %v421
      %542 = vst [vmem:[%s179 + $0x18] sm:$0xff] %v424
      %543 = vst [vmem:[%s179 + $0x20] sm:$0xff] %v429
      %544 = vst [vmem:[%s179 + $0x28] sm:$0xff] %v432
      %545 = vst [vmem:[%s179 + $0x30] sm:$0xff] %v437
      %546 = vst [vmem:[%s179 + $0x38] sm:$0xff] %v440
      %547 = vst [vmem:[%s179 + $0x40] sm:$0xff] %v445
      %548 = vst [vmem:[%s179 + $0x48] sm:$0xff] %v448
      %549 = vst [vmem:[%s179 + $0x50] sm:$0xff] %v453
      %550 = vst [vmem:[%s179 + $0x58] sm:$0xff] %v456
      %551 = vst [vmem:[%s179 + $0x60] sm:$0xff] %v461
      %552 = vst [vmem:[%s179 + $0x68] sm:$0xff] %v464
      %553 = vst [vmem:[%s179 + $0x70] sm:$0xff] %v469
      %554 = vst [vmem:[%s179 + $0x78] sm:$0xff] %v472
      %555 = vst [vmem:[%s179 + $0x80] sm:$0xff] %v477
      %556 = vst [vmem:[%s179 + $0x88] sm:$0xff] %v480
      %557 = vst [vmem:[%s179 + $0x90] sm:$0xff] %v485
      %558 = vst [vmem:[%s179 + $0x98] sm:$0xff] %v488
      %559 = vst [vmem:[%s179 + $0xa0] sm:$0xff] %v493
      %560 = vst [vmem:[%s179 + $0xa8] sm:$0xff] %v496
      %561 = vst [vmem:[%s179 + $0xb0] sm:$0xff] %v501
      %562 = vst [vmem:[%s179 + $0xb8] sm:$0xff] %v504
      %563 = vst [vmem:[%s179 + $0xc0] sm:$0xff] %v509
      %564 = vst [vmem:[%s179 + $0xc8] sm:$0xff] %v512
      %565 = vst [vmem:[%s179 + $0xd0] sm:$0xff] %v517
      %566 = vst [vmem:[%s179 + $0xd8] sm:$0xff] %v520
      %567 = vst [vmem:[%s179 + $0xe0] sm:$0xff] %v525
      %568 = vst [vmem:[%s179 + $0xe8] sm:$0xff] %v528
      %569 = vst [vmem:[%s179 + $0xf0] sm:$0xff] %v533
      %570 = vst [vmem:[%s179 + $0xf8] sm:$0xff] %v536
      %v571 = vadd.f32 %v413, %v416
      %v572 = vadd.f32 %v571, %v421
      %v573 = vadd.f32 %v572, %v424
      %v574 = vadd.f32 %v573, %v429
      %v575 = vadd.f32 %v574, %v432
      %v576 = vadd.f32 %v575, %v437
      %v577 = vadd.f32 %v576, %v440
      %v578 = vadd.f32 %v577, %v445
      %v579 = vadd.f32 %v578, %v448
      %v580 = vadd.f32 %v579, %v453
      %v581 = vadd.f32 %v580, %v456
      %v582 = vadd.f32 %v581, %v461
      %v583 = vadd.f32 %v582, %v464
      %v584 = vadd.f32 %v583, %v469
      %v585 = vadd.f32 %v584, %v472
      %v586 = vadd.f32 %v585, %v477
      %v587 = vadd.f32 %v586, %v480
      %v588 = vadd.f32 %v587, %v485
      %v589 = vadd.f32 %v588, %v488
      %v590 = vadd.f32 %v589, %v493
      %v591 = vadd.f32 %v590, %v496
      %v592 = vadd.f32 %v591, %v501
      %v593 = vadd.f32 %v592, %v504
      %v594 = vadd.f32 %v593, %v509
      %v595 = vadd.f32 %v594, %v512
      %v596 = vadd.f32 %v595, %v517
      %v597 = vadd.f32 %v596, %v520
      %v598 = vadd.f32 %v597, %v525
      %v599 = vadd.f32 %v598, %v528
      %v600 = vadd.f32 %v599, %v533
      %v601 = vadd.f32 %v600, %v536
      %v602 = vrot.slane %v601, 4
      %v603 = vadd.f32 %v601, %v602
      %v604 = vrot.slane %v603, 2
      %v605 = vadd.f32 %v603, %v604
      %v606 = vrot.slane %v605, 1
      %v607 = vadd.f32 %v605, %v606
      %v608 = vmul.f32 %v413, %v413
      %v609 = vmul.f32 %v416, %v416
      %v610 = vmul.f32 %v421, %v421
      %v611 = vmul.f32 %v424, %v424
      %v612 = vmul.f32 %v429, %v429
      %v613 = vmul.f32 %v432, %v432
      %v614 = vmul.f32 %v437, %v437
      %v615 = vmul.f32 %v440, %v440
      %v616 = vmul.f32 %v445, %v445
      %v617 = vmul.f32 %v448, %v448
      %v618 = vmul.f32 %v453, %v453
      %v619 = vmul.f32 %v456, %v456
      %v620 = vmul.f32 %v461, %v461
      %v621 = vmul.f32 %v464, %v464
      %v622 = vmul.f32 %v469, %v469
      %v623 = vmul.f32 %v472, %v472
      %v624 = vmul.f32 %v477, %v477
      %v625 = vmul.f32 %v480, %v480
      %v626 = vmul.f32 %v485, %v485
      %v627 = vmul.f32 %v488, %v488
      %v628 = vmul.f32 %v493, %v493
      %v629 = vmul.f32 %v496, %v496
      %v630 = vmul.f32 %v501, %v501
      %v631 = vmul.f32 %v504, %v504
      %v632 = vmul.f32 %v509, %v509
      %v633 = vmul.f32 %v512, %v512
      %v634 = vmul.f32 %v517, %v517
      %v635 = vmul.f32 %v520, %v520
      %v636 = vmul.f32 %v525, %v525
      %v637 = vmul.f32 %v528, %v528
      %v638 = vmul.f32 %v533, %v533
      %v639 = vmul.f32 %v536, %v536
      %v640 = vadd.f32 %v608, %v609
      %v641 = vadd.f32 %v640, %v610
      %v642 = vadd.f32 %v641, %v611
      %v643 = vadd.f32 %v642, %v612
      %v644 = vadd.f32 %v643, %v613
      %v645 = vadd.f32 %v644, %v614
      %v646 = vadd.f32 %v645, %v615
      %v647 = vadd.f32 %v646, %v616
      %v648 = vadd.f32 %v647, %v617
      %v649 = vadd.f32 %v648, %v618
      %v650 = vadd.f32 %v649, %v619
      %v651 = vadd.f32 %v650, %v620
      %v652 = vadd.f32 %v651, %v621
      %v653 = vadd.f32 %v652, %v622
      %v654 = vadd.f32 %v653, %v623
      %v655 = vadd.f32 %v654, %v624
      %v656 = vadd.f32 %v655, %v625
      %v657 = vadd.f32 %v656, %v626
      %v658 = vadd.f32 %v657, %v627
      %v659 = vadd.f32 %v658, %v628
      %v660 = vadd.f32 %v659, %v629
      %v661 = vadd.f32 %v660, %v630
      %v662 = vadd.f32 %v661, %v631
      %v663 = vadd.f32 %v662, %v632
      %v664 = vadd.f32 %v663, %v633
      %v665 = vadd.f32 %v664, %v634
      %v666 = vadd.f32 %v665, %v635
      %v667 = vadd.f32 %v666, %v636
      %v668 = vadd.f32 %v667, %v637
      %v669 = vadd.f32 %v668, %v638
      %v670 = vadd.f32 %v669, %v639
      %v671 = vrot.slane %v670, 4
      %v672 = vadd.f32 %v670, %v671
      %v673 = vrot.slane %v672, 2
      %v674 = vadd.f32 %v672, %v673
      %v675 = vrot.slane %v674, 1
      %v676 = vadd.f32 %v674, %v675
      %vm677 = vcmask 1040384
      %v678 = vsel %vm677, %v607, %v676
      %679 = vst [vmem:[%s184] sm:$0x3] %v678
      %s680 = smul.u32 32, %s15
      %p681 = scmp.lt.s32.totalorder %s680, 63
      %s682 = scalar_select %p681, %s680, 63
      %s683 = smul.addr %s682, 8
      %s684 = scalar_lea.vmem %s2, %s683
      %p685 = scmp.lt.s32.totalorder %s15, 1
      %s686 = scalar_select %p685, %s15, 1
      %s687 = smul.addr %s686, 2
      %s688 = scalar_lea.vmem %s3, %s687
      // Predicated region
      $region29: #{bottleneck_forward.10} parent=27 // pred_check
        %p689 = pneg %p80
      $region30: #{bottleneck_forward.10} parent=27 // pred_check_branch
        %691 = sbr.rel (%p689) target = $region32
      $region31: #{bottleneck_forward.10} parent=27 // pred_region
        %s692 = smul.u32 32, %s15
      $region32: #{bottleneck_forward.10} parent=27 // pred_fallthru
        _
      // Predicated region
      $region33: #{bottleneck_forward.10} parent=27 // pred_check
        %p693 = pneg %p106
      $region34: #{bottleneck_forward.10} parent=27 // pred_check_branch
        %695 = sbr.rel (%p693) target = $region36
      $region35: #{bottleneck_forward.10} parent=27 // pred_region
        _
      $region36: #{bottleneck_forward.10} parent=27 // pred_fallthru
        _
    $region28: #{bottleneck_forward.10} parent=5 // pred_fallthru
      _
    %p696 = scmp.le.s32.totalorder 2, %s10
    // Predicated region
    $region37: #{bottleneck_forward.10} parent=5 // pred_check
      %p697 = pneg %p696
    $region38: #{bottleneck_forward.10} parent=5 // pred_check_branch
      %699 = sbr.rel (%p697) target = $region40
    $region39: #{bottleneck_forward.10} parent=5 // pred_region
      %s700 = ssub.s32 %s10, 2
      // Predicated region
      $region41: #{bottleneck_forward.10} parent=39 // pred_check
        %p701 = pneg %p86
      $region42: #{bottleneck_forward.10} parent=39 // pred_check_branch
        %703 = sbr.rel (%p701) target = $region44
      $region43: #{bottleneck_forward.10} parent=39 // pred_region
        %s704 = smul.u32 32, %s16
        %p705 = scmp.lt.s32.totalorder %s704, 63
        %s706 = scalar_select %p705, %s704, 63
        %s707 = smul.addr %s706, 8
        %s708 = scalar_lea.vmem %s2, %s707
      $region44: #{bottleneck_forward.10} parent=39 // pred_fallthru
        _
      // Predicated region
      $region45: #{bottleneck_forward.10} parent=39 // pred_check
        %p709 = pneg %p112
      $region46: #{bottleneck_forward.10} parent=39 // pred_check_branch
        %711 = sbr.rel (%p709) target = $region48
      $region47: #{bottleneck_forward.10} parent=39 // pred_region
        %p712 = scmp.lt.s32.totalorder %s16, 1
        %s713 = scalar_select %p712, %s16, 1
        %s714 = smul.addr %s713, 2
        %s715 = scalar_lea.vmem %s3, %s714
      $region48: #{bottleneck_forward.10} parent=39 // pred_fallthru
        _
    $region40: #{bottleneck_forward.10} parent=5 // pred_fallthru
      _
  $region6: #{bottleneck_forward.10} parent=0 // loop_footer
    %s14 = sadd.s32 1, %s10
  $region7: #{bottleneck_forward.10} parent=0 // loop_footer_branch
    %9 = sbr.rel target = $region3
  $region8: #{bottleneck_forward.10} parent=0 // loop_exit
    _

// kernel: bottleneck_forward.17
$region0: #{bottleneck_forward.17}
  #allocation0 [shape = 'u32[]', space=smem, size = 0x4, offset = 0x4, fixed_abs, tag = 'smem constant byte address 0x4 - core index']
  #allocation1 [shape = 'u32[144,128]{1,0:T(1,128)}', space=vmem, size = 0x12000, scoped, tag = 'internal scratch']
  %s0 = inlined_call_operand.vmem [shape: f32[512,128], index: 0, kind: input, shape index: {}]
  %s1 = inlined_call_operand.vmem [shape: f32[1,128], index: 1, kind: input, shape index: {}]
  %s2 = inlined_call_operand.vmem [shape: f32[1,128], index: 2, kind: input, shape index: {}]
  %s3 = inlined_call_operand.vmem [shape: bf16[512,128], index: 3, kind: output, shape index: {}]
  %s4 = sld [smem:[#allocation0]]
  $region45: #{bottleneck_forward.17} parent=0
    _
  %s6 = ssub.s32 1, %s4
  %s7 = scalar_select 0, %s6, %s4
  loop: start=0, step=1, limit=4
  $region2: #{bottleneck_forward.17} parent=0 // loop_pre_header
    _
  $region3: #{bottleneck_forward.17} parent=0 // loop_header
    %s9 = sphi 0, %s13
    %p10 = scmp.ge.s32.totalorder %s9, 4
    %s19 = sphi 0, %s21
    %s22 = sphi 0, %s19
    %s23 = sphi 0, %s22
    %s39 = sphi 0, %s23
    %s43 = sphi 0, %s43
    %s45 = sphi 0, %s43
    %s46 = sphi 0, %s45
    %s60 = sphi 0, %s46
    %s64 = sphi 0, %s64
    %s66 = sphi 0, %s64
    %s67 = sphi 0, %s66
    %s81 = sphi 0, %s67
    %s87 = sphi 0, %s89
    %s90 = sphi 0, %s87
    %s91 = sphi 0, %s90
    %s107 = sphi 0, %s91
  $region4: #{bottleneck_forward.17} parent=0 // loop_header_branch
    %12 = sbr.rel (%p10) target = $region8
  $region5: #{bottleneck_forward.17} parent=0 // loop_body
    %s14 = ssub.s32 %s9, 1
    %s15 = ssub.s32 %s9, 2
    %s16 = sadd.s32 %s9, 1
    %s17 = ssub.s32 %s9, %s16
    %p18 = scmp.eq.s32.totalorder %s17, 0
    %s20 = sadd.s32 %s19, 1
    %s21 = scalar_select %p18, %s19, %s20
    %p24 = pneg %p18
    %p25 = scmp.eq.s32.totalorder %s9, 1
    %p26 = por %p24, %p25
    %p27 = scmp.ne.s32.totalorder %s19, %s22
    %p28 = scmp.eq.s32.totalorder %s9, 0
    %p29 = por %p27, %p28
    %p30 = scmp.ne.s32.totalorder %s19, %s22
    %p31 = scmp.eq.s32.totalorder %s14, 1
    %p32 = por %p30, %p31
    %p33 = scmp.ne.s32.totalorder %s22, %s23
    %p34 = scmp.eq.s32.totalorder %s14, 0
    %p35 = por %p33, %p34
    %p36 = scmp.ne.s32.totalorder %s22, %s23
    %p37 = scmp.eq.s32.totalorder %s15, 1
    %p38 = por %p36, %p37
    %p40 = scmp.ne.s32.totalorder %s23, %s39
    %p41 = scmp.eq.s32.totalorder %s15, 0
    %p42 = por %p40, %p41
    %s44 = sadd.s32 %s43, 1
    %p47 = scmp.eq.s32.totalorder %s9, 1
    %p48 = scmp.ne.s32.totalorder %s43, %s45
    %p49 = scmp.eq.s32.totalorder %s9, 0
    %p50 = por %p48, %p49
    %p51 = scmp.ne.s32.totalorder %s43, %s45
    %p52 = scmp.eq.s32.totalorder %s14, 1
    %p53 = por %p51, %p52
    %p54 = scmp.ne.s32.totalorder %s45, %s46
    %p55 = scmp.eq.s32.totalorder %s14, 0
    %p56 = por %p54, %p55
    %p57 = scmp.ne.s32.totalorder %s45, %s46
    %p58 = scmp.eq.s32.totalorder %s15, 1
    %p59 = por %p57, %p58
    %p61 = scmp.ne.s32.totalorder %s46, %s60
    %p62 = scmp.eq.s32.totalorder %s15, 0
    %p63 = por %p61, %p62
    %s65 = sadd.s32 %s64, 1
    %p68 = scmp.eq.s32.totalorder %s9, 1
    %p69 = scmp.ne.s32.totalorder %s64, %s66
    %p70 = scmp.eq.s32.totalorder %s9, 0
    %p71 = por %p69, %p70
    %p72 = scmp.ne.s32.totalorder %s64, %s66
    %p73 = scmp.eq.s32.totalorder %s14, 1
    %p74 = por %p72, %p73
    %p75 = scmp.ne.s32.totalorder %s66, %s67
    %p76 = scmp.eq.s32.totalorder %s14, 0
    %p77 = por %p75, %p76
    %p78 = scmp.ne.s32.totalorder %s66, %s67
    %p79 = scmp.eq.s32.totalorder %s15, 1
    %p80 = por %p78, %p79
    %p82 = scmp.ne.s32.totalorder %s67, %s81
    %p83 = scmp.eq.s32.totalorder %s15, 0
    %p84 = por %p82, %p83
    %s85 = ssub.s32 %s9, %s16
    %p86 = scmp.eq.s32.totalorder %s85, 0
    %s88 = sadd.s32 %s87, 1
    %s89 = scalar_select %p86, %s87, %s88
    %p92 = pneg %p86
    %p93 = scmp.eq.s32.totalorder %s9, 1
    %p94 = por %p92, %p93
    %p95 = scmp.ne.s32.totalorder %s87, %s90
    %p96 = scmp.eq.s32.totalorder %s9, 0
    %p97 = por %p95, %p96
    %p98 = scmp.ne.s32.totalorder %s87, %s90
    %p99 = scmp.eq.s32.totalorder %s14, 1
    %p100 = por %p98, %p99
    %p101 = scmp.ne.s32.totalorder %s90, %s91
    %p102 = scmp.eq.s32.totalorder %s14, 0
    %p103 = por %p101, %p102
    %p104 = scmp.ne.s32.totalorder %s90, %s91
    %p105 = scmp.eq.s32.totalorder %s15, 1
    %p106 = por %p104, %p105
    %p108 = scmp.ne.s32.totalorder %s91, %s107
    %p109 = scmp.eq.s32.totalorder %s15, 0
    %p110 = por %p108, %p109
    %p111 = scmp.le.s32.totalorder 1, %s9
    %p112 = scmp.lt.s32.totalorder %s9, 3
    %p113 = pnand %p111, %p112
    %p114 = pneg %p113
    // Predicated region
    $region9: #{bottleneck_forward.17} parent=5 // pred_check
      _
    $region10: #{bottleneck_forward.17} parent=5 // pred_check_branch
      %116 = sbr.rel (%p113) target = $region12
    $region11: #{bottleneck_forward.17} parent=5 // pred_region
      %s117 = ssub.s32 %s9, 1
      // Predicated region
      $region13: #{bottleneck_forward.17} parent=11 // pred_check
        %p118 = pneg %p56
      $region14: #{bottleneck_forward.17} parent=11 // pred_check_branch
        %120 = sbr.rel (%p118) target = $region16
      $region15: #{bottleneck_forward.17} parent=11 // pred_region
        _
      $region16: #{bottleneck_forward.17} parent=11 // pred_fallthru
        _
      // Predicated region
      $region17: #{bottleneck_forward.17} parent=11 // pred_check
        %p121 = pneg %p77
      $region18: #{bottleneck_forward.17} parent=11 // pred_check_branch
        %123 = sbr.rel (%p121) target = $region20
      $region19: #{bottleneck_forward.17} parent=11 // pred_region
        _
      $region20: #{bottleneck_forward.17} parent=11 // pred_fallthru
        _
    $region12: #{bottleneck_forward.17} parent=5 // pred_fallthru
      _
    %p124 = scmp.lt.s32.totalorder %s9, 2
    // Predicated region
    $region21: #{bottleneck_forward.17} parent=5 // pred_check
      %p125 = pneg %p124
    $region22: #{bottleneck_forward.17} parent=5 // pred_check_branch
      %127 = sbr.rel (%p125) target = $region24
    $region23: #{bottleneck_forward.17} parent=5 // pred_region
      // Predicated region
      $region25: #{bottleneck_forward.17} parent=23 // pred_check
        %p128 = pneg %p29
      $region26: #{bottleneck_forward.17} parent=23 // pred_check_branch
        %130 = sbr.rel (%p128) target = $region28
      $region27: #{bottleneck_forward.17} parent=23 // pred_region
        %s131 = smul.u32 32, %s9
        %p132 = scmp.lt.s32.totalorder %s131, 63
        %s133 = scalar_select %p132, %s131, 63
        %s134 = smul.addr %s133, 8
        %s135 = scalar_lea.vmem %s0, %s134
        %s136 = smul.u32 32, %s9
      $region28: #{bottleneck_forward.17} parent=23 // pred_fallthru
        _
    $region24: #{bottleneck_forward.17} parent=5 // pred_fallthru
      _
    %p137 = scmp.le.s32.totalorder 1, %s9
    %p138 = scmp.lt.s32.totalorder %s9, 3
    %p139 = pnand %p137, %p138
    %p140 = pneg %p139
    // Predicated region
    $region29: #{bottleneck_forward.17} parent=5 // pred_check
      _
    $region30: #{bottleneck_forward.17} parent=5 // pred_check_branch
      %142 = sbr.rel (%p139) target = $region32
    $region31: #{bottleneck_forward.17} parent=5 // pred_region
      %s143 = ssub.s32 %s9, 1
      %s144 = smul.u32 32, %s14
      %p145 = scmp.lt.s32.totalorder %s144, 63
      %s146 = scalar_select %p145, %s144, 63
      %s147 = smul.addr %s146, 8
      %s148 = scalar_lea.vmem %s0, %s147
      %p149 = pneg %p35
      %p150 = pneg %p32
      %p151 = pneg %p56
      %p152 = pneg %p53
      %p153 = pneg %p77
      %p154 = pneg %p74
      %p155 = pneg %p103
      %p156 = pneg %p100
      %s157 = smul.u32 32, %s14
      %p158 = scmp.lt.s32.totalorder %s157, 63
      %s159 = scalar_select %p158, %s157, 63
      %s160 = smul.addr %s159, 4
      %s161 = scalar_lea.vmem %s3, %s160
      %s162 = smul.u32 32, %s14
      %p163 = scmp.lt.s32.totalorder %s162, 63
      %s164 = scalar_select %p163, %s162, 63
      %s165 = smul.addr %s164, 8
      %s166 = scalar_lea.vmem %s0, %s165
      %s167 = smul.u32 32, %s14
      %s168 = smul.u32 32, %s14
      %p169 = scmp.lt.s32.totalorder %s168, 63
      %s170 = scalar_select %p169, %s168, 63
      %s171 = smul.addr %s170, 4
      %s172 = scalar_lea.vmem %s3, %s171
      %s173 = smul.u32 32, %s14
      %v174 = vld [vmem:[%s166] sm:$0xff]
      %v175 = vld [vmem:[%s166 + $0x8] sm:$0xff]
      %v176 = vld [vmem:[%s166 + $0x10] sm:$0xff]
      %v177 = vld [vmem:[%s166 + $0x18] sm:$0xff]
      %v178 = vld [vmem:[%s166 + $0x20] sm:$0xff]
      %v179 = vld [vmem:[%s166 + $0x28] sm:$0xff]
      %v180 = vld [vmem:[%s166 + $0x30] sm:$0xff]
      %v181 = vld [vmem:[%s166 + $0x38] sm:$0xff]
      %v182 = vld [vmem:[%s166 + $0x40] sm:$0xff]
      %v183 = vld [vmem:[%s166 + $0x48] sm:$0xff]
      %v184 = vld [vmem:[%s166 + $0x50] sm:$0xff]
      %v185 = vld [vmem:[%s166 + $0x58] sm:$0xff]
      %v186 = vld [vmem:[%s166 + $0x60] sm:$0xff]
      %v187 = vld [vmem:[%s166 + $0x68] sm:$0xff]
      %v188 = vld [vmem:[%s166 + $0x70] sm:$0xff]
      %v189 = vld [vmem:[%s166 + $0x78] sm:$0xff]
      %v190 = vld [vmem:[%s166 + $0x80] sm:$0xff]
      %v191 = vld [vmem:[%s166 + $0x88] sm:$0xff]
      %v192 = vld [vmem:[%s166 + $0x90] sm:$0xff]
      %v193 = vld [vmem:[%s166 + $0x98] sm:$0xff]
      %v194 = vld [vmem:[%s166 + $0xa0] sm:$0xff]
      %v195 = vld [vmem:[%s166 + $0xa8] sm:$0xff]
      %v196 = vld [vmem:[%s166 + $0xb0] sm:$0xff]
      %v197 = vld [vmem:[%s166 + $0xb8] sm:$0xff]
      %v198 = vld [vmem:[%s166 + $0xc0] sm:$0xff]
      %v199 = vld [vmem:[%s166 + $0xc8] sm:$0xff]
      %v200 = vld [vmem:[%s166 + $0xd0] sm:$0xff]
      %v201 = vld [vmem:[%s166 + $0xd8] sm:$0xff]
      %v202 = vld [vmem:[%s166 + $0xe0] sm:$0xff]
      %v203 = vld [vmem:[%s166 + $0xe8] sm:$0xff]
      %v204 = vld [vmem:[%s166 + $0xf0] sm:$0xff]
      %v205 = vld [vmem:[%s166 + $0xf8] sm:$0xff]
      %v206 = vld [vmem:[%s1] sm:$0x1]
      %v208 = vlaneseq
      %v209 = vshrl.u32 %v208, 7
      %v210 = vsub.s32 0, %v209
      %v211 = vrot.slane %v206, %v210
      %v213 = vmul.f32 %v174, %v211
      %v214 = vmul.f32 %v175, %v211
      %v215 = vmul.f32 %v176, %v211
      %v216 = vmul.f32 %v177, %v211
      %v217 = vmul.f32 %v178, %v211
      %v218 = vmul.f32 %v179, %v211
      %v219 = vmul.f32 %v180, %v211
      %v220 = vmul.f32 %v181, %v211
      %v221 = vmul.f32 %v182, %v211
      %v222 = vmul.f32 %v183, %v211
      %v223 = vmul.f32 %v184, %v211
      %v224 = vmul.f32 %v185, %v211
      %v225 = vmul.f32 %v186, %v211
      %v226 = vmul.f32 %v187, %v211
      %v227 = vmul.f32 %v188, %v211
      %v228 = vmul.f32 %v189, %v211
      %v229 = vmul.f32 %v190, %v211
      %v230 = vmul.f32 %v191, %v211
      %v231 = vmul.f32 %v192, %v211
      %v232 = vmul.f32 %v193, %v211
      %v233 = vmul.f32 %v194, %v211
      %v234 = vmul.f32 %v195, %v211
      %v235 = vmul.f32 %v196, %v211
      %v236 = vmul.f32 %v197, %v211
      %v237 = vmul.f32 %v198, %v211
      %v238 = vmul.f32 %v199, %v211
      %v239 = vmul.f32 %v200, %v211
      %v240 = vmul.f32 %v201, %v211
      %v241 = vmul.f32 %v202, %v211
      %v242 = vmul.f32 %v203, %v211
      %v243 = vmul.f32 %v204, %v211
      %v244 = vmul.f32 %v205, %v211
      %v245 = vld [vmem:[%s2] sm:$0x1]
      %v247 = vlaneseq
      %v248 = vshrl.u32 %v247, 7
      %v249 = vsub.s32 0, %v248
      %v250 = vrot.slane %v245, %v249
      %v252 = vadd.f32 %v213, %v250
      %v253 = vadd.f32 %v214, %v250
      %v254 = vadd.f32 %v215, %v250
      %v255 = vadd.f32 %v216, %v250
      %v256 = vadd.f32 %v217, %v250
      %v257 = vadd.f32 %v218, %v250
      %v258 = vadd.f32 %v219, %v250
      %v259 = vadd.f32 %v220, %v250
      %v260 = vadd.f32 %v221, %v250
      %v261 = vadd.f32 %v222, %v250
      %v262 = vadd.f32 %v223, %v250
      %v263 = vadd.f32 %v224, %v250
      %v264 = vadd.f32 %v225, %v250
      %v265 = vadd.f32 %v226, %v250
      %v266 = vadd.f32 %v227, %v250
      %v267 = vadd.f32 %v228, %v250
      %v268 = vadd.f32 %v229, %v250
      %v269 = vadd.f32 %v230, %v250
      %v270 = vadd.f32 %v231, %v250
      %v271 = vadd.f32 %v232, %v250
      %v272 = vadd.f32 %v233, %v250
      %v273 = vadd.f32 %v234, %v250
      %v274 = vadd.f32 %v235, %v250
      %v275 = vadd.f32 %v236, %v250
      %v276 = vadd.f32 %v237, %v250
      %v277 = vadd.f32 %v238, %v250
      %v278 = vadd.f32 %v239, %v250
      %v279 = vadd.f32 %v240, %v250
      %v280 = vadd.f32 %v241, %v250
      %v281 = vadd.f32 %v242, %v250
      %v282 = vadd.f32 %v243, %v250
      %v283 = vadd.f32 %v244, %v250
      %v284 = vmax.f32 %v252, 0.0
      %v285 = vmax.f32 %v253, 0.0
      %v286 = vmax.f32 %v254, 0.0
      %v287 = vmax.f32 %v255, 0.0
      %v288 = vmax.f32 %v256, 0.0
      %v289 = vmax.f32 %v257, 0.0
      %v290 = vmax.f32 %v258, 0.0
      %v291 = vmax.f32 %v259, 0.0
      %v292 = vmax.f32 %v260, 0.0
      %v293 = vmax.f32 %v261, 0.0
      %v294 = vmax.f32 %v262, 0.0
      %v295 = vmax.f32 %v263, 0.0
      %v296 = vmax.f32 %v264, 0.0
      %v297 = vmax.f32 %v265, 0.0
      %v298 = vmax.f32 %v266, 0.0
      %v299 = vmax.f32 %v267, 0.0
      %v300 = vmax.f32 %v268, 0.0
      %v301 = vmax.f32 %v269, 0.0
      %v302 = vmax.f32 %v270, 0.0
      %v303 = vmax.f32 %v271, 0.0
      %v304 = vmax.f32 %v272, 0.0
      %v305 = vmax.f32 %v273, 0.0
      %v306 = vmax.f32 %v274, 0.0
      %v307 = vmax.f32 %v275, 0.0
      %v308 = vmax.f32 %v276, 0.0
      %v309 = vmax.f32 %v277, 0.0
      %v310 = vmax.f32 %v278, 0.0
      %v311 = vmax.f32 %v279, 0.0
      %v312 = vmax.f32 %v280, 0.0
      %v313 = vmax.f32 %v281, 0.0
      %v314 = vmax.f32 %v282, 0.0
      %v315 = vmax.f32 %v283, 0.0
      %v316 = vpack.c.bf16 %v285, %v284
      %v317 = vpack.c.bf16 %v287, %v286
      %v318 = vpack.c.bf16 %v289, %v288
      %v319 = vpack.c.bf16 %v291, %v290
      %v320 = vpack.c.bf16 %v293, %v292
      %v321 = vpack.c.bf16 %v295, %v294
      %v322 = vpack.c.bf16 %v297, %v296
      %v323 = vpack.c.bf16 %v299, %v298
      %v324 = vpack.c.bf16 %v301, %v300
      %v325 = vpack.c.bf16 %v303, %v302
      %v326 = vpack.c.bf16 %v305, %v304
      %v327 = vpack.c.bf16 %v307, %v306
      %v328 = vpack.c.bf16 %v309, %v308
      %v329 = vpack.c.bf16 %v311, %v310
      %v330 = vpack.c.bf16 %v313, %v312
      %v331 = vpack.c.bf16 %v315, %v314
      %v348 = vunpack.c.l.b16 %v316
      %v349 = vunpack.c.h.b16 %v316
      %v350 = vunpack.c.l.b16 %v317
      %v351 = vunpack.c.h.b16 %v317
      %v352 = vunpack.c.l.b16 %v318
      %v353 = vunpack.c.h.b16 %v318
      %v354 = vunpack.c.l.b16 %v319
      %v355 = vunpack.c.h.b16 %v319
      %v356 = vunpack.c.l.b16 %v320
      %v357 = vunpack.c.h.b16 %v320
      %v358 = vunpack.c.l.b16 %v321
      %v359 = vunpack.c.h.b16 %v321
      %v360 = vunpack.c.l.b16 %v322
      %v361 = vunpack.c.h.b16 %v322
      %v362 = vunpack.c.l.b16 %v323
      %v363 = vunpack.c.h.b16 %v323
      %v364 = vunpack.c.l.b16 %v324
      %v365 = vunpack.c.h.b16 %v324
      %v366 = vunpack.c.l.b16 %v325
      %v367 = vunpack.c.h.b16 %v325
      %v368 = vunpack.c.l.b16 %v326
      %v369 = vunpack.c.h.b16 %v326
      %v370 = vunpack.c.l.b16 %v327
      %v371 = vunpack.c.h.b16 %v327
      %v372 = vunpack.c.l.b16 %v328
      %v373 = vunpack.c.h.b16 %v328
      %v374 = vunpack.c.l.b16 %v329
      %v375 = vunpack.c.h.b16 %v329
      %v376 = vunpack.c.l.b16 %v330
      %v377 = vunpack.c.h.b16 %v330
      %v378 = vunpack.c.l.b16 %v331
      %v379 = vunpack.c.h.b16 %v331
      %v380 = vpack.c.b16 %v348, %v348
      %v381 = vpack.c.b16 %v349, %v349
      %v382 = vpack.c.b16 %v350, %v350
      %v383 = vpack.c.b16 %v351, %v351
      %v384 = vpack.c.b16 %v352, %v352
      %v385 = vpack.c.b16 %v353, %v353
      %v386 = vpack.c.b16 %v354, %v354
      %v387 = vpack.c.b16 %v355, %v355
      %v388 = vpack.c.b16 %v356, %v356
      %v389 = vpack.c.b16 %v357, %v357
      %v390 = vpack.c.b16 %v358, %v358
      %v391 = vpack.c.b16 %v359, %v359
      %v392 = vpack.c.b16 %v360, %v360
      %v393 = vpack.c.b16 %v361, %v361
      %v394 = vpack.c.b16 %v362, %v362
      %v395 = vpack.c.b16 %v363, %v363
      %v396 = vpack.c.b16 %v364, %v364
      %v397 = vpack.c.b16 %v365, %v365
      %v398 = vpack.c.b16 %v366, %v366
      %v399 = vpack.c.b16 %v367, %v367
      %v400 = vpack.c.b16 %v368, %v368
      %v401 = vpack.c.b16 %v369, %v369
      %v402 = vpack.c.b16 %v370, %v370
      %v403 = vpack.c.b16 %v371, %v371
      %v404 = vpack.c.b16 %v372, %v372
      %v405 = vpack.c.b16 %v373, %v373
      %v406 = vpack.c.b16 %v374, %v374
      %v407 = vpack.c.b16 %v375, %v375
      %v408 = vpack.c.b16 %v376, %v376
      %v409 = vpack.c.b16 %v377, %v377
      %v410 = vpack.c.b16 %v378, %v378
      %v411 = vpack.c.b16 %v379, %v379
      %444 = vst [vmem:[%s172] sm:$0xf] %v380
      %445 = vst [vmem:[%s172 + $0x4] sm:$0xf] %v381
      %446 = vst [vmem:[%s172 + $0x8] sm:$0xf] %v382
      %447 = vst [vmem:[%s172 + $0xc] sm:$0xf] %v383
      %448 = vst [vmem:[%s172 + $0x10] sm:$0xf] %v384
      %449 = vst [vmem:[%s172 + $0x14] sm:$0xf] %v385
      %450 = vst [vmem:[%s172 + $0x18] sm:$0xf] %v386
      %451 = vst [vmem:[%s172 + $0x1c] sm:$0xf] %v387
      %452 = vst [vmem:[%s172 + $0x20] sm:$0xf] %v388
      %453 = vst [vmem:[%s172 + $0x24] sm:$0xf] %v389
      %454 = vst [vmem:[%s172 + $0x28] sm:$0xf] %v390
      %455 = vst [vmem:[%s172 + $0x2c] sm:$0xf] %v391
      %456 = vst [vmem:[%s172 + $0x30] sm:$0xf] %v392
      %457 = vst [vmem:[%s172 + $0x34] sm:$0xf] %v393
      %458 = vst [vmem:[%s172 + $0x38] sm:$0xf] %v394
      %459 = vst [vmem:[%s172 + $0x3c] sm:$0xf] %v395
      %460 = vst [vmem:[%s172 + $0x40] sm:$0xf] %v396
      %461 = vst [vmem:[%s172 + $0x44] sm:$0xf] %v397
      %462 = vst [vmem:[%s172 + $0x48] sm:$0xf] %v398
      %463 = vst [vmem:[%s172 + $0x4c] sm:$0xf] %v399
      %464 = vst [vmem:[%s172 + $0x50] sm:$0xf] %v400
      %465 = vst [vmem:[%s172 + $0x54] sm:$0xf] %v401
      %466 = vst [vmem:[%s172 + $0x58] sm:$0xf] %v402
      %467 = vst [vmem:[%s172 + $0x5c] sm:$0xf] %v403
      %468 = vst [vmem:[%s172 + $0x60] sm:$0xf] %v404
      %469 = vst [vmem:[%s172 + $0x64] sm:$0xf] %v405
      %470 = vst [vmem:[%s172 + $0x68] sm:$0xf] %v406
      %471 = vst [vmem:[%s172 + $0x6c] sm:$0xf] %v407
      %472 = vst [vmem:[%s172 + $0x70] sm:$0xf] %v408
      %473 = vst [vmem:[%s172 + $0x74] sm:$0xf] %v409
      %474 = vst [vmem:[%s172 + $0x78] sm:$0xf] %v410
      %475 = vst [vmem:[%s172 + $0x7c] sm:$0xf] %v411
      %s476 = smul.u32 32, %s14
      %p477 = scmp.lt.s32.totalorder %s476, 63
      %s478 = scalar_select %p477, %s476, 63
      %s479 = smul.addr %s478, 4
      %s480 = scalar_lea.vmem %s3, %s479
      // Predicated region
      $region33: #{bottleneck_forward.17} parent=31 // pred_check
        %p481 = pneg %p100
      $region34: #{bottleneck_forward.17} parent=31 // pred_check_branch
        %483 = sbr.rel (%p481) target = $region36
      $region35: #{bottleneck_forward.17} parent=31 // pred_region
        %s484 = smul.u32 32, %s14
      $region36: #{bottleneck_forward.17} parent=31 // pred_fallthru
        _
    $region32: #{bottleneck_forward.17} parent=5 // pred_fallthru
      _
    %p485 = scmp.le.s32.totalorder 2, %s9
    // Predicated region
    $region37: #{bottleneck_forward.17} parent=5 // pred_check
      %p486 = pneg %p485
    $region38: #{bottleneck_forward.17} parent=5 // pred_check_branch
      %488 = sbr.rel (%p486) target = $region40
    $region39: #{bottleneck_forward.17} parent=5 // pred_region
      %s489 = ssub.s32 %s9, 2
      // Predicated region
      $region41: #{bottleneck_forward.17} parent=39 // pred_check
        %p490 = pneg %p106
      $region42: #{bottleneck_forward.17} parent=39 // pred_check_branch
        %492 = sbr.rel (%p490) target = $region44
      $region43: #{bottleneck_forward.17} parent=39 // pred_region
        %s493 = smul.u32 32, %s15
        %p494 = scmp.lt.s32.totalorder %s493, 63
        %s495 = scalar_select %p494, %s493, 63
        %s496 = smul.addr %s495, 4
        %s497 = scalar_lea.vmem %s3, %s496
      $region44: #{bottleneck_forward.17} parent=39 // pred_fallthru
        _
    $region40: #{bottleneck_forward.17} parent=5 // pred_fallthru
      _
  $region6: #{bottleneck_forward.17} parent=0 // loop_footer
    %s13 = sadd.s32 1, %s9
  $region7: #{bottleneck_forward.17} parent=0 // loop_footer_branch
    %8 = sbr.rel target = $region3
  $region8: #{bottleneck_forward.17} parent=0 // loop_exit
    _

// kernel: bottleneck_forward.13
$region0: #{bottleneck_forward.13}
  #allocation0 [shape = 'u32[]', space=smem, size = 0x4, offset = 0x4, fixed_abs, tag = 'smem constant byte address 0x4 - core index']
  #allocation1 [shape = 'u32[144,128]{1,0:T(1,128)}', space=vmem, size = 0x12000, scoped, tag = 'internal scratch']
  %s0 = inlined_call_operand.vmem [shape: f32[512,128], index: 0, kind: input, shape index: {}]
  %s1 = inlined_call_operand.vmem [shape: f32[1,128], index: 1, kind: input, shape index: {}]
  %s2 = inlined_call_operand.vmem [shape: f32[1,128], index: 2, kind: input, shape index: {}]
  %s3 = inlined_call_operand.vmem [shape: f32[512,128], index: 3, kind: input, shape index: {}]
  %s4 = inlined_call_operand.vmem [shape: bf16[512,128], index: 4, kind: output, shape index: {0}]
  %s5 = inlined_call_operand.vmem [shape: bf16[512,128], index: 5, kind: output, shape index: {1}]
  %6 = xla_tuple %s4, %s5
  %s7 = sld [smem:[#allocation0]]
  $region57: #{bottleneck_forward.13} parent=0
    _
  %s9 = ssub.s32 1, %s7
  %s10 = scalar_select 0, %s9, %s7
  loop: start=0, step=1, limit=4
  $region2: #{bottleneck_forward.13} parent=0 // loop_pre_header
    _
  $region3: #{bottleneck_forward.13} parent=0 // loop_header
    %s12 = sphi 0, %s16
    %p13 = scmp.ge.s32.totalorder %s12, 4
    %s22 = sphi 0, %s24
    %s25 = sphi 0, %s22
    %s26 = sphi 0, %s25
    %s42 = sphi 0, %s26
    %s46 = sphi 0, %s46
    %s48 = sphi 0, %s46
    %s49 = sphi 0, %s48
    %s63 = sphi 0, %s49
    %s67 = sphi 0, %s67
    %s69 = sphi 0, %s67
    %s70 = sphi 0, %s69
    %s84 = sphi 0, %s70
    %s90 = sphi 0, %s92
    %s93 = sphi 0, %s90
    %s94 = sphi 0, %s93
    %s110 = sphi 0, %s94
    %s116 = sphi 0, %s118
    %s119 = sphi 0, %s116
    %s120 = sphi 0, %s119
    %s136 = sphi 0, %s120
    %s142 = sphi 0, %s144
    %s145 = sphi 0, %s142
    %s146 = sphi 0, %s145
    %s162 = sphi 0, %s146
  $region4: #{bottleneck_forward.13} parent=0 // loop_header_branch
    %15 = sbr.rel (%p13) target = $region8
  $region5: #{bottleneck_forward.13} parent=0 // loop_body
    %s17 = ssub.s32 %s12, 1
    %s18 = ssub.s32 %s12, 2
    %s19 = sadd.s32 %s12, 1
    %s20 = ssub.s32 %s12, %s19
    %p21 = scmp.eq.s32.totalorder %s20, 0
    %s23 = sadd.s32 %s22, 1
    %s24 = scalar_select %p21, %s22, %s23
    %p27 = pneg %p21
    %p28 = scmp.eq.s32.totalorder %s12, 1
    %p29 = por %p27, %p28
    %p30 = scmp.ne.s32.totalorder %s22, %s25
    %p31 = scmp.eq.s32.totalorder %s12, 0
    %p32 = por %p30, %p31
    %p33 = scmp.ne.s32.totalorder %s22, %s25
    %p34 = scmp.eq.s32.totalorder %s17, 1
    %p35 = por %p33, %p34
    %p36 = scmp.ne.s32.totalorder %s25, %s26
    %p37 = scmp.eq.s32.totalorder %s17, 0
    %p38 = por %p36, %p37
    %p39 = scmp.ne.s32.totalorder %s25, %s26
    %p40 = scmp.eq.s32.totalorder %s18, 1
    %p41 = por %p39, %p40
    %p43 = scmp.ne.s32.totalorder %s26, %s42
    %p44 = scmp.eq.s32.totalorder %s18, 0
    %p45 = por %p43, %p44
    %s47 = sadd.s32 %s46, 1
    %p50 = scmp.eq.s32.totalorder %s12, 1
    %p51 = scmp.ne.s32.totalorder %s46, %s48
    %p52 = scmp.eq.s32.totalorder %s12, 0
    %p53 = por %p51, %p52
    %p54 = scmp.ne.s32.totalorder %s46, %s48
    %p55 = scmp.eq.s32.totalorder %s17, 1
    %p56 = por %p54, %p55
    %p57 = scmp.ne.s32.totalorder %s48, %s49
    %p58 = scmp.eq.s32.totalorder %s17, 0
    %p59 = por %p57, %p58
    %p60 = scmp.ne.s32.totalorder %s48, %s49
    %p61 = scmp.eq.s32.totalorder %s18, 1
    %p62 = por %p60, %p61
    %p64 = scmp.ne.s32.totalorder %s49, %s63
    %p65 = scmp.eq.s32.totalorder %s18, 0
    %p66 = por %p64, %p65
    %s68 = sadd.s32 %s67, 1
    %p71 = scmp.eq.s32.totalorder %s12, 1
    %p72 = scmp.ne.s32.totalorder %s67, %s69
    %p73 = scmp.eq.s32.totalorder %s12, 0
    %p74 = por %p72, %p73
    %p75 = scmp.ne.s32.totalorder %s67, %s69
    %p76 = scmp.eq.s32.totalorder %s17, 1
    %p77 = por %p75, %p76
    %p78 = scmp.ne.s32.totalorder %s69, %s70
    %p79 = scmp.eq.s32.totalorder %s17, 0
    %p80 = por %p78, %p79
    %p81 = scmp.ne.s32.totalorder %s69, %s70
    %p82 = scmp.eq.s32.totalorder %s18, 1
    %p83 = por %p81, %p82
    %p85 = scmp.ne.s32.totalorder %s70, %s84
    %p86 = scmp.eq.s32.totalorder %s18, 0
    %p87 = por %p85, %p86
    %s88 = ssub.s32 %s12, %s19
    %p89 = scmp.eq.s32.totalorder %s88, 0
    %s91 = sadd.s32 %s90, 1
    %s92 = scalar_select %p89, %s90, %s91
    %p95 = pneg %p89
    %p96 = scmp.eq.s32.totalorder %s12, 1
    %p97 = por %p95, %p96
    %p98 = scmp.ne.s32.totalorder %s90, %s93
    %p99 = scmp.eq.s32.totalorder %s12, 0
    %p100 = por %p98, %p99
    %p101 = scmp.ne.s32.totalorder %s90, %s93
    %p102 = scmp.eq.s32.totalorder %s17, 1
    %p103 = por %p101, %p102
    %p104 = scmp.ne.s32.totalorder %s93, %s94
    %p105 = scmp.eq.s32.totalorder %s17, 0
    %p106 = por %p104, %p105
    %p107 = scmp.ne.s32.totalorder %s93, %s94
    %p108 = scmp.eq.s32.totalorder %s18, 1
    %p109 = por %p107, %p108
    %p111 = scmp.ne.s32.totalorder %s94, %s110
    %p112 = scmp.eq.s32.totalorder %s18, 0
    %p113 = por %p111, %p112
    %s114 = ssub.s32 %s12, %s19
    %p115 = scmp.eq.s32.totalorder %s114, 0
    %s117 = sadd.s32 %s116, 1
    %s118 = scalar_select %p115, %s116, %s117
    %p121 = pneg %p115
    %p122 = scmp.eq.s32.totalorder %s12, 1
    %p123 = por %p121, %p122
    %p124 = scmp.ne.s32.totalorder %s116, %s119
    %p125 = scmp.eq.s32.totalorder %s12, 0
    %p126 = por %p124, %p125
    %p127 = scmp.ne.s32.totalorder %s116, %s119
    %p128 = scmp.eq.s32.totalorder %s17, 1
    %p129 = por %p127, %p128
    %p130 = scmp.ne.s32.totalorder %s119, %s120
    %p131 = scmp.eq.s32.totalorder %s17, 0
    %p132 = por %p130, %p131
    %p133 = scmp.ne.s32.totalorder %s119, %s120
    %p134 = scmp.eq.s32.totalorder %s18, 1
    %p135 = por %p133, %p134
    %p137 = scmp.ne.s32.totalorder %s120, %s136
    %p138 = scmp.eq.s32.totalorder %s18, 0
    %p139 = por %p137, %p138
    %s140 = ssub.s32 %s12, %s19
    %p141 = scmp.eq.s32.totalorder %s140, 0
    %s143 = sadd.s32 %s142, 1
    %s144 = scalar_select %p141, %s142, %s143
    %p147 = pneg %p141
    %p148 = scmp.eq.s32.totalorder %s12, 1
    %p149 = por %p147, %p148
    %p150 = scmp.ne.s32.totalorder %s142, %s145
    %p151 = scmp.eq.s32.totalorder %s12, 0
    %p152 = por %p150, %p151
    %p153 = scmp.ne.s32.totalorder %s142, %s145
    %p154 = scmp.eq.s32.totalorder %s17, 1
    %p155 = por %p153, %p154
    %p156 = scmp.ne.s32.totalorder %s145, %s146
    %p157 = scmp.eq.s32.totalorder %s17, 0
    %p158 = por %p156, %p157
    %p159 = scmp.ne.s32.totalorder %s145, %s146
    %p160 = scmp.eq.s32.totalorder %s18, 1
    %p161 = por %p159, %p160
    %p163 = scmp.ne.s32.totalorder %s146, %s162
    %p164 = scmp.eq.s32.totalorder %s18, 0
    %p165 = por %p163, %p164
    %p166 = scmp.le.s32.totalorder 1, %s12
    %p167 = scmp.lt.s32.totalorder %s12, 3
    %p168 = pnand %p166, %p167
    %p169 = pneg %p168
    // Predicated region
    $region9: #{bottleneck_forward.13} parent=5 // pred_check
      _
    $region10: #{bottleneck_forward.13} parent=5 // pred_check_branch
      %171 = sbr.rel (%p168) target = $region12
    $region11: #{bottleneck_forward.13} parent=5 // pred_region
      %s172 = ssub.s32 %s12, 1
      // Predicated region
      $region13: #{bottleneck_forward.13} parent=11 // pred_check
        %p173 = pneg %p59
      $region14: #{bottleneck_forward.13} parent=11 // pred_check_branch
        %175 = sbr.rel (%p173) target = $region16
      $region15: #{bottleneck_forward.13} parent=11 // pred_region
        _
      $region16: #{bottleneck_forward.13} parent=11 // pred_fallthru
        _
      // Predicated region
      $region17: #{bottleneck_forward.13} parent=11 // pred_check
        %p176 = pneg %p80
      $region18: #{bottleneck_forward.13} parent=11 // pred_check_branch
        %178 = sbr.rel (%p176) target = $region20
      $region19: #{bottleneck_forward.13} parent=11 // pred_region
        _
      $region20: #{bottleneck_forward.13} parent=11 // pred_fallthru
        _
    $region12: #{bottleneck_forward.13} parent=5 // pred_fallthru
      _
    %p179 = scmp.lt.s32.totalorder %s12, 2
    // Predicated region
    $region21: #{bottleneck_forward.13} parent=5 // pred_check
      %p180 = pneg %p179
    $region22: #{bottleneck_forward.13} parent=5 // pred_check_branch
      %182 = sbr.rel (%p180) target = $region24
    $region23: #{bottleneck_forward.13} parent=5 // pred_region
      // Predicated region
      $region25: #{bottleneck_forward.13} parent=23 // pred_check
        %p183 = pneg %p32
      $region26: #{bottleneck_forward.13} parent=23 // pred_check_branch
        %185 = sbr.rel (%p183) target = $region28
      $region27: #{bottleneck_forward.13} parent=23 // pred_region
        %s186 = smul.u32 32, %s12
        %p187 = scmp.lt.s32.totalorder %s186, 63
        %s188 = scalar_select %p187, %s186, 63
        %s189 = smul.addr %s188, 8
        %s190 = scalar_lea.vmem %s0, %s189
        %s191 = smul.u32 32, %s12
      $region28: #{bottleneck_forward.13} parent=23 // pred_fallthru
        _
      // Predicated region
      $region29: #{bottleneck_forward.13} parent=23 // pred_check
        %p192 = pneg %p100
      $region30: #{bottleneck_forward.13} parent=23 // pred_check_branch
        %194 = sbr.rel (%p192) target = $region32
      $region31: #{bottleneck_forward.13} parent=23 // pred_region
        %s195 = smul.u32 32, %s12
        %p196 = scmp.lt.s32.totalorder %s195, 63
        %s197 = scalar_select %p196, %s195, 63
        %s198 = smul.addr %s197, 8
        %s199 = scalar_lea.vmem %s3, %s198
        %s200 = smul.u32 32, %s12
      $region32: #{bottleneck_forward.13} parent=23 // pred_fallthru
        _
    $region24: #{bottleneck_forward.13} parent=5 // pred_fallthru
      _
    %p201 = scmp.le.s32.totalorder 1, %s12
    %p202 = scmp.lt.s32.totalorder %s12, 3
    %p203 = pnand %p201, %p202
    %p204 = pneg %p203
    // Predicated region
    $region33: #{bottleneck_forward.13} parent=5 // pred_check
      _
    $region34: #{bottleneck_forward.13} parent=5 // pred_check_branch
      %206 = sbr.rel (%p203) target = $region36
    $region35: #{bottleneck_forward.13} parent=5 // pred_region
      %s207 = ssub.s32 %s12, 1
      %s208 = smul.u32 32, %s17
      %p209 = scmp.lt.s32.totalorder %s208, 63
      %s210 = scalar_select %p209, %s208, 63
      %s211 = smul.addr %s210, 8
      %s212 = scalar_lea.vmem %s0, %s211
      %p213 = pneg %p38
      %p214 = pneg %p35
      %p215 = pneg %p59
      %p216 = pneg %p56
      %p217 = pneg %p80
      %p218 = pneg %p77
      %s219 = smul.u32 32, %s17
      %p220 = scmp.lt.s32.totalorder %s219, 63
      %s221 = scalar_select %p220, %s219, 63
      %s222 = smul.addr %s221, 8
      %s223 = scalar_lea.vmem %s3, %s222
      %p224 = pneg %p106
      %p225 = pneg %p103
      %p226 = pneg %p132
      %p227 = pneg %p129
      %s228 = smul.u32 32, %s17
      %p229 = scmp.lt.s32.totalorder %s228, 63
      %s230 = scalar_select %p229, %s228, 63
      %s231 = smul.addr %s230, 4
      %s232 = scalar_lea.vmem %s4, %s231
      %p233 = pneg %p158
      %p234 = pneg %p155
      %s235 = smul.u32 32, %s17
      %p236 = scmp.lt.s32.totalorder %s235, 63
      %s237 = scalar_select %p236, %s235, 63
      %s238 = smul.addr %s237, 4
      %s239 = scalar_lea.vmem %s5, %s238
      %s240 = smul.u32 32, %s17
      %p241 = scmp.lt.s32.totalorder %s240, 63
      %s242 = scalar_select %p241, %s240, 63
      %s243 = smul.addr %s242, 8
      %s244 = scalar_lea.vmem %s0, %s243
      %s245 = smul.u32 32, %s17
      %s246 = smul.u32 32, %s17
      %p247 = scmp.lt.s32.totalorder %s246, 63
      %s248 = scalar_select %p247, %s246, 63
      %s249 = smul.addr %s248, 8
      %s250 = scalar_lea.vmem %s3, %s249
      %s251 = smul.u32 32, %s17
      %s252 = smul.u32 32, %s17
      %p253 = scmp.lt.s32.totalorder %s252, 63
      %s254 = scalar_select %p253, %s252, 63
      %s255 = smul.addr %s254, 4
      %s256 = scalar_lea.vmem %s4, %s255
      %s257 = smul.u32 32, %s17
      %s258 = smul.u32 32, %s17
      %p259 = scmp.lt.s32.totalorder %s258, 63
      %s260 = scalar_select %p259, %s258, 63
      %s261 = smul.addr %s260, 4
      %s262 = scalar_lea.vmem %s5, %s261
      %s263 = smul.u32 32, %s17
      %v264 = vld [vmem:[%s244] sm:$0xff]
      %v265 = vld [vmem:[%s244 + $0x8] sm:$0xff]
      %v266 = vld [vmem:[%s244 + $0x10] sm:$0xff]
      %v267 = vld [vmem:[%s244 + $0x18] sm:$0xff]
      %v268 = vld [vmem:[%s244 + $0x20] sm:$0xff]
      %v269 = vld [vmem:[%s244 + $0x28] sm:$0xff]
      %v270 = vld [vmem:[%s244 + $0x30] sm:$0xff]
      %v271 = vld [vmem:[%s244 + $0x38] sm:$0xff]
      %v272 = vld [vmem:[%s244 + $0x40] sm:$0xff]
      %v273 = vld [vmem:[%s244 + $0x48] sm:$0xff]
      %v274 = vld [vmem:[%s244 + $0x50] sm:$0xff]
      %v275 = vld [vmem:[%s244 + $0x58] sm:$0xff]
      %v276 = vld [vmem:[%s244 + $0x60] sm:$0xff]
      %v277 = vld [vmem:[%s244 + $0x68] sm:$0xff]
      %v278 = vld [vmem:[%s244 + $0x70] sm:$0xff]
      %v279 = vld [vmem:[%s244 + $0x78] sm:$0xff]
      %v280 = vld [vmem:[%s244 + $0x80] sm:$0xff]
      %v281 = vld [vmem:[%s244 + $0x88] sm:$0xff]
      %v282 = vld [vmem:[%s244 + $0x90] sm:$0xff]
      %v283 = vld [vmem:[%s244 + $0x98] sm:$0xff]
      %v284 = vld [vmem:[%s244 + $0xa0] sm:$0xff]
      %v285 = vld [vmem:[%s244 + $0xa8] sm:$0xff]
      %v286 = vld [vmem:[%s244 + $0xb0] sm:$0xff]
      %v287 = vld [vmem:[%s244 + $0xb8] sm:$0xff]
      %v288 = vld [vmem:[%s244 + $0xc0] sm:$0xff]
      %v289 = vld [vmem:[%s244 + $0xc8] sm:$0xff]
      %v290 = vld [vmem:[%s244 + $0xd0] sm:$0xff]
      %v291 = vld [vmem:[%s244 + $0xd8] sm:$0xff]
      %v292 = vld [vmem:[%s244 + $0xe0] sm:$0xff]
      %v293 = vld [vmem:[%s244 + $0xe8] sm:$0xff]
      %v294 = vld [vmem:[%s244 + $0xf0] sm:$0xff]
      %v295 = vld [vmem:[%s244 + $0xf8] sm:$0xff]
      %v296 = vld [vmem:[%s1] sm:$0x1]
      %v298 = vlaneseq
      %v299 = vshrl.u32 %v298, 7
      %v300 = vsub.s32 0, %v299
      %v301 = vrot.slane %v296, %v300
      %v303 = vmul.f32 %v264, %v301
      %v304 = vmul.f32 %v265, %v301
      %v305 = vmul.f32 %v266, %v301
      %v306 = vmul.f32 %v267, %v301
      %v307 = vmul.f32 %v268, %v301
      %v308 = vmul.f32 %v269, %v301
      %v309 = vmul.f32 %v270, %v301
      %v310 = vmul.f32 %v271, %v301
      %v311 = vmul.f32 %v272, %v301
      %v312 = vmul.f32 %v273, %v301
      %v313 = vmul.f32 %v274, %v301
      %v314 = vmul.f32 %v275, %v301
      %v315 = vmul.f32 %v276, %v301
      %v316 = vmul.f32 %v277, %v301
      %v317 = vmul.f32 %v278, %v301
      %v318 = vmul.f32 %v279, %v301
      %v319 = vmul.f32 %v280, %v301
      %v320 = vmul.f32 %v281, %v301
      %v321 = vmul.f32 %v282, %v301
      %v322 = vmul.f32 %v283, %v301
      %v323 = vmul.f32 %v284, %v301
      %v324 = vmul.f32 %v285, %v301
      %v325 = vmul.f32 %v286, %v301
      %v326 = vmul.f32 %v287, %v301
      %v327 = vmul.f32 %v288, %v301
      %v328 = vmul.f32 %v289, %v301
      %v329 = vmul.f32 %v290, %v301
      %v330 = vmul.f32 %v291, %v301
      %v331 = vmul.f32 %v292, %v301
      %v332 = vmul.f32 %v293, %v301
      %v333 = vmul.f32 %v294, %v301
      %v334 = vmul.f32 %v295, %v301
      %v335 = vld [vmem:[%s2] sm:$0x1]
      %v337 = vlaneseq
      %v338 = vshrl.u32 %v337, 7
      %v339 = vsub.s32 0, %v338
      %v340 = vrot.slane %v335, %v339
      %v342 = vadd.f32 %v303, %v340
      %v343 = vadd.f32 %v304, %v340
      %v344 = vadd.f32 %v305, %v340
      %v345 = vadd.f32 %v306, %v340
      %v346 = vadd.f32 %v307, %v340
      %v347 = vadd.f32 %v308, %v340
      %v348 = vadd.f32 %v309, %v340
      %v349 = vadd.f32 %v310, %v340
      %v350 = vadd.f32 %v311, %v340
      %v351 = vadd.f32 %v312, %v340
      %v352 = vadd.f32 %v313, %v340
      %v353 = vadd.f32 %v314, %v340
      %v354 = vadd.f32 %v315, %v340
      %v355 = vadd.f32 %v316, %v340
      %v356 = vadd.f32 %v317, %v340
      %v357 = vadd.f32 %v318, %v340
      %v358 = vadd.f32 %v319, %v340
      %v359 = vadd.f32 %v320, %v340
      %v360 = vadd.f32 %v321, %v340
      %v361 = vadd.f32 %v322, %v340
      %v362 = vadd.f32 %v323, %v340
      %v363 = vadd.f32 %v324, %v340
      %v364 = vadd.f32 %v325, %v340
      %v365 = vadd.f32 %v326, %v340
      %v366 = vadd.f32 %v327, %v340
      %v367 = vadd.f32 %v328, %v340
      %v368 = vadd.f32 %v329, %v340
      %v369 = vadd.f32 %v330, %v340
      %v370 = vadd.f32 %v331, %v340
      %v371 = vadd.f32 %v332, %v340
      %v372 = vadd.f32 %v333, %v340
      %v373 = vadd.f32 %v334, %v340
      %v374 = vmax.f32 %v342, 0.0
      %v375 = vmax.f32 %v343, 0.0
      %v376 = vmax.f32 %v344, 0.0
      %v377 = vmax.f32 %v345, 0.0
      %v378 = vmax.f32 %v346, 0.0
      %v379 = vmax.f32 %v347, 0.0
      %v380 = vmax.f32 %v348, 0.0
      %v381 = vmax.f32 %v349, 0.0
      %v382 = vmax.f32 %v350, 0.0
      %v383 = vmax.f32 %v351, 0.0
      %v384 = vmax.f32 %v352, 0.0
      %v385 = vmax.f32 %v353, 0.0
      %v386 = vmax.f32 %v354, 0.0
      %v387 = vmax.f32 %v355, 0.0
      %v388 = vmax.f32 %v356, 0.0
      %v389 = vmax.f32 %v357, 0.0
      %v390 = vmax.f32 %v358, 0.0
      %v391 = vmax.f32 %v359, 0.0
      %v392 = vmax.f32 %v360, 0.0
      %v393 = vmax.f32 %v361, 0.0
      %v394 = vmax.f32 %v362, 0.0
      %v395 = vmax.f32 %v363, 0.0
      %v396 = vmax.f32 %v364, 0.0
      %v397 = vmax.f32 %v365, 0.0
      %v398 = vmax.f32 %v366, 0.0
      %v399 = vmax.f32 %v367, 0.0
      %v400 = vmax.f32 %v368, 0.0
      %v401 = vmax.f32 %v369, 0.0
      %v402 = vmax.f32 %v370, 0.0
      %v403 = vmax.f32 %v371, 0.0
      %v404 = vmax.f32 %v372, 0.0
      %v405 = vmax.f32 %v373, 0.0
      %v406 = vpack.c.bf16 %v375, %v374
      %v407 = vpack.c.bf16 %v377, %v376
      %v408 = vpack.c.bf16 %v379, %v378
      %v409 = vpack.c.bf16 %v381, %v380
      %v410 = vpack.c.bf16 %v383, %v382
      %v411 = vpack.c.bf16 %v385, %v384
      %v412 = vpack.c.bf16 %v387, %v386
      %v413 = vpack.c.bf16 %v389, %v388
      %v414 = vpack.c.bf16 %v391, %v390
      %v415 = vpack.c.bf16 %v393, %v392
      %v416 = vpack.c.bf16 %v395, %v394
      %v417 = vpack.c.bf16 %v397, %v396
      %v418 = vpack.c.bf16 %v399, %v398
      %v419 = vpack.c.bf16 %v401, %v400
      %v420 = vpack.c.bf16 %v403, %v402
      %v421 = vpack.c.bf16 %v405, %v404
      %v438 = vunpack.c.l.b16 %v406
      %v439 = vunpack.c.h.b16 %v406
      %v440 = vunpack.c.l.b16 %v407
      %v441 = vunpack.c.h.b16 %v407
      %v442 = vunpack.c.l.b16 %v408
      %v443 = vunpack.c.h.b16 %v408
      %v444 = vunpack.c.l.b16 %v409
      %v445 = vunpack.c.h.b16 %v409
      %v446 = vunpack.c.l.b16 %v410
      %v447 = vunpack.c.h.b16 %v410
      %v448 = vunpack.c.l.b16 %v411
      %v449 = vunpack.c.h.b16 %v411
      %v450 = vunpack.c.l.b16 %v412
      %v451 = vunpack.c.h.b16 %v412
      %v452 = vunpack.c.l.b16 %v413
      %v453 = vunpack.c.h.b16 %v413
      %v454 = vunpack.c.l.b16 %v414
      %v455 = vunpack.c.h.b16 %v414
      %v456 = vunpack.c.l.b16 %v415
      %v457 = vunpack.c.h.b16 %v415
      %v458 = vunpack.c.l.b16 %v416
      %v459 = vunpack.c.h.b16 %v416
      %v460 = vunpack.c.l.b16 %v417
      %v461 = vunpack.c.h.b16 %v417
      %v462 = vunpack.c.l.b16 %v418
      %v463 = vunpack.c.h.b16 %v418
      %v464 = vunpack.c.l.b16 %v419
      %v465 = vunpack.c.h.b16 %v419
      %v466 = vunpack.c.l.b16 %v420
      %v467 = vunpack.c.h.b16 %v420
      %v468 = vunpack.c.l.b16 %v421
      %v469 = vunpack.c.h.b16 %v421
      %v470 = vpack.c.b16 %v438, %v438
      %v471 = vpack.c.b16 %v439, %v439
      %v472 = vpack.c.b16 %v440, %v440
      %v473 = vpack.c.b16 %v441, %v441
      %v474 = vpack.c.b16 %v442, %v442
      %v475 = vpack.c.b16 %v443, %v443
      %v476 = vpack.c.b16 %v444, %v444
      %v477 = vpack.c.b16 %v445, %v445
      %v478 = vpack.c.b16 %v446, %v446
      %v479 = vpack.c.b16 %v447, %v447
      %v480 = vpack.c.b16 %v448, %v448
      %v481 = vpack.c.b16 %v449, %v449
      %v482 = vpack.c.b16 %v450, %v450
      %v483 = vpack.c.b16 %v451, %v451
      %v484 = vpack.c.b16 %v452, %v452
      %v485 = vpack.c.b16 %v453, %v453
      %v486 = vpack.c.b16 %v454, %v454
      %v487 = vpack.c.b16 %v455, %v455
      %v488 = vpack.c.b16 %v456, %v456
      %v489 = vpack.c.b16 %v457, %v457
      %v490 = vpack.c.b16 %v458, %v458
      %v491 = vpack.c.b16 %v459, %v459
      %v492 = vpack.c.b16 %v460, %v460
      %v493 = vpack.c.b16 %v461, %v461
      %v494 = vpack.c.b16 %v462, %v462
      %v495 = vpack.c.b16 %v463, %v463
      %v496 = vpack.c.b16 %v464, %v464
      %v497 = vpack.c.b16 %v465, %v465
      %v498 = vpack.c.b16 %v466, %v466
      %v499 = vpack.c.b16 %v467, %v467
      %v500 = vpack.c.b16 %v468, %v468
      %v501 = vpack.c.b16 %v469, %v469
      %534 = vst [vmem:[%s256] sm:$0xf] %v470
      %535 = vst [vmem:[%s256 + $0x4] sm:$0xf] %v471
      %536 = vst [vmem:[%s256 + $0x8] sm:$0xf] %v472
      %537 = vst [vmem:[%s256 + $0xc] sm:$0xf] %v473
      %538 = vst [vmem:[%s256 + $0x10] sm:$0xf] %v474
      %539 = vst [vmem:[%s256 + $0x14] sm:$0xf] %v475
      %540 = vst [vmem:[%s256 + $0x18] sm:$0xf] %v476
      %541 = vst [vmem:[%s256 + $0x1c] sm:$0xf] %v477
      %542 = vst [vmem:[%s256 + $0x20] sm:$0xf] %v478
      %543 = vst [vmem:[%s256 + $0x24] sm:$0xf] %v479
      %544 = vst [vmem:[%s256 + $0x28] sm:$0xf] %v480
      %545 = vst [vmem:[%s256 + $0x2c] sm:$0xf] %v481
      %546 = vst [vmem:[%s256 + $0x30] sm:$0xf] %v482
      %547 = vst [vmem:[%s256 + $0x34] sm:$0xf] %v483
      %548 = vst [vmem:[%s256 + $0x38] sm:$0xf] %v484
      %549 = vst [vmem:[%s256 + $0x3c] sm:$0xf] %v485
      %550 = vst [vmem:[%s256 + $0x40] sm:$0xf] %v486
      %551 = vst [vmem:[%s256 + $0x44] sm:$0xf] %v487
      %552 = vst [vmem:[%s256 + $0x48] sm:$0xf] %v488
      %553 = vst [vmem:[%s256 + $0x4c] sm:$0xf] %v489
      %554 = vst [vmem:[%s256 + $0x50] sm:$0xf] %v490
      %555 = vst [vmem:[%s256 + $0x54] sm:$0xf] %v491
      %556 = vst [vmem:[%s256 + $0x58] sm:$0xf] %v492
      %557 = vst [vmem:[%s256 + $0x5c] sm:$0xf] %v493
      %558 = vst [vmem:[%s256 + $0x60] sm:$0xf] %v494
      %559 = vst [vmem:[%s256 + $0x64] sm:$0xf] %v495
      %560 = vst [vmem:[%s256 + $0x68] sm:$0xf] %v496
      %561 = vst [vmem:[%s256 + $0x6c] sm:$0xf] %v497
      %562 = vst [vmem:[%s256 + $0x70] sm:$0xf] %v498
      %563 = vst [vmem:[%s256 + $0x74] sm:$0xf] %v499
      %564 = vst [vmem:[%s256 + $0x78] sm:$0xf] %v500
      %565 = vst [vmem:[%s256 + $0x7c] sm:$0xf] %v501
      %v566 = vld [vmem:[%s250] sm:$0xff]
      %v567 = vld [vmem:[%s250 + $0x8] sm:$0xff]
      %v568 = vld [vmem:[%s250 + $0x10] sm:$0xff]
      %v569 = vld [vmem:[%s250 + $0x18] sm:$0xff]
      %v570 = vld [vmem:[%s250 + $0x20] sm:$0xff]
      %v571 = vld [vmem:[%s250 + $0x28] sm:$0xff]
      %v572 = vld [vmem:[%s250 + $0x30] sm:$0xff]
      %v573 = vld [vmem:[%s250 + $0x38] sm:$0xff]
      %v574 = vld [vmem:[%s250 + $0x40] sm:$0xff]
      %v575 = vld [vmem:[%s250 + $0x48] sm:$0xff]
      %v576 = vld [vmem:[%s250 + $0x50] sm:$0xff]
      %v577 = vld [vmem:[%s250 + $0x58] sm:$0xff]
      %v578 = vld [vmem:[%s250 + $0x60] sm:$0xff]
      %v579 = vld [vmem:[%s250 + $0x68] sm:$0xff]
      %v580 = vld [vmem:[%s250 + $0x70] sm:$0xff]
      %v581 = vld [vmem:[%s250 + $0x78] sm:$0xff]
      %v582 = vld [vmem:[%s250 + $0x80] sm:$0xff]
      %v583 = vld [vmem:[%s250 + $0x88] sm:$0xff]
      %v584 = vld [vmem:[%s250 + $0x90] sm:$0xff]
      %v585 = vld [vmem:[%s250 + $0x98] sm:$0xff]
      %v586 = vld [vmem:[%s250 + $0xa0] sm:$0xff]
      %v587 = vld [vmem:[%s250 + $0xa8] sm:$0xff]
      %v588 = vld [vmem:[%s250 + $0xb0] sm:$0xff]
      %v589 = vld [vmem:[%s250 + $0xb8] sm:$0xff]
      %v590 = vld [vmem:[%s250 + $0xc0] sm:$0xff]
      %v591 = vld [vmem:[%s250 + $0xc8] sm:$0xff]
      %v592 = vld [vmem:[%s250 + $0xd0] sm:$0xff]
      %v593 = vld [vmem:[%s250 + $0xd8] sm:$0xff]
      %v594 = vld [vmem:[%s250 + $0xe0] sm:$0xff]
      %v595 = vld [vmem:[%s250 + $0xe8] sm:$0xff]
      %v596 = vld [vmem:[%s250 + $0xf0] sm:$0xff]
      %v597 = vld [vmem:[%s250 + $0xf8] sm:$0xff]
      %v598 = vadd.f32 %v374, %v566
      %v599 = vadd.f32 %v375, %v567
      %v600 = vadd.f32 %v376, %v568
      %v601 = vadd.f32 %v377, %v569
      %v602 = vadd.f32 %v378, %v570
      %v603 = vadd.f32 %v379, %v571
      %v604 = vadd.f32 %v380, %v572
      %v605 = vadd.f32 %v381, %v573
      %v606 = vadd.f32 %v382, %v574
      %v607 = vadd.f32 %v383, %v575
      %v608 = vadd.f32 %v384, %v576
      %v609 = vadd.f32 %v385, %v577
      %v610 = vadd.f32 %v386, %v578
      %v611 = vadd.f32 %v387, %v579
      %v612 = vadd.f32 %v388, %v580
      %v613 = vadd.f32 %v389, %v581
      %v614 = vadd.f32 %v390, %v582
      %v615 = vadd.f32 %v391, %v583
      %v616 = vadd.f32 %v392, %v584
      %v617 = vadd.f32 %v393, %v585
      %v618 = vadd.f32 %v394, %v586
      %v619 = vadd.f32 %v395, %v587
      %v620 = vadd.f32 %v396, %v588
      %v621 = vadd.f32 %v397, %v589
      %v622 = vadd.f32 %v398, %v590
      %v623 = vadd.f32 %v399, %v591
      %v624 = vadd.f32 %v400, %v592
      %v625 = vadd.f32 %v401, %v593
      %v626 = vadd.f32 %v402, %v594
      %v627 = vadd.f32 %v403, %v595
      %v628 = vadd.f32 %v404, %v596
      %v629 = vadd.f32 %v405, %v597
      %v630 = vpack.c.bf16 %v599, %v598
      %v631 = vpack.c.bf16 %v601, %v600
      %v632 = vpack.c.bf16 %v603, %v602
      %v633 = vpack.c.bf16 %v605, %v604
      %v634 = vpack.c.bf16 %v607, %v606
      %v635 = vpack.c.bf16 %v609, %v608
      %v636 = vpack.c.bf16 %v611, %v610
      %v637 = vpack.c.bf16 %v613, %v612
      %v638 = vpack.c.bf16 %v615, %v614
      %v639 = vpack.c.bf16 %v617, %v616
      %v640 = vpack.c.bf16 %v619, %v618
      %v641 = vpack.c.bf16 %v621, %v620
      %v642 = vpack.c.bf16 %v623, %v622
      %v643 = vpack.c.bf16 %v625, %v624
      %v644 = vpack.c.bf16 %v627, %v626
      %v645 = vpack.c.bf16 %v629, %v628
      %v662 = vunpack.c.l.b16 %v630
      %v663 = vunpack.c.h.b16 %v630
      %v664 = vunpack.c.l.b16 %v631
      %v665 = vunpack.c.h.b16 %v631
      %v666 = vunpack.c.l.b16 %v632
      %v667 = vunpack.c.h.b16 %v632
      %v668 = vunpack.c.l.b16 %v633
      %v669 = vunpack.c.h.b16 %v633
      %v670 = vunpack.c.l.b16 %v634
      %v671 = vunpack.c.h.b16 %v634
      %v672 = vunpack.c.l.b16 %v635
      %v673 = vunpack.c.h.b16 %v635
      %v674 = vunpack.c.l.b16 %v636
      %v675 = vunpack.c.h.b16 %v636
      %v676 = vunpack.c.l.b16 %v637
      %v677 = vunpack.c.h.b16 %v637
      %v678 = vunpack.c.l.b16 %v638
      %v679 = vunpack.c.h.b16 %v638
      %v680 = vunpack.c.l.b16 %v639
      %v681 = vunpack.c.h.b16 %v639
      %v682 = vunpack.c.l.b16 %v640
      %v683 = vunpack.c.h.b16 %v640
      %v684 = vunpack.c.l.b16 %v641
      %v685 = vunpack.c.h.b16 %v641
      %v686 = vunpack.c.l.b16 %v642
      %v687 = vunpack.c.h.b16 %v642
      %v688 = vunpack.c.l.b16 %v643
      %v689 = vunpack.c.h.b16 %v643
      %v690 = vunpack.c.l.b16 %v644
      %v691 = vunpack.c.h.b16 %v644
      %v692 = vunpack.c.l.b16 %v645
      %v693 = vunpack.c.h.b16 %v645
      %v694 = vpack.c.b16 %v662, %v662
      %v695 = vpack.c.b16 %v663, %v663
      %v696 = vpack.c.b16 %v664, %v664
      %v697 = vpack.c.b16 %v665, %v665
      %v698 = vpack.c.b16 %v666, %v666
      %v699 = vpack.c.b16 %v667, %v667
      %v700 = vpack.c.b16 %v668, %v668
      %v701 = vpack.c.b16 %v669, %v669
      %v702 = vpack.c.b16 %v670, %v670
      %v703 = vpack.c.b16 %v671, %v671
      %v704 = vpack.c.b16 %v672, %v672
      %v705 = vpack.c.b16 %v673, %v673
      %v706 = vpack.c.b16 %v674, %v674
      %v707 = vpack.c.b16 %v675, %v675
      %v708 = vpack.c.b16 %v676, %v676
      %v709 = vpack.c.b16 %v677, %v677
      %v710 = vpack.c.b16 %v678, %v678
      %v711 = vpack.c.b16 %v679, %v679
      %v712 = vpack.c.b16 %v680, %v680
      %v713 = vpack.c.b16 %v681, %v681
      %v714 = vpack.c.b16 %v682, %v682
      %v715 = vpack.c.b16 %v683, %v683
      %v716 = vpack.c.b16 %v684, %v684
      %v717 = vpack.c.b16 %v685, %v685
      %v718 = vpack.c.b16 %v686, %v686
      %v719 = vpack.c.b16 %v687, %v687
      %v720 = vpack.c.b16 %v688, %v688
      %v721 = vpack.c.b16 %v689, %v689
      %v722 = vpack.c.b16 %v690, %v690
      %v723 = vpack.c.b16 %v691, %v691
      %v724 = vpack.c.b16 %v692, %v692
      %v725 = vpack.c.b16 %v693, %v693
      %758 = vst [vmem:[%s262] sm:$0xf] %v694
      %759 = vst [vmem:[%s262 + $0x4] sm:$0xf] %v695
      %760 = vst [vmem:[%s262 + $0x8] sm:$0xf] %v696
      %761 = vst [vmem:[%s262 + $0xc] sm:$0xf] %v697
      %762 = vst [vmem:[%s262 + $0x10] sm:$0xf] %v698
      %763 = vst [vmem:[%s262 + $0x14] sm:$0xf] %v699
      %764 = vst [vmem:[%s262 + $0x18] sm:$0xf] %v700
      %765 = vst [vmem:[%s262 + $0x1c] sm:$0xf] %v701
      %766 = vst [vmem:[%s262 + $0x20] sm:$0xf] %v702
      %767 = vst [vmem:[%s262 + $0x24] sm:$0xf] %v703
      %768 = vst [vmem:[%s262 + $0x28] sm:$0xf] %v704
      %769 = vst [vmem:[%s262 + $0x2c] sm:$0xf] %v705
      %770 = vst [vmem:[%s262 + $0x30] sm:$0xf] %v706
      %771 = vst [vmem:[%s262 + $0x34] sm:$0xf] %v707
      %772 = vst [vmem:[%s262 + $0x38] sm:$0xf] %v708
      %773 = vst [vmem:[%s262 + $0x3c] sm:$0xf] %v709
      %774 = vst [vmem:[%s262 + $0x40] sm:$0xf] %v710
      %775 = vst [vmem:[%s262 + $0x44] sm:$0xf] %v711
      %776 = vst [vmem:[%s262 + $0x48] sm:$0xf] %v712
      %777 = vst [vmem:[%s262 + $0x4c] sm:$0xf] %v713
      %778 = vst [vmem:[%s262 + $0x50] sm:$0xf] %v714
      %779 = vst [vmem:[%s262 + $0x54] sm:$0xf] %v715
      %780 = vst [vmem:[%s262 + $0x58] sm:$0xf] %v716
      %781 = vst [vmem:[%s262 + $0x5c] sm:$0xf] %v717
      %782 = vst [vmem:[%s262 + $0x60] sm:$0xf] %v718
      %783 = vst [vmem:[%s262 + $0x64] sm:$0xf] %v719
      %784 = vst [vmem:[%s262 + $0x68] sm:$0xf] %v720
      %785 = vst [vmem:[%s262 + $0x6c] sm:$0xf] %v721
      %786 = vst [vmem:[%s262 + $0x70] sm:$0xf] %v722
      %787 = vst [vmem:[%s262 + $0x74] sm:$0xf] %v723
      %788 = vst [vmem:[%s262 + $0x78] sm:$0xf] %v724
      %789 = vst [vmem:[%s262 + $0x7c] sm:$0xf] %v725
      %s790 = smul.u32 32, %s17
      %p791 = scmp.lt.s32.totalorder %s790, 63
      %s792 = scalar_select %p791, %s790, 63
      %s793 = smul.addr %s792, 4
      %s794 = scalar_lea.vmem %s4, %s793
      %s795 = smul.u32 32, %s17
      %p796 = scmp.lt.s32.totalorder %s795, 63
      %s797 = scalar_select %p796, %s795, 63
      %s798 = smul.addr %s797, 4
      %s799 = scalar_lea.vmem %s5, %s798
      // Predicated region
      $region37: #{bottleneck_forward.13} parent=35 // pred_check
        %p800 = pneg %p129
      $region38: #{bottleneck_forward.13} parent=35 // pred_check_branch
        %802 = sbr.rel (%p800) target = $region40
      $region39: #{bottleneck_forward.13} parent=35 // pred_region
        %s803 = smul.u32 32, %s17
      $region40: #{bottleneck_forward.13} parent=35 // pred_fallthru
        _
      // Predicated region
      $region41: #{bottleneck_forward.13} parent=35 // pred_check
        %p804 = pneg %p155
      $region42: #{bottleneck_forward.13} parent=35 // pred_check_branch
        %806 = sbr.rel (%p804) target = $region44
      $region43: #{bottleneck_forward.13} parent=35 // pred_region
        %s807 = smul.u32 32, %s17
      $region44: #{bottleneck_forward.13} parent=35 // pred_fallthru
        _
    $region36: #{bottleneck_forward.13} parent=5 // pred_fallthru
      _
    %p808 = scmp.le.s32.totalorder 2, %s12
    // Predicated region
    $region45: #{bottleneck_forward.13} parent=5 // pred_check
      %p809 = pneg %p808
    $region46: #{bottleneck_forward.13} parent=5 // pred_check_branch
      %811 = sbr.rel (%p809) target = $region48
    $region47: #{bottleneck_forward.13} parent=5 // pred_region
      %s812 = ssub.s32 %s12, 2
      // Predicated region
      $region49: #{bottleneck_forward.13} parent=47 // pred_check
        %p813 = pneg %p135
      $region50: #{bottleneck_forward.13} parent=47 // pred_check_branch
        %815 = sbr.rel (%p813) target = $region52
      $region51: #{bottleneck_forward.13} parent=47 // pred_region
        %s816 = smul.u32 32, %s18
        %p817 = scmp.lt.s32.totalorder %s816, 63
        %s818 = scalar_select %p817, %s816, 63
        %s819 = smul.addr %s818, 4
        %s820 = scalar_lea.vmem %s4, %s819
      $region52: #{bottleneck_forward.13} parent=47 // pred_fallthru
        _
      // Predicated region
      $region53: #{bottleneck_forward.13} parent=47 // pred_check
        %p821 = pneg %p161
      $region54: #{bottleneck_forward.13} parent=47 // pred_check_branch
        %823 = sbr.rel (%p821) target = $region56
      $region55: #{bottleneck_forward.13} parent=47 // pred_region
        %s824 = smul.u32 32, %s18
        %p825 = scmp.lt.s32.totalorder %s824, 63
        %s826 = scalar_select %p825, %s824, 63
        %s827 = smul.addr %s826, 4
        %s828 = scalar_lea.vmem %s5, %s827
      $region56: #{bottleneck_forward.13} parent=47 // pred_fallthru
        _
    $region48: #{bottleneck_forward.13} parent=5 // pred_fallthru
      _
  $region6: #{bottleneck_forward.13} parent=0 // loop_footer
    %s16 = sadd.s32 1, %s12
  $region7: #{bottleneck_forward.13} parent=0 // loop_footer_branch
    %11 = sbr.rel target = $region3
  $region8: #{bottleneck_forward.13} parent=0 // loop_exit
    _

// kernel: bottleneck_forward.19
$region0: #{bottleneck_forward.19}
  #allocation0 [shape = 'u32[]', space=smem, size = 0x4, offset = 0x4, fixed_abs, tag = 'smem constant byte address 0x4 - core index']
  #allocation1 [shape = 'u32[144,128]{1,0:T(1,128)}', space=vmem, size = 0x12000, scoped, tag = 'internal scratch']
  %s0 = inlined_call_operand.vmem [shape: f32[512,128], index: 0, kind: input, shape index: {}]
  %s1 = inlined_call_operand.vmem [shape: f32[1,128], index: 1, kind: input, shape index: {}]
  %s2 = inlined_call_operand.vmem [shape: f32[1,128], index: 2, kind: input, shape index: {}]
  %s3 = inlined_call_operand.vmem [shape: f32[512,128], index: 3, kind: input, shape index: {}]
  %s4 = inlined_call_operand.hbm [shape: f32[512,128], index: 4, kind: output, shape index: {}]
  %s5 = sld [smem:[#allocation0]]
  $region49: #{bottleneck_forward.19} parent=0
    _
  %s7 = ssub.s32 1, %s5
  %s8 = scalar_select 0, %s7, %s5
  $region1: #{bottleneck_forward.19} parent=0
    #allocation2 [shape = 'u8[262144]{0}', space=vmem, size = 0x40000, scoped, tag = 'output window, operand 0']
    #allocation3 [shape = 's32[2]{0}', space=sflag, size = 0x8, scoped, tag = 'scoped memory for bottleneck_forward.19']
    %9 = vsyncpa [#allocation3], 0
    %s10 = scalar_lea.sflag [#allocation3], 1
    %11 = vsyncpa %s10, 0
    loop: start=0, step=1, limit=4
    $region2: #{bottleneck_forward.19} parent=1 // loop_pre_header
      _
    $region3: #{bottleneck_forward.19} parent=1 // loop_header
      %s13 = sphi 0, %s17
      %p14 = scmp.ge.s32.totalorder %s13, 4
      %s23 = sphi 0, %s25
      %s26 = sphi 0, %s23
      %s27 = sphi 0, %s26
      %s43 = sphi 0, %s27
      %s47 = sphi 0, %s47
      %s49 = sphi 0, %s47
      %s50 = sphi 0, %s49
      %s64 = sphi 0, %s50
      %s68 = sphi 0, %s68
      %s70 = sphi 0, %s68
      %s71 = sphi 0, %s70
      %s85 = sphi 0, %s71
      %s91 = sphi 0, %s93
      %s94 = sphi 0, %s91
      %s95 = sphi 0, %s94
      %s111 = sphi 0, %s95
      %s117 = sphi 0, %s119
      %s120 = sphi 0, %s117
      %s121 = sphi 0, %s120
      %s137 = sphi 0, %s121
    $region4: #{bottleneck_forward.19} parent=1 // loop_header_branch
      %16 = sbr.rel (%p14) target = $region8
    $region5: #{bottleneck_forward.19} parent=1 // loop_body
      %s18 = ssub.s32 %s13, 1
      %s19 = ssub.s32 %s13, 2
      %s20 = sadd.s32 %s13, 1
      %s21 = ssub.s32 %s13, %s20
      %p22 = scmp.eq.s32.totalorder %s21, 0
      %s24 = sadd.s32 %s23, 1
      %s25 = scalar_select %p22, %s23, %s24
      %p28 = pneg %p22
      %p29 = scmp.eq.s32.totalorder %s13, 1
      %p30 = por %p28, %p29
      %p31 = scmp.ne.s32.totalorder %s23, %s26
      %p32 = scmp.eq.s32.totalorder %s13, 0
      %p33 = por %p31, %p32
      %p34 = scmp.ne.s32.totalorder %s23, %s26
      %p35 = scmp.eq.s32.totalorder %s18, 1
      %p36 = por %p34, %p35
      %p37 = scmp.ne.s32.totalorder %s26, %s27
      %p38 = scmp.eq.s32.totalorder %s18, 0
      %p39 = por %p37, %p38
      %p40 = scmp.ne.s32.totalorder %s26, %s27
      %p41 = scmp.eq.s32.totalorder %s19, 1
      %p42 = por %p40, %p41
      %p44 = scmp.ne.s32.totalorder %s27, %s43
      %p45 = scmp.eq.s32.totalorder %s19, 0
      %p46 = por %p44, %p45
      %s48 = sadd.s32 %s47, 1
      %p51 = scmp.eq.s32.totalorder %s13, 1
      %p52 = scmp.ne.s32.totalorder %s47, %s49
      %p53 = scmp.eq.s32.totalorder %s13, 0
      %p54 = por %p52, %p53
      %p55 = scmp.ne.s32.totalorder %s47, %s49
      %p56 = scmp.eq.s32.totalorder %s18, 1
      %p57 = por %p55, %p56
      %p58 = scmp.ne.s32.totalorder %s49, %s50
      %p59 = scmp.eq.s32.totalorder %s18, 0
      %p60 = por %p58, %p59
      %p61 = scmp.ne.s32.totalorder %s49, %s50
      %p62 = scmp.eq.s32.totalorder %s19, 1
      %p63 = por %p61, %p62
      %p65 = scmp.ne.s32.totalorder %s50, %s64
      %p66 = scmp.eq.s32.totalorder %s19, 0
      %p67 = por %p65, %p66
      %s69 = sadd.s32 %s68, 1
      %p72 = scmp.eq.s32.totalorder %s13, 1
      %p73 = scmp.ne.s32.totalorder %s68, %s70
      %p74 = scmp.eq.s32.totalorder %s13, 0
      %p75 = por %p73, %p74
      %p76 = scmp.ne.s32.totalorder %s68, %s70
      %p77 = scmp.eq.s32.totalorder %s18, 1
      %p78 = por %p76, %p77
      %p79 = scmp.ne.s32.totalorder %s70, %s71
      %p80 = scmp.eq.s32.totalorder %s18, 0
      %p81 = por %p79, %p80
      %p82 = scmp.ne.s32.totalorder %s70, %s71
      %p83 = scmp.eq.s32.totalorder %s19, 1
      %p84 = por %p82, %p83
      %p86 = scmp.ne.s32.totalorder %s71, %s85
      %p87 = scmp.eq.s32.totalorder %s19, 0
      %p88 = por %p86, %p87
      %s89 = ssub.s32 %s13, %s20
      %p90 = scmp.eq.s32.totalorder %s89, 0
      %s92 = sadd.s32 %s91, 1
      %s93 = scalar_select %p90, %s91, %s92
      %p96 = pneg %p90
      %p97 = scmp.eq.s32.totalorder %s13, 1
      %p98 = por %p96, %p97
      %p99 = scmp.ne.s32.totalorder %s91, %s94
      %p100 = scmp.eq.s32.totalorder %s13, 0
      %p101 = por %p99, %p100
      %p102 = scmp.ne.s32.totalorder %s91, %s94
      %p103 = scmp.eq.s32.totalorder %s18, 1
      %p104 = por %p102, %p103
      %p105 = scmp.ne.s32.totalorder %s94, %s95
      %p106 = scmp.eq.s32.totalorder %s18, 0
      %p107 = por %p105, %p106
      %p108 = scmp.ne.s32.totalorder %s94, %s95
      %p109 = scmp.eq.s32.totalorder %s19, 1
      %p110 = por %p108, %p109
      %p112 = scmp.ne.s32.totalorder %s95, %s111
      %p113 = scmp.eq.s32.totalorder %s19, 0
      %p114 = por %p112, %p113
      %s115 = ssub.s32 %s13, %s20
      %p116 = scmp.eq.s32.totalorder %s115, 0
      %s118 = sadd.s32 %s117, 1
      %s119 = scalar_select %p116, %s117, %s118
      %p122 = pneg %p116
      %p123 = scmp.eq.s32.totalorder %s13, 1
      %p124 = por %p122, %p123
      %p125 = scmp.ne.s32.totalorder %s117, %s120
      %p126 = scmp.eq.s32.totalorder %s13, 0
      %p127 = por %p125, %p126
      %p128 = scmp.ne.s32.totalorder %s117, %s120
      %p129 = scmp.eq.s32.totalorder %s18, 1
      %p130 = por %p128, %p129
      %p131 = scmp.ne.s32.totalorder %s120, %s121
      %p132 = scmp.eq.s32.totalorder %s18, 0
      %p133 = por %p131, %p132
      %p134 = scmp.ne.s32.totalorder %s120, %s121
      %p135 = scmp.eq.s32.totalorder %s19, 1
      %p136 = por %p134, %p135
      %p138 = scmp.ne.s32.totalorder %s121, %s137
      %p139 = scmp.eq.s32.totalorder %s19, 0
      %p140 = por %p138, %p139
      %p141 = scmp.le.s32.totalorder 1, %s13
      %p142 = scmp.lt.s32.totalorder %s13, 3
      %p143 = pnand %p141, %p142
      %p144 = pneg %p143
      // Predicated region
      $region9: #{bottleneck_forward.19} parent=5 // pred_check
        _
      $region10: #{bottleneck_forward.19} parent=5 // pred_check_branch
        %146 = sbr.rel (%p143) target = $region12
      $region11: #{bottleneck_forward.19} parent=5 // pred_region
        %s147 = ssub.s32 %s13, 1
        // Predicated region
        $region13: #{bottleneck_forward.19} parent=11 // pred_check
          %p148 = pneg %p60
        $region14: #{bottleneck_forward.19} parent=11 // pred_check_branch
          %150 = sbr.rel (%p148) target = $region16
        $region15: #{bottleneck_forward.19} parent=11 // pred_region
          _
        $region16: #{bottleneck_forward.19} parent=11 // pred_fallthru
          _
        // Predicated region
        $region17: #{bottleneck_forward.19} parent=11 // pred_check
          %p151 = pneg %p81
        $region18: #{bottleneck_forward.19} parent=11 // pred_check_branch
          %153 = sbr.rel (%p151) target = $region20
        $region19: #{bottleneck_forward.19} parent=11 // pred_region
          _
        $region20: #{bottleneck_forward.19} parent=11 // pred_fallthru
          _
      $region12: #{bottleneck_forward.19} parent=5 // pred_fallthru
        _
      %p154 = scmp.lt.s32.totalorder %s13, 2
      // Predicated region
      $region21: #{bottleneck_forward.19} parent=5 // pred_check
        %p155 = pneg %p154
      $region22: #{bottleneck_forward.19} parent=5 // pred_check_branch
        %157 = sbr.rel (%p155) target = $region24
      $region23: #{bottleneck_forward.19} parent=5 // pred_region
        // Predicated region
        $region25: #{bottleneck_forward.19} parent=23 // pred_check
          %p158 = pneg %p33
        $region26: #{bottleneck_forward.19} parent=23 // pred_check_branch
          %160 = sbr.rel (%p158) target = $region28
        $region27: #{bottleneck_forward.19} parent=23 // pred_region
          %s161 = smul.u32 32, %s13
          %p162 = scmp.lt.s32.totalorder %s161, 63
          %s163 = scalar_select %p162, %s161, 63
          %s164 = smul.addr %s163, 8
          %s165 = scalar_lea.vmem %s0, %s164
          %s166 = smul.u32 32, %s13
        $region28: #{bottleneck_forward.19} parent=23 // pred_fallthru
          _
        // Predicated region
        $region29: #{bottleneck_forward.19} parent=23 // pred_check
          %p167 = pneg %p101
        $region30: #{bottleneck_forward.19} parent=23 // pred_check_branch
          %169 = sbr.rel (%p167) target = $region32
        $region31: #{bottleneck_forward.19} parent=23 // pred_region
          %s170 = smul.u32 32, %s13
          %p171 = scmp.lt.s32.totalorder %s170, 63
          %s172 = scalar_select %p171, %s170, 63
          %s173 = smul.addr %s172, 8
          %s174 = scalar_lea.vmem %s3, %s173
          %s175 = smul.u32 32, %s13
        $region32: #{bottleneck_forward.19} parent=23 // pred_fallthru
          _
      $region24: #{bottleneck_forward.19} parent=5 // pred_fallthru
        _
      %p176 = scmp.le.s32.totalorder 1, %s13
      %p177 = scmp.lt.s32.totalorder %s13, 3
      %p178 = pnand %p176, %p177
      %p179 = pneg %p178
      // Predicated region
      $region33: #{bottleneck_forward.19} parent=5 // pred_check
        _
      $region34: #{bottleneck_forward.19} parent=5 // pred_check_branch
        %181 = sbr.rel (%p178) target = $region36
      $region35: #{bottleneck_forward.19} parent=5 // pred_region
        %s182 = ssub.s32 %s13, 1
        %s183 = smul.u32 32, %s18
        %p184 = scmp.lt.s32.totalorder %s183, 63
        %s185 = scalar_select %p184, %s183, 63
        %s186 = smul.addr %s185, 8
        %s187 = scalar_lea.vmem %s0, %s186
        %p188 = pneg %p39
        %p189 = pneg %p36
        %p190 = pneg %p60
        %p191 = pneg %p57
        %p192 = pneg %p81
        %p193 = pneg %p78
        %s194 = smul.u32 32, %s18
        %p195 = scmp.lt.s32.totalorder %s194, 63
        %s196 = scalar_select %p195, %s194, 63
        %s197 = smul.addr %s196, 8
        %s198 = scalar_lea.vmem %s3, %s197
        %p199 = pneg %p107
        %p200 = pneg %p104
        %p201 = pneg %p133
        %p202 = pneg %p130
        %s203 = sand.u32 %s120, 1
        %s204 = scalar_lea.sflag [#allocation3], %s203
        %s205 = sand.u32 %s120, 1
        %s206 = smul.addr %s205, 256
        %s207 = scalar_lea.vmem [#allocation2], %s206
        %s208 = smul.u32 32, %s18
        %p209 = scmp.lt.s32.totalorder %s208, 63
        %s210 = scalar_select %p209, %s208, 63
        %s211 = smul.addr %s210, 8
        %s212 = scalar_lea.vmem %s0, %s211
        %s213 = smul.u32 32, %s18
        %s214 = smul.u32 32, %s18
        %p215 = scmp.lt.s32.totalorder %s214, 63
        %s216 = scalar_select %p215, %s214, 63
        %s217 = smul.addr %s216, 8
        %s218 = scalar_lea.vmem %s3, %s217
        %s219 = smul.u32 32, %s18
        %s220 = smul.u32 32, %s18
        %v221 = vld [vmem:[%s212] sm:$0xff]
        %v222 = vld [vmem:[%s212 + $0x8] sm:$0xff]
        %v223 = vld [vmem:[%s212 + $0x10] sm:$0xff]
        %v224 = vld [vmem:[%s212 + $0x18] sm:$0xff]
        %v225 = vld [vmem:[%s212 + $0x20] sm:$0xff]
        %v226 = vld [vmem:[%s212 + $0x28] sm:$0xff]
        %v227 = vld [vmem:[%s212 + $0x30] sm:$0xff]
        %v228 = vld [vmem:[%s212 + $0x38] sm:$0xff]
        %v229 = vld [vmem:[%s212 + $0x40] sm:$0xff]
        %v230 = vld [vmem:[%s212 + $0x48] sm:$0xff]
        %v231 = vld [vmem:[%s212 + $0x50] sm:$0xff]
        %v232 = vld [vmem:[%s212 + $0x58] sm:$0xff]
        %v233 = vld [vmem:[%s212 + $0x60] sm:$0xff]
        %v234 = vld [vmem:[%s212 + $0x68] sm:$0xff]
        %v235 = vld [vmem:[%s212 + $0x70] sm:$0xff]
        %v236 = vld [vmem:[%s212 + $0x78] sm:$0xff]
        %v237 = vld [vmem:[%s212 + $0x80] sm:$0xff]
        %v238 = vld [vmem:[%s212 + $0x88] sm:$0xff]
        %v239 = vld [vmem:[%s212 + $0x90] sm:$0xff]
        %v240 = vld [vmem:[%s212 + $0x98] sm:$0xff]
        %v241 = vld [vmem:[%s212 + $0xa0] sm:$0xff]
        %v242 = vld [vmem:[%s212 + $0xa8] sm:$0xff]
        %v243 = vld [vmem:[%s212 + $0xb0] sm:$0xff]
        %v244 = vld [vmem:[%s212 + $0xb8] sm:$0xff]
        %v245 = vld [vmem:[%s212 + $0xc0] sm:$0xff]
        %v246 = vld [vmem:[%s212 + $0xc8] sm:$0xff]
        %v247 = vld [vmem:[%s212 + $0xd0] sm:$0xff]
        %v248 = vld [vmem:[%s212 + $0xd8] sm:$0xff]
        %v249 = vld [vmem:[%s212 + $0xe0] sm:$0xff]
        %v250 = vld [vmem:[%s212 + $0xe8] sm:$0xff]
        %v251 = vld [vmem:[%s212 + $0xf0] sm:$0xff]
        %v252 = vld [vmem:[%s212 + $0xf8] sm:$0xff]
        %v253 = vld [vmem:[%s1] sm:$0x1]
        %v255 = vlaneseq
        %v256 = vshrl.u32 %v255, 7
        %v257 = vsub.s32 0, %v256
        %v258 = vrot.slane %v253, %v257
        %v260 = vmul.f32 %v221, %v258
        %v261 = vmul.f32 %v222, %v258
        %v262 = vmul.f32 %v223, %v258
        %v263 = vmul.f32 %v224, %v258
        %v264 = vmul.f32 %v225, %v258
        %v265 = vmul.f32 %v226, %v258
        %v266 = vmul.f32 %v227, %v258
        %v267 = vmul.f32 %v228, %v258
        %v268 = vmul.f32 %v229, %v258
        %v269 = vmul.f32 %v230, %v258
        %v270 = vmul.f32 %v231, %v258
        %v271 = vmul.f32 %v232, %v258
        %v272 = vmul.f32 %v233, %v258
        %v273 = vmul.f32 %v234, %v258
        %v274 = vmul.f32 %v235, %v258
        %v275 = vmul.f32 %v236, %v258
        %v276 = vmul.f32 %v237, %v258
        %v277 = vmul.f32 %v238, %v258
        %v278 = vmul.f32 %v239, %v258
        %v279 = vmul.f32 %v240, %v258
        %v280 = vmul.f32 %v241, %v258
        %v281 = vmul.f32 %v242, %v258
        %v282 = vmul.f32 %v243, %v258
        %v283 = vmul.f32 %v244, %v258
        %v284 = vmul.f32 %v245, %v258
        %v285 = vmul.f32 %v246, %v258
        %v286 = vmul.f32 %v247, %v258
        %v287 = vmul.f32 %v248, %v258
        %v288 = vmul.f32 %v249, %v258
        %v289 = vmul.f32 %v250, %v258
        %v290 = vmul.f32 %v251, %v258
        %v291 = vmul.f32 %v252, %v258
        %v292 = vld [vmem:[%s2] sm:$0x1]
        %v294 = vlaneseq
        %v295 = vshrl.u32 %v294, 7
        %v296 = vsub.s32 0, %v295
        %v297 = vrot.slane %v292, %v296
        %v299 = vadd.f32 %v260, %v297
        %v300 = vadd.f32 %v261, %v297
        %v301 = vadd.f32 %v262, %v297
        %v302 = vadd.f32 %v263, %v297
        %v303 = vadd.f32 %v264, %v297
        %v304 = vadd.f32 %v265, %v297
        %v305 = vadd.f32 %v266, %v297
        %v306 = vadd.f32 %v267, %v297
        %v307 = vadd.f32 %v268, %v297
        %v308 = vadd.f32 %v269, %v297
        %v309 = vadd.f32 %v270, %v297
        %v310 = vadd.f32 %v271, %v297
        %v311 = vadd.f32 %v272, %v297
        %v312 = vadd.f32 %v273, %v297
        %v313 = vadd.f32 %v274, %v297
        %v314 = vadd.f32 %v275, %v297
        %v315 = vadd.f32 %v276, %v297
        %v316 = vadd.f32 %v277, %v297
        %v317 = vadd.f32 %v278, %v297
        %v318 = vadd.f32 %v279, %v297
        %v319 = vadd.f32 %v280, %v297
        %v320 = vadd.f32 %v281, %v297
        %v321 = vadd.f32 %v282, %v297
        %v322 = vadd.f32 %v283, %v297
        %v323 = vadd.f32 %v284, %v297
        %v324 = vadd.f32 %v285, %v297
        %v325 = vadd.f32 %v286, %v297
        %v326 = vadd.f32 %v287, %v297
        %v327 = vadd.f32 %v288, %v297
        %v328 = vadd.f32 %v289, %v297
        %v329 = vadd.f32 %v290, %v297
        %v330 = vadd.f32 %v291, %v297
        %v331 = vld [vmem:[%s218] sm:$0xff]
        %v332 = vld [vmem:[%s218 + $0x8] sm:$0xff]
        %v333 = vld [vmem:[%s218 + $0x10] sm:$0xff]
        %v334 = vld [vmem:[%s218 + $0x18] sm:$0xff]
        %v335 = vld [vmem:[%s218 + $0x20] sm:$0xff]
        %v336 = vld [vmem:[%s218 + $0x28] sm:$0xff]
        %v337 = vld [vmem:[%s218 + $0x30] sm:$0xff]
        %v338 = vld [vmem:[%s218 + $0x38] sm:$0xff]
        %v339 = vld [vmem:[%s218 + $0x40] sm:$0xff]
        %v340 = vld [vmem:[%s218 + $0x48] sm:$0xff]
        %v341 = vld [vmem:[%s218 + $0x50] sm:$0xff]
        %v342 = vld [vmem:[%s218 + $0x58] sm:$0xff]
        %v343 = vld [vmem:[%s218 + $0x60] sm:$0xff]
        %v344 = vld [vmem:[%s218 + $0x68] sm:$0xff]
        %v345 = vld [vmem:[%s218 + $0x70] sm:$0xff]
        %v346 = vld [vmem:[%s218 + $0x78] sm:$0xff]
        %v347 = vld [vmem:[%s218 + $0x80] sm:$0xff]
        %v348 = vld [vmem:[%s218 + $0x88] sm:$0xff]
        %v349 = vld [vmem:[%s218 + $0x90] sm:$0xff]
        %v350 = vld [vmem:[%s218 + $0x98] sm:$0xff]
        %v351 = vld [vmem:[%s218 + $0xa0] sm:$0xff]
        %v352 = vld [vmem:[%s218 + $0xa8] sm:$0xff]
        %v353 = vld [vmem:[%s218 + $0xb0] sm:$0xff]
        %v354 = vld [vmem:[%s218 + $0xb8] sm:$0xff]
        %v355 = vld [vmem:[%s218 + $0xc0] sm:$0xff]
        %v356 = vld [vmem:[%s218 + $0xc8] sm:$0xff]
        %v357 = vld [vmem:[%s218 + $0xd0] sm:$0xff]
        %v358 = vld [vmem:[%s218 + $0xd8] sm:$0xff]
        %v359 = vld [vmem:[%s218 + $0xe0] sm:$0xff]
        %v360 = vld [vmem:[%s218 + $0xe8] sm:$0xff]
        %v361 = vld [vmem:[%s218 + $0xf0] sm:$0xff]
        %v362 = vld [vmem:[%s218 + $0xf8] sm:$0xff]
        %v363 = vadd.f32 %v299, %v331
        %v364 = vadd.f32 %v300, %v332
        %v365 = vadd.f32 %v301, %v333
        %v366 = vadd.f32 %v302, %v334
        %v367 = vadd.f32 %v303, %v335
        %v368 = vadd.f32 %v304, %v336
        %v369 = vadd.f32 %v305, %v337
        %v370 = vadd.f32 %v306, %v338
        %v371 = vadd.f32 %v307, %v339
        %v372 = vadd.f32 %v308, %v340
        %v373 = vadd.f32 %v309, %v341
        %v374 = vadd.f32 %v310, %v342
        %v375 = vadd.f32 %v311, %v343
        %v376 = vadd.f32 %v312, %v344
        %v377 = vadd.f32 %v313, %v345
        %v378 = vadd.f32 %v314, %v346
        %v379 = vadd.f32 %v315, %v347
        %v380 = vadd.f32 %v316, %v348
        %v381 = vadd.f32 %v317, %v349
        %v382 = vadd.f32 %v318, %v350
        %v383 = vadd.f32 %v319, %v351
        %v384 = vadd.f32 %v320, %v352
        %v385 = vadd.f32 %v321, %v353
        %v386 = vadd.f32 %v322, %v354
        %v387 = vadd.f32 %v323, %v355
        %v388 = vadd.f32 %v324, %v356
        %v389 = vadd.f32 %v325, %v357
        %v390 = vadd.f32 %v326, %v358
        %v391 = vadd.f32 %v327, %v359
        %v392 = vadd.f32 %v328, %v360
        %v393 = vadd.f32 %v329, %v361
        %v394 = vadd.f32 %v330, %v362
        %v395 = vmax.f32 %v363, 0.0
        %v396 = vmax.f32 %v364, 0.0
        %v397 = vmax.f32 %v365, 0.0
        %v398 = vmax.f32 %v366, 0.0
        %v399 = vmax.f32 %v367, 0.0
        %v400 = vmax.f32 %v368, 0.0
        %v401 = vmax.f32 %v369, 0.0
        %v402 = vmax.f32 %v370, 0.0
        %v403 = vmax.f32 %v371, 0.0
        %v404 = vmax.f32 %v372, 0.0
        %v405 = vmax.f32 %v373, 0.0
        %v406 = vmax.f32 %v374, 0.0
        %v407 = vmax.f32 %v375, 0.0
        %v408 = vmax.f32 %v376, 0.0
        %v409 = vmax.f32 %v377, 0.0
        %v410 = vmax.f32 %v378, 0.0
        %v411 = vmax.f32 %v379, 0.0
        %v412 = vmax.f32 %v380, 0.0
        %v413 = vmax.f32 %v381, 0.0
        %v414 = vmax.f32 %v382, 0.0
        %v415 = vmax.f32 %v383, 0.0
        %v416 = vmax.f32 %v384, 0.0
        %v417 = vmax.f32 %v385, 0.0
        %v418 = vmax.f32 %v386, 0.0
        %v419 = vmax.f32 %v387, 0.0
        %v420 = vmax.f32 %v388, 0.0
        %v421 = vmax.f32 %v389, 0.0
        %v422 = vmax.f32 %v390, 0.0
        %v423 = vmax.f32 %v391, 0.0
        %v424 = vmax.f32 %v392, 0.0
        %v425 = vmax.f32 %v393, 0.0
        %v426 = vmax.f32 %v394, 0.0
        %427 = vst [vmem:[%s207] sm:$0xff] %v395
        %428 = vst [vmem:[%s207 + $0x8] sm:$0xff] %v396
        %429 = vst [vmem:[%s207 + $0x10] sm:$0xff] %v397
        %430 = vst [vmem:[%s207 + $0x18] sm:$0xff] %v398
        %431 = vst [vmem:[%s207 + $0x20] sm:$0xff] %v399
        %432 = vst [vmem:[%s207 + $0x28] sm:$0xff] %v400
        %433 = vst [vmem:[%s207 + $0x30] sm:$0xff] %v401
        %434 = vst [vmem:[%s207 + $0x38] sm:$0xff] %v402
        %435 = vst [vmem:[%s207 + $0x40] sm:$0xff] %v403
        %436 = vst [vmem:[%s207 + $0x48] sm:$0xff] %v404
        %437 = vst [vmem:[%s207 + $0x50] sm:$0xff] %v405
        %438 = vst [vmem:[%s207 + $0x58] sm:$0xff] %v406
        %439 = vst [vmem:[%s207 + $0x60] sm:$0xff] %v407
        %440 = vst [vmem:[%s207 + $0x68] sm:$0xff] %v408
        %441 = vst [vmem:[%s207 + $0x70] sm:$0xff] %v409
        %442 = vst [vmem:[%s207 + $0x78] sm:$0xff] %v410
        %443 = vst [vmem:[%s207 + $0x80] sm:$0xff] %v411
        %444 = vst [vmem:[%s207 + $0x88] sm:$0xff] %v412
        %445 = vst [vmem:[%s207 + $0x90] sm:$0xff] %v413
        %446 = vst [vmem:[%s207 + $0x98] sm:$0xff] %v414
        %447 = vst [vmem:[%s207 + $0xa0] sm:$0xff] %v415
        %448 = vst [vmem:[%s207 + $0xa8] sm:$0xff] %v416
        %449 = vst [vmem:[%s207 + $0xb0] sm:$0xff] %v417
        %450 = vst [vmem:[%s207 + $0xb8] sm:$0xff] %v418
        %451 = vst [vmem:[%s207 + $0xc0] sm:$0xff] %v419
        %452 = vst [vmem:[%s207 + $0xc8] sm:$0xff] %v420
        %453 = vst [vmem:[%s207 + $0xd0] sm:$0xff] %v421
        %454 = vst [vmem:[%s207 + $0xd8] sm:$0xff] %v422
        %455 = vst [vmem:[%s207 + $0xe0] sm:$0xff] %v423
        %456 = vst [vmem:[%s207 + $0xe8] sm:$0xff] %v424
        %457 = vst [vmem:[%s207 + $0xf0] sm:$0xff] %v425
        %458 = vst [vmem:[%s207 + $0xf8] sm:$0xff] %v426
        %s459 = sand.u32 %s120, 1
        %s460 = scalar_lea.sflag [#allocation3], %s459
        %s461 = sand.u32 %s120, 1
        %s462 = smul.addr %s461, 256
        %s463 = scalar_lea.vmem [#allocation2], %s462
        // Predicated region
        $region37: #{bottleneck_forward.19} parent=35 // pred_check
          %p464 = pneg %p130
        $region38: #{bottleneck_forward.19} parent=35 // pred_check_branch
          %466 = sbr.rel (%p464) target = $region40
        $region39: #{bottleneck_forward.19} parent=35 // pred_region
          %s467 = smul.u32 32, %s18
          %s469 = ssub.s32 4096, 4096
          %470 = vsyncadd %s460, %s469
          %s471 = smul.addr %s467, 128
          %s472 = scalar_lea.hbm %s4, %s471
          %s473 = sshll.u32 %s463, 4
          %s474 = int_to_ptr.vmem [resolvable:$true] %s473
          %479 = dma.vmem_to_hbm [thread:$0]  %s474, 4096, %s472, %s460, 128, 128, 8
        $region40: #{bottleneck_forward.19} parent=35 // pred_fallthru
          _
      $region36: #{bottleneck_forward.19} parent=5 // pred_fallthru
        _
      %p480 = scmp.le.s32.totalorder 2, %s13
      // Predicated region
      $region41: #{bottleneck_forward.19} parent=5 // pred_check
        %p481 = pneg %p480
      $region42: #{bottleneck_forward.19} parent=5 // pred_check_branch
        %483 = sbr.rel (%p481) target = $region44
      $region43: #{bottleneck_forward.19} parent=5 // pred_region
        %s484 = ssub.s32 %s13, 2
        // Predicated region
        $region45: #{bottleneck_forward.19} parent=43 // pred_check
          %p485 = pneg %p136
        $region46: #{bottleneck_forward.19} parent=43 // pred_check_branch
          %487 = sbr.rel (%p485) target = $region48
        $region47: #{bottleneck_forward.19} parent=43 // pred_region
          %s488 = sand.u32 %s121, 1
          %s489 = scalar_lea.sflag [#allocation3], %s488
          %s490 = sand.u32 %s121, 1
          %s491 = smul.addr %s490, 256
          %s492 = scalar_lea.vmem [#allocation2], %s491
          %493 = dma.done %s489, 4096
        $region48: #{bottleneck_forward.19} parent=43 // pred_fallthru
          _
      $region44: #{bottleneck_forward.19} parent=5 // pred_fallthru
        _
    $region6: #{bottleneck_forward.19} parent=1 // loop_footer
      %s17 = sadd.s32 1, %s13
    $region7: #{bottleneck_forward.19} parent=1 // loop_footer_branch
      %12 = sbr.rel target = $region3
    $region8: #{bottleneck_forward.19} parent=1 // loop_exit
      _
    %494 = vsyncpa [#allocation3], 1
    %s495 = scalar_lea.sflag [#allocation3], 1
    %496 = vsyncpa %s495, 1

</llo_original>
